<compile_context>
chip_gen: v5e
topology: v5e:2x2
jax: 0.10.0
libtpu: 0.0.40
codegen_flags: <defaults>
</compile_context>

<pallas_src>
import functools
import math

import jax
import jax.numpy as jnp
from jax.experimental import pallas as pl
from jax.experimental.pallas import tpu as pltpu


# ------------------------------ fused Pallas kernel ------------------------------


def fused_transformer_kernel(
        x_ref, w_in_ref, pe_bias_ref,
        wq_ref, wk_ref, wv_ref, bq_ref, bk_ref, bv_ref,
        wo_ref, bo_ref, ln1g_ref, ln1b_ref,
        w1_ref, b1_ref, w2_ref, b2_ref, ln2g_ref, ln2b_ref,
        wfc_ref, bfc_ref, o_ref,
        *, n_head, n_layers, batch, seq):
    """Whole TimeSeriesTransformer forward for the full batch in one grid point.

    x_ref:       (B*S, nIn)         flat input
    w_in_ref:    (nIn, D)
    pe_bias_ref: (B*S, D)           positional encoding (tiled over batch) + input bias
    per-layer stacked params:  wq/wk/wv/wo (L,D,D), w1 (L,D,F), w2 (L,F,D),
                               biases / LN params (L,1,D) or (L,1,F)
    wfc_ref:     (D, nOut), bfc_ref: (1, nOut)
    o_ref:       (B, nOut)          softmax probabilities
    """
    eps = 1e-5
    B, S = batch, seq
    D = w_in_ref.shape[1]
    hd = D // n_head

    # ---- input projection + positional encoding (input bias folded into pe_bias) ----
    h = jnp.dot(x_ref[...], w_in_ref[...],
                preferred_element_type=jnp.float32) + pe_bias_ref[...]        # (B*S, D)

    # ---- transformer encoder layers (post-norm, relu, eval mode) ----
    for l in range(n_layers):
        wq = wq_ref[l]
        wk = wk_ref[l]
        wv = wv_ref[l]
        wo = wo_ref[l]

        # q is already scaled by 1/sqrt(hd): folded into wq/bq by the wrapper.
        q = jnp.dot(h, wq, preferred_element_type=jnp.float32) + bq_ref[l]    # (B*S, D)
        k = jnp.dot(h, wk, preferred_element_type=jnp.float32) + bk_ref[l]
        v = jnp.dot(h, wv, preferred_element_type=jnp.float32) + bv_ref[l]

        batch_rows = []
        for b in range(B):                         # static loop over batch elements
            qb = q[b * S:(b + 1) * S]              # (S, D)  sublane slice
            kb = k[b * S:(b + 1) * S]
            vb = v[b * S:(b + 1) * S]
            acc = jnp.zeros((S, D), jnp.float32)
            for hh in range(n_head):               # static loop over heads
                lo, hi = hh * hd, (hh + 1) * hd
                s = jnp.dot(qb[:, lo:hi], kb[:, lo:hi].T,
                            preferred_element_type=jnp.float32)               # (S, S)
                m = jnp.max(s, axis=-1, keepdims=True)
                p = jnp.exp(s - m)
                # attention softmax: approx reciprocal (EUP slot, ~free; error << tol)
                p = p * pl.reciprocal(jnp.sum(p, axis=-1, keepdims=True), approx=True)
                oh = jnp.dot(p, vb[:, lo:hi], preferred_element_type=jnp.float32)  # (S, hd)
                # accumulate head output via row (sublane) slices of wo -> no lane concat
                acc = acc + jnp.dot(oh, wo[lo:hi, :], preferred_element_type=jnp.float32)
            batch_rows.append(acc)
        attn = jnp.concatenate(batch_rows, axis=0) + bo_ref[l]                # (B*S, D)

        # residual + layernorm 1
        x1 = h + attn
        mu = jnp.mean(x1, axis=-1, keepdims=True)
        var = jnp.mean((x1 - mu) ** 2, axis=-1, keepdims=True)
        x1 = (x1 - mu) * jax.lax.rsqrt(var + eps) * ln1g_ref[l] + ln1b_ref[l]

        # feed-forward: linear -> relu -> linear
        f = jnp.dot(x1, w1_ref[l], preferred_element_type=jnp.float32) + b1_ref[l]
        f = jnp.maximum(f, 0.0)
        f = jnp.dot(f, w2_ref[l], preferred_element_type=jnp.float32) + b2_ref[l]

        # residual + layernorm 2
        y = x1 + f
        mu2 = jnp.mean(y, axis=-1, keepdims=True)
        var2 = jnp.mean((y - mu2) ** 2, axis=-1, keepdims=True)
        h = (y - mu2) * jax.lax.rsqrt(var2 + eps) * ln2g_ref[l] + ln2b_ref[l]

    # ---- last time step of each batch element -> fc -> softmax(dim=1) ----
    last = jnp.concatenate([h[(b + 1) * S - 1:(b + 1) * S, :] for b in range(B)],
                           axis=0)                                            # (B, D)
    logits = jnp.dot(last, wfc_ref[...], preferred_element_type=jnp.float32) + bfc_ref[...]
    m = jnp.max(logits, axis=-1, keepdims=True)
    p = jnp.exp(logits - m)
    # final softmax: EXACT normalization so the output rows sum to 1 (tiny (B, nOut) op).
    o_ref[...] = p / jnp.sum(p, axis=-1, keepdims=True)


# ------------------------------ params / wrappers ------------------------------


def generate_pos_encoding(d_model, max_length=500):
    position = jnp.arange(max_length, dtype=jnp.float32)[:, None]
    div_term = jnp.exp(jnp.arange(0, d_model, 2, dtype=jnp.float32) *
                       (-(math.log(10000.0) / d_model)))
    pe = jnp.zeros((max_length, d_model), jnp.float32)
    pe = pe.at[:, 0::2].set(jnp.sin(position * div_term))
    pe = pe.at[:, 1::2].set(jnp.cos(position * div_term))
    return pe  # (max_length, d_model)


def init_params(key, n_inputs, d_model, n_head, n_layers, dim_ff, n_output):
    def nrm(k, shape, scale=0.05):
        return (scale * jax.random.normal(k, shape)).astype(jnp.float32)

    keys = jax.random.split(key, 4 + n_layers)
    params = {
        "w_in": nrm(keys[0], (n_inputs, d_model)),
        "b_in": nrm(keys[1], (1, d_model)),
        "w_fc": nrm(keys[2], (d_model, n_output)),
        "b_fc": nrm(keys[3], (1, n_output)),
        "layers": [],
    }
    for l in range(n_layers):
        lk = jax.random.split(keys[4 + l], 8)
        params["layers"].append(dict(
            wqkv=nrm(lk[0], (d_model, 3 * d_model)),
            bqkv=nrm(lk[1], (1, 3 * d_model)),
            wo=nrm(lk[2], (d_model, d_model)),
            bo=nrm(lk[3], (1, d_model)),
            ln1g=jnp.ones((1, d_model), jnp.float32),
            ln1b=jnp.zeros((1, d_model), jnp.float32),
            w1=nrm(lk[4], (d_model, dim_ff)),
            b1=nrm(lk[5], (1, dim_ff)),
            w2=nrm(lk[6], (dim_ff, d_model)),
            b2=nrm(lk[7], (1, d_model)),
            ln2g=jnp.ones((1, d_model), jnp.float32),
            ln2b=jnp.zeros((1, d_model), jnp.float32),
        ))
    return params


def prepare_fused_inputs(params, pos_enc, batch, seq, n_head):
    """Re-lay the PyTorch-style params for the fused kernel:
       split wqkv, fold 1/sqrt(hd) into wq/bq, fold input bias into the (tiled) pos enc,
       and stack per-layer params along a leading layer axis."""
    D = params["w_in"].shape[1]
    hd = D // n_head
    scale = 1.0 / math.sqrt(hd)

    pe_bias = jnp.tile(pos_enc[:seq] + params["b_in"], (batch, 1))   # (B*S, D)

    def stk(fn):
        return jnp.stack([fn(lp) for lp in params["layers"]])

    return dict(
        pe_bias=pe_bias,
        wq=stk(lambda lp: lp["wqkv"][:, :D] * scale),
        wk=stk(lambda lp: lp["wqkv"][:, D:2 * D]),
        wv=stk(lambda lp: lp["wqkv"][:, 2 * D:]),
        bq=stk(lambda lp: lp["bqkv"][:, :D] * scale),
        bk=stk(lambda lp: lp["bqkv"][:, D:2 * D]),
        bv=stk(lambda lp: lp["bqkv"][:, 2 * D:]),
        wo=stk(lambda lp: lp["wo"]),
        bo=stk(lambda lp: lp["bo"]),
        ln1g=stk(lambda lp: lp["ln1g"]),
        ln1b=stk(lambda lp: lp["ln1b"]),
        w1=stk(lambda lp: lp["w1"]),
        b1=stk(lambda lp: lp["b1"]),
        w2=stk(lambda lp: lp["w2"]),
        b2=stk(lambda lp: lp["b2"]),
        ln2g=stk(lambda lp: lp["ln2g"]),
        ln2b=stk(lambda lp: lp["ln2b"]),
    )


def forward(params, x, pos_enc, n_head):
    B, S, n_in = x.shape
    n_layers = len(params["layers"])
    n_out = params["w_fc"].shape[1]

    fi = prepare_fused_inputs(params, pos_enc, B, S, n_head)
    x_flat = x.reshape(B * S, n_in)

    kernel = functools.partial(fused_transformer_kernel,
                               n_head=n_head, n_layers=n_layers, batch=B, seq=S)
    # Single fused pallas_call, no grid: everything resident in VMEM, one launch,
    # no HBM round-trips of intermediate activations.
    out = pl.pallas_call(
        kernel,
        out_shape=jax.ShapeDtypeStruct((B, n_out), jnp.float32),
        compiler_params=pltpu.CompilerParams(vmem_limit_bytes=64 * 1024 * 1024),
    )(x_flat, params["w_in"], fi["pe_bias"],
      fi["wq"], fi["wk"], fi["wv"], fi["bq"], fi["bk"], fi["bv"],
      fi["wo"], fi["bo"], fi["ln1g"], fi["ln1b"],
      fi["w1"], fi["b1"], fi["w2"], fi["b2"], fi["ln2g"], fi["ln2b"],
      params["w_fc"], params["b_fc"])
    return out


def reference_forward(params, x, pos_enc, n_head):
    # pure-JAX reference for correctness checking (matches PyTorch eval semantics)
    B, S, _ = x.shape
    h = x @ params["w_in"] + params["b_in"] + pos_enc[:S][None]
    for lp in params["layers"]:
        D = h.shape[-1]
        hd = D // n_head
        qkv = h @ lp["wqkv"] + lp["bqkv"]
        q, k, v = qkv[..., :D], qkv[..., D:2 * D], qkv[..., 2 * D:]
        q = q.reshape(B, S, n_head, hd).transpose(0, 2, 1, 3) / math.sqrt(hd)
        k = k.reshape(B, S, n_head, hd).transpose(0, 2, 1, 3)
        v = v.reshape(B, S, n_head, hd).transpose(0, 2, 1, 3)
        s = jnp.einsum("bhqd,bhkd->bhqk", q, k)
        p = jax.nn.softmax(s, axis=-1)
        a = jnp.einsum("bhqk,bhkd->bhqd", p, v).transpose(0, 2, 1, 3).reshape(B, S, D)
        a = a @ lp["wo"] + lp["bo"]
        h = h + a
        mu = h.mean(-1, keepdims=True)
        var = ((h - mu) ** 2).mean(-1, keepdims=True)
        h = (h - mu) / jnp.sqrt(var + 1e-5) * lp["ln1g"] + lp["ln1b"]
        f = jnp.maximum(h @ lp["w1"] + lp["b1"], 0.0) @ lp["w2"] + lp["b2"]
        y = h + f
        mu = y.mean(-1, keepdims=True)
        var = ((y - mu) ** 2).mean(-1, keepdims=True)
        h = (y - mu) / jnp.sqrt(var + 1e-5) * lp["ln2g"] + lp["ln2b"]
    logits = h[:, -1, :] @ params["w_fc"] + params["b_fc"]
    return jax.nn.softmax(logits, axis=1)


# ----------------------------------- main -----------------------------------

if __name__ == "__main__":
    # small, module-consistent shapes
    batch, seq = 2, 8
    n_inputs, d_model, n_head, n_layers, dim_ff, n_output = 4, 32, 4, 2, 64, 8

    key = jax.random.PRNGKey(0)
    kp, kx = jax.random.split(key)
    params = init_params(kp, n_inputs, d_model, n_head, n_layers, dim_ff, n_output)
    pos_enc = generate_pos_encoding(d_model, max_length=500)
    x = jax.random.normal(kx, (batch, seq, n_inputs), jnp.float32)

    out = forward(params, x, pos_enc, n_head)
    out = jax.block_until_ready(out)

    ref = reference_forward(params, x, pos_enc, n_head)
    assert out.shape == (batch, n_output)
    # tolerances account for approx (EUP) reciprocals in the attention softmax denominators
    assert jnp.allclose(out, ref, rtol=2e-3, atol=2e-3), "mismatch vs pure-JAX reference"
    # final softmax is exactly normalized inside the kernel -> rows sum to 1
    assert jnp.allclose(jnp.sum(out, axis=1), 1.0, atol=1e-3)

    print("KERNEL_OK")
</pallas_src>

<mosaic_0001>
module attributes {stable_mosaic.version = 11 : i64} {
  func.func @fused_transformer_kernel(%arg0: memref<16x4xf32, #tpu.memory_space<vmem>>, %arg1: memref<4x32xf32, #tpu.memory_space<vmem>>, %arg2: memref<16x32xf32, #tpu.memory_space<vmem>>, %arg3: memref<2x32x32xf32, #tpu.memory_space<vmem>>, %arg4: memref<2x32x32xf32, #tpu.memory_space<vmem>>, %arg5: memref<2x32x32xf32, #tpu.memory_space<vmem>>, %arg6: memref<2x1x32xf32, #tpu.memory_space<vmem>>, %arg7: memref<2x1x32xf32, #tpu.memory_space<vmem>>, %arg8: memref<2x1x32xf32, #tpu.memory_space<vmem>>, %arg9: memref<2x32x32xf32, #tpu.memory_space<vmem>>, %arg10: memref<2x1x32xf32, #tpu.memory_space<vmem>>, %arg11: memref<2x1x32xf32, #tpu.memory_space<vmem>>, %arg12: memref<2x1x32xf32, #tpu.memory_space<vmem>>, %arg13: memref<2x32x64xf32, #tpu.memory_space<vmem>>, %arg14: memref<2x1x64xf32, #tpu.memory_space<vmem>>, %arg15: memref<2x64x32xf32, #tpu.memory_space<vmem>>, %arg16: memref<2x1x32xf32, #tpu.memory_space<vmem>>, %arg17: memref<2x1x32xf32, #tpu.memory_space<vmem>>, %arg18: memref<2x1x32xf32, #tpu.memory_space<vmem>>, %arg19: memref<32x8xf32, #tpu.memory_space<vmem>>, %arg20: memref<1x8xf32, #tpu.memory_space<vmem>>, %arg21: memref<2x8xf32, #tpu.memory_space<vmem>>) attributes {dimension_semantics = [], scalar_prefetch = 0 : i64, scratch_operands = 0 : i64, tpu.core_type = #tpu.core_type<tc>} {
    %c0 = arith.constant 0 : index
    %c0_0 = arith.constant 0 : index
    %0 = vector.load %arg0[%c0, %c0_0] : memref<16x4xf32, #tpu.memory_space<vmem>>, vector<16x4xf32>
    %c0_1 = arith.constant 0 : index
    %c0_2 = arith.constant 0 : index
    %1 = vector.load %arg1[%c0_1, %c0_2] : memref<4x32xf32, #tpu.memory_space<vmem>>, vector<4x32xf32>
    %cst = arith.constant dense<0.000000e+00> : vector<16x32xf32>
    %2 = tpu.matmul %0, %1, %cst {dimension_numbers = #tpu.dot_dimension_numbers<[1], [0], [0], [1], [0, 0, 1, 1], [], []>} : vector<16x4xf32>, vector<4x32xf32>, vector<16x32xf32> -> vector<16x32xf32>
    %c0_3 = arith.constant 0 : index
    %c0_4 = arith.constant 0 : index
    %3 = vector.load %arg2[%c0_3, %c0_4] : memref<16x32xf32, #tpu.memory_space<vmem>>, vector<16x32xf32>
    %4 = arith.addf %2, %3 : vector<16x32xf32>
    %c0_5 = arith.constant 0 : index
    %c0_6 = arith.constant 0 : index
    %c0_7 = arith.constant 0 : index
    %5 = vector.load %arg3[%c0_5, %c0_6, %c0_7] : memref<2x32x32xf32, #tpu.memory_space<vmem>>, vector<1x32x32xf32>
    %6 = vector.shape_cast %5 : vector<1x32x32xf32> to vector<32x32xf32>
    %c0_8 = arith.constant 0 : index
    %c0_9 = arith.constant 0 : index
    %c0_10 = arith.constant 0 : index
    %7 = vector.load %arg4[%c0_8, %c0_9, %c0_10] : memref<2x32x32xf32, #tpu.memory_space<vmem>>, vector<1x32x32xf32>
    %8 = vector.shape_cast %7 : vector<1x32x32xf32> to vector<32x32xf32>
    %c0_11 = arith.constant 0 : index
    %c0_12 = arith.constant 0 : index
    %c0_13 = arith.constant 0 : index
    %9 = vector.load %arg5[%c0_11, %c0_12, %c0_13] : memref<2x32x32xf32, #tpu.memory_space<vmem>>, vector<1x32x32xf32>
    %10 = vector.shape_cast %9 : vector<1x32x32xf32> to vector<32x32xf32>
    %c0_14 = arith.constant 0 : index
    %c0_15 = arith.constant 0 : index
    %c0_16 = arith.constant 0 : index
    %11 = vector.load %arg9[%c0_14, %c0_15, %c0_16] : memref<2x32x32xf32, #tpu.memory_space<vmem>>, vector<1x32x32xf32>
    %12 = vector.shape_cast %11 : vector<1x32x32xf32> to vector<32x32xf32>
    %cst_17 = arith.constant dense<0.000000e+00> : vector<16x32xf32>
    %13 = tpu.matmul %4, %6, %cst_17 {dimension_numbers = #tpu.dot_dimension_numbers<[1], [0], [0], [1], [0, 0, 1, 1], [], []>} : vector<16x32xf32>, vector<32x32xf32>, vector<16x32xf32> -> vector<16x32xf32>
    %c0_18 = arith.constant 0 : index
    %c0_19 = arith.constant 0 : index
    %c0_20 = arith.constant 0 : index
    %14 = vector.load %arg6[%c0_18, %c0_19, %c0_20] : memref<2x1x32xf32, #tpu.memory_space<vmem>>, vector<1x1x32xf32>
    %15 = vector.shape_cast %14 : vector<1x1x32xf32> to vector<1x32xf32>
    %16 = vector.broadcast %15 : vector<1x32xf32> to vector<16x32xf32>
    %17 = arith.addf %13, %16 : vector<16x32xf32>
    %cst_21 = arith.constant dense<0.000000e+00> : vector<16x32xf32>
    %18 = tpu.matmul %4, %8, %cst_21 {dimension_numbers = #tpu.dot_dimension_numbers<[1], [0], [0], [1], [0, 0, 1, 1], [], []>} : vector<16x32xf32>, vector<32x32xf32>, vector<16x32xf32> -> vector<16x32xf32>
    %c0_22 = arith.constant 0 : index
    %c0_23 = arith.constant 0 : index
    %c0_24 = arith.constant 0 : index
    %19 = vector.load %arg7[%c0_22, %c0_23, %c0_24] : memref<2x1x32xf32, #tpu.memory_space<vmem>>, vector<1x1x32xf32>
    %20 = vector.shape_cast %19 : vector<1x1x32xf32> to vector<1x32xf32>
    %21 = vector.broadcast %20 : vector<1x32xf32> to vector<16x32xf32>
    %22 = arith.addf %18, %21 : vector<16x32xf32>
    %cst_25 = arith.constant dense<0.000000e+00> : vector<16x32xf32>
    %23 = tpu.matmul %4, %10, %cst_25 {dimension_numbers = #tpu.dot_dimension_numbers<[1], [0], [0], [1], [0, 0, 1, 1], [], []>} : vector<16x32xf32>, vector<32x32xf32>, vector<16x32xf32> -> vector<16x32xf32>
    %c0_26 = arith.constant 0 : index
    %c0_27 = arith.constant 0 : index
    %c0_28 = arith.constant 0 : index
    %24 = vector.load %arg8[%c0_26, %c0_27, %c0_28] : memref<2x1x32xf32, #tpu.memory_space<vmem>>, vector<1x1x32xf32>
    %25 = vector.shape_cast %24 : vector<1x1x32xf32> to vector<1x32xf32>
    %26 = vector.broadcast %25 : vector<1x32xf32> to vector<16x32xf32>
    %27 = arith.addf %23, %26 : vector<16x32xf32>
    %28 = vector.extract_strided_slice %17 {offsets = [0, 0], sizes = [8, 32], strides = [1, 1]} : vector<16x32xf32> to vector<8x32xf32>
    %29 = vector.extract_strided_slice %22 {offsets = [0, 0], sizes = [8, 32], strides = [1, 1]} : vector<16x32xf32> to vector<8x32xf32>
    %30 = vector.extract_strided_slice %27 {offsets = [0, 0], sizes = [8, 32], strides = [1, 1]} : vector<16x32xf32> to vector<8x32xf32>
    %cst_29 = arith.constant 0.000000e+00 : f32
    %31 = vector.broadcast %cst_29 : f32 to vector<8x32xf32>
    %32 = vector.extract_strided_slice %28 {offsets = [0, 0], sizes = [8, 8], strides = [1, 1]} : vector<8x32xf32> to vector<8x8xf32>
    %33 = vector.extract_strided_slice %29 {offsets = [0, 0], sizes = [8, 8], strides = [1, 1]} : vector<8x32xf32> to vector<8x8xf32>
    %34 = tpu.transpose %33, [1, 0] : vector<8x8xf32> -> vector<8x8xf32>
    %cst_30 = arith.constant dense<0.000000e+00> : vector<8x8xf32>
    %35 = tpu.matmul %32, %34, %cst_30 {dimension_numbers = #tpu.dot_dimension_numbers<[1], [0], [0], [1], [0, 0, 1, 1], [], []>} : vector<8x8xf32>, vector<8x8xf32>, vector<8x8xf32> -> vector<8x8xf32>
    %cst_31 = arith.constant dense<0xFF800000> : vector<8xf32>
    %36 = vector.multi_reduction <maximumf>, %35, %cst_31 [1] : vector<8x8xf32> to vector<8xf32>
    %37 = vector.shape_cast %36 : vector<8xf32> to vector<8x1xf32>
    %38 = vector.broadcast %37 : vector<8x1xf32> to vector<8x8xf32>
    %39 = arith.subf %35, %38 : vector<8x8xf32>
    %40 = math.exp %39 : vector<8x8xf32>
    %cst_32 = arith.constant dense<0.000000e+00> : vector<8xf32>
    %41 = vector.multi_reduction <add>, %40, %cst_32 [1] : vector<8x8xf32> to vector<8xf32>
    %42 = vector.shape_cast %41 : vector<8xf32> to vector<8x1xf32>
    %43 = tpu.reciprocal %42 {approx = true} : vector<8x1xf32> -> vector<8x1xf32>
    %44 = vector.broadcast %43 : vector<8x1xf32> to vector<8x8xf32>
    %45 = arith.mulf %40, %44 : vector<8x8xf32>
    %46 = vector.extract_strided_slice %30 {offsets = [0, 0], sizes = [8, 8], strides = [1, 1]} : vector<8x32xf32> to vector<8x8xf32>
    %cst_33 = arith.constant dense<0.000000e+00> : vector<8x8xf32>
    %47 = tpu.matmul %45, %46, %cst_33 {dimension_numbers = #tpu.dot_dimension_numbers<[1], [0], [0], [1], [0, 0, 1, 1], [], []>} : vector<8x8xf32>, vector<8x8xf32>, vector<8x8xf32> -> vector<8x8xf32>
    %48 = vector.extract_strided_slice %12 {offsets = [0, 0], sizes = [8, 32], strides = [1, 1]} : vector<32x32xf32> to vector<8x32xf32>
    %cst_34 = arith.constant dense<0.000000e+00> : vector<8x32xf32>
    %49 = tpu.matmul %47, %48, %cst_34 {dimension_numbers = #tpu.dot_dimension_numbers<[1], [0], [0], [1], [0, 0, 1, 1], [], []>} : vector<8x8xf32>, vector<8x32xf32>, vector<8x32xf32> -> vector<8x32xf32>
    %50 = arith.addf %31, %49 : vector<8x32xf32>
    %51 = vector.extract_strided_slice %28 {offsets = [0, 8], sizes = [8, 8], strides = [1, 1]} : vector<8x32xf32> to vector<8x8xf32>
    %52 = vector.extract_strided_slice %29 {offsets = [0, 8], sizes = [8, 8], strides = [1, 1]} : vector<8x32xf32> to vector<8x8xf32>
    %53 = tpu.transpose %52, [1, 0] : vector<8x8xf32> -> vector<8x8xf32>
    %cst_35 = arith.constant dense<0.000000e+00> : vector<8x8xf32>
    %54 = tpu.matmul %51, %53, %cst_35 {dimension_numbers = #tpu.dot_dimension_numbers<[1], [0], [0], [1], [0, 0, 1, 1], [], []>} : vector<8x8xf32>, vector<8x8xf32>, vector<8x8xf32> -> vector<8x8xf32>
    %cst_36 = arith.constant dense<0xFF800000> : vector<8xf32>
    %55 = vector.multi_reduction <maximumf>, %54, %cst_36 [1] : vector<8x8xf32> to vector<8xf32>
    %56 = vector.shape_cast %55 : vector<8xf32> to vector<8x1xf32>
    %57 = vector.broadcast %56 : vector<8x1xf32> to vector<8x8xf32>
    %58 = arith.subf %54, %57 : vector<8x8xf32>
    %59 = math.exp %58 : vector<8x8xf32>
    %cst_37 = arith.constant dense<0.000000e+00> : vector<8xf32>
    %60 = vector.multi_reduction <add>, %59, %cst_37 [1] : vector<8x8xf32> to vector<8xf32>
    %61 = vector.shape_cast %60 : vector<8xf32> to vector<8x1xf32>
    %62 = tpu.reciprocal %61 {approx = true} : vector<8x1xf32> -> vector<8x1xf32>
    %63 = vector.broadcast %62 : vector<8x1xf32> to vector<8x8xf32>
    %64 = arith.mulf %59, %63 : vector<8x8xf32>
    %65 = vector.extract_strided_slice %30 {offsets = [0, 8], sizes = [8, 8], strides = [1, 1]} : vector<8x32xf32> to vector<8x8xf32>
    %cst_38 = arith.constant dense<0.000000e+00> : vector<8x8xf32>
    %66 = tpu.matmul %64, %65, %cst_38 {dimension_numbers = #tpu.dot_dimension_numbers<[1], [0], [0], [1], [0, 0, 1, 1], [], []>} : vector<8x8xf32>, vector<8x8xf32>, vector<8x8xf32> -> vector<8x8xf32>
    %67 = vector.extract_strided_slice %12 {offsets = [8, 0], sizes = [8, 32], strides = [1, 1]} : vector<32x32xf32> to vector<8x32xf32>
    %cst_39 = arith.constant dense<0.000000e+00> : vector<8x32xf32>
    %68 = tpu.matmul %66, %67, %cst_39 {dimension_numbers = #tpu.dot_dimension_numbers<[1], [0], [0], [1], [0, 0, 1, 1], [], []>} : vector<8x8xf32>, vector<8x32xf32>, vector<8x32xf32> -> vector<8x32xf32>
    %69 = arith.addf %50, %68 : vector<8x32xf32>
    %70 = vector.extract_strided_slice %28 {offsets = [0, 16], sizes = [8, 8], strides = [1, 1]} : vector<8x32xf32> to vector<8x8xf32>
    %71 = vector.extract_strided_slice %29 {offsets = [0, 16], sizes = [8, 8], strides = [1, 1]} : vector<8x32xf32> to vector<8x8xf32>
    %72 = tpu.transpose %71, [1, 0] : vector<8x8xf32> -> vector<8x8xf32>
    %cst_40 = arith.constant dense<0.000000e+00> : vector<8x8xf32>
    %73 = tpu.matmul %70, %72, %cst_40 {dimension_numbers = #tpu.dot_dimension_numbers<[1], [0], [0], [1], [0, 0, 1, 1], [], []>} : vector<8x8xf32>, vector<8x8xf32>, vector<8x8xf32> -> vector<8x8xf32>
    %cst_41 = arith.constant dense<0xFF800000> : vector<8xf32>
    %74 = vector.multi_reduction <maximumf>, %73, %cst_41 [1] : vector<8x8xf32> to vector<8xf32>
    %75 = vector.shape_cast %74 : vector<8xf32> to vector<8x1xf32>
    %76 = vector.broadcast %75 : vector<8x1xf32> to vector<8x8xf32>
    %77 = arith.subf %73, %76 : vector<8x8xf32>
    %78 = math.exp %77 : vector<8x8xf32>
    %cst_42 = arith.constant dense<0.000000e+00> : vector<8xf32>
    %79 = vector.multi_reduction <add>, %78, %cst_42 [1] : vector<8x8xf32> to vector<8xf32>
    %80 = vector.shape_cast %79 : vector<8xf32> to vector<8x1xf32>
    %81 = tpu.reciprocal %80 {approx = true} : vector<8x1xf32> -> vector<8x1xf32>
    %82 = vector.broadcast %81 : vector<8x1xf32> to vector<8x8xf32>
    %83 = arith.mulf %78, %82 : vector<8x8xf32>
    %84 = vector.extract_strided_slice %30 {offsets = [0, 16], sizes = [8, 8], strides = [1, 1]} : vector<8x32xf32> to vector<8x8xf32>
    %cst_43 = arith.constant dense<0.000000e+00> : vector<8x8xf32>
    %85 = tpu.matmul %83, %84, %cst_43 {dimension_numbers = #tpu.dot_dimension_numbers<[1], [0], [0], [1], [0, 0, 1, 1], [], []>} : vector<8x8xf32>, vector<8x8xf32>, vector<8x8xf32> -> vector<8x8xf32>
    %86 = vector.extract_strided_slice %12 {offsets = [16, 0], sizes = [8, 32], strides = [1, 1]} : vector<32x32xf32> to vector<8x32xf32>
    %cst_44 = arith.constant dense<0.000000e+00> : vector<8x32xf32>
    %87 = tpu.matmul %85, %86, %cst_44 {dimension_numbers = #tpu.dot_dimension_numbers<[1], [0], [0], [1], [0, 0, 1, 1], [], []>} : vector<8x8xf32>, vector<8x32xf32>, vector<8x32xf32> -> vector<8x32xf32>
    %88 = arith.addf %69, %87 : vector<8x32xf32>
    %89 = vector.extract_strided_slice %28 {offsets = [0, 24], sizes = [8, 8], strides = [1, 1]} : vector<8x32xf32> to vector<8x8xf32>
    %90 = vector.extract_strided_slice %29 {offsets = [0, 24], sizes = [8, 8], strides = [1, 1]} : vector<8x32xf32> to vector<8x8xf32>
    %91 = tpu.transpose %90, [1, 0] : vector<8x8xf32> -> vector<8x8xf32>
    %cst_45 = arith.constant dense<0.000000e+00> : vector<8x8xf32>
    %92 = tpu.matmul %89, %91, %cst_45 {dimension_numbers = #tpu.dot_dimension_numbers<[1], [0], [0], [1], [0, 0, 1, 1], [], []>} : vector<8x8xf32>, vector<8x8xf32>, vector<8x8xf32> -> vector<8x8xf32>
    %cst_46 = arith.constant dense<0xFF800000> : vector<8xf32>
    %93 = vector.multi_reduction <maximumf>, %92, %cst_46 [1] : vector<8x8xf32> to vector<8xf32>
    %94 = vector.shape_cast %93 : vector<8xf32> to vector<8x1xf32>
    %95 = vector.broadcast %94 : vector<8x1xf32> to vector<8x8xf32>
    %96 = arith.subf %92, %95 : vector<8x8xf32>
    %97 = math.exp %96 : vector<8x8xf32>
    %cst_47 = arith.constant dense<0.000000e+00> : vector<8xf32>
    %98 = vector.multi_reduction <add>, %97, %cst_47 [1] : vector<8x8xf32> to vector<8xf32>
    %99 = vector.shape_cast %98 : vector<8xf32> to vector<8x1xf32>
    %100 = tpu.reciprocal %99 {approx = true} : vector<8x1xf32> -> vector<8x1xf32>
    %101 = vector.broadcast %100 : vector<8x1xf32> to vector<8x8xf32>
    %102 = arith.mulf %97, %101 : vector<8x8xf32>
    %103 = vector.extract_strided_slice %30 {offsets = [0, 24], sizes = [8, 8], strides = [1, 1]} : vector<8x32xf32> to vector<8x8xf32>
    %cst_48 = arith.constant dense<0.000000e+00> : vector<8x8xf32>
    %104 = tpu.matmul %102, %103, %cst_48 {dimension_numbers = #tpu.dot_dimension_numbers<[1], [0], [0], [1], [0, 0, 1, 1], [], []>} : vector<8x8xf32>, vector<8x8xf32>, vector<8x8xf32> -> vector<8x8xf32>
    %105 = vector.extract_strided_slice %12 {offsets = [24, 0], sizes = [8, 32], strides = [1, 1]} : vector<32x32xf32> to vector<8x32xf32>
    %cst_49 = arith.constant dense<0.000000e+00> : vector<8x32xf32>
    %106 = tpu.matmul %104, %105, %cst_49 {dimension_numbers = #tpu.dot_dimension_numbers<[1], [0], [0], [1], [0, 0, 1, 1], [], []>} : vector<8x8xf32>, vector<8x32xf32>, vector<8x32xf32> -> vector<8x32xf32>
    %107 = arith.addf %88, %106 : vector<8x32xf32>
    %108 = vector.extract_strided_slice %17 {offsets = [8, 0], sizes = [8, 32], strides = [1, 1]} : vector<16x32xf32> to vector<8x32xf32>
    %109 = vector.extract_strided_slice %22 {offsets = [8, 0], sizes = [8, 32], strides = [1, 1]} : vector<16x32xf32> to vector<8x32xf32>
    %110 = vector.extract_strided_slice %27 {offsets = [8, 0], sizes = [8, 32], strides = [1, 1]} : vector<16x32xf32> to vector<8x32xf32>
    %cst_50 = arith.constant 0.000000e+00 : f32
    %111 = vector.broadcast %cst_50 : f32 to vector<8x32xf32>
    %112 = vector.extract_strided_slice %108 {offsets = [0, 0], sizes = [8, 8], strides = [1, 1]} : vector<8x32xf32> to vector<8x8xf32>
    %113 = vector.extract_strided_slice %109 {offsets = [0, 0], sizes = [8, 8], strides = [1, 1]} : vector<8x32xf32> to vector<8x8xf32>
    %114 = tpu.transpose %113, [1, 0] : vector<8x8xf32> -> vector<8x8xf32>
    %cst_51 = arith.constant dense<0.000000e+00> : vector<8x8xf32>
    %115 = tpu.matmul %112, %114, %cst_51 {dimension_numbers = #tpu.dot_dimension_numbers<[1], [0], [0], [1], [0, 0, 1, 1], [], []>} : vector<8x8xf32>, vector<8x8xf32>, vector<8x8xf32> -> vector<8x8xf32>
    %cst_52 = arith.constant dense<0xFF800000> : vector<8xf32>
    %116 = vector.multi_reduction <maximumf>, %115, %cst_52 [1] : vector<8x8xf32> to vector<8xf32>
    %117 = vector.shape_cast %116 : vector<8xf32> to vector<8x1xf32>
    %118 = vector.broadcast %117 : vector<8x1xf32> to vector<8x8xf32>
    %119 = arith.subf %115, %118 : vector<8x8xf32>
    %120 = math.exp %119 : vector<8x8xf32>
    %cst_53 = arith.constant dense<0.000000e+00> : vector<8xf32>
    %121 = vector.multi_reduction <add>, %120, %cst_53 [1] : vector<8x8xf32> to vector<8xf32>
    %122 = vector.shape_cast %121 : vector<8xf32> to vector<8x1xf32>
    %123 = tpu.reciprocal %122 {approx = true} : vector<8x1xf32> -> vector<8x1xf32>
    %124 = vector.broadcast %123 : vector<8x1xf32> to vector<8x8xf32>
    %125 = arith.mulf %120, %124 : vector<8x8xf32>
    %126 = vector.extract_strided_slice %110 {offsets = [0, 0], sizes = [8, 8], strides = [1, 1]} : vector<8x32xf32> to vector<8x8xf32>
    %cst_54 = arith.constant dense<0.000000e+00> : vector<8x8xf32>
    %127 = tpu.matmul %125, %126, %cst_54 {dimension_numbers = #tpu.dot_dimension_numbers<[1], [0], [0], [1], [0, 0, 1, 1], [], []>} : vector<8x8xf32>, vector<8x8xf32>, vector<8x8xf32> -> vector<8x8xf32>
    %128 = vector.extract_strided_slice %12 {offsets = [0, 0], sizes = [8, 32], strides = [1, 1]} : vector<32x32xf32> to vector<8x32xf32>
    %cst_55 = arith.constant dense<0.000000e+00> : vector<8x32xf32>
    %129 = tpu.matmul %127, %128, %cst_55 {dimension_numbers = #tpu.dot_dimension_numbers<[1], [0], [0], [1], [0, 0, 1, 1], [], []>} : vector<8x8xf32>, vector<8x32xf32>, vector<8x32xf32> -> vector<8x32xf32>
    %130 = arith.addf %111, %129 : vector<8x32xf32>
    %131 = vector.extract_strided_slice %108 {offsets = [0, 8], sizes = [8, 8], strides = [1, 1]} : vector<8x32xf32> to vector<8x8xf32>
    %132 = vector.extract_strided_slice %109 {offsets = [0, 8], sizes = [8, 8], strides = [1, 1]} : vector<8x32xf32> to vector<8x8xf32>
    %133 = tpu.transpose %132, [1, 0] : vector<8x8xf32> -> vector<8x8xf32>
    %cst_56 = arith.constant dense<0.000000e+00> : vector<8x8xf32>
    %134 = tpu.matmul %131, %133, %cst_56 {dimension_numbers = #tpu.dot_dimension_numbers<[1], [0], [0], [1], [0, 0, 1, 1], [], []>} : vector<8x8xf32>, vector<8x8xf32>, vector<8x8xf32> -> vector<8x8xf32>
    %cst_57 = arith.constant dense<0xFF800000> : vector<8xf32>
    %135 = vector.multi_reduction <maximumf>, %134, %cst_57 [1] : vector<8x8xf32> to vector<8xf32>
    %136 = vector.shape_cast %135 : vector<8xf32> to vector<8x1xf32>
    %137 = vector.broadcast %136 : vector<8x1xf32> to vector<8x8xf32>
    %138 = arith.subf %134, %137 : vector<8x8xf32>
    %139 = math.exp %138 : vector<8x8xf32>
    %cst_58 = arith.constant dense<0.000000e+00> : vector<8xf32>
    %140 = vector.multi_reduction <add>, %139, %cst_58 [1] : vector<8x8xf32> to vector<8xf32>
    %141 = vector.shape_cast %140 : vector<8xf32> to vector<8x1xf32>
    %142 = tpu.reciprocal %141 {approx = true} : vector<8x1xf32> -> vector<8x1xf32>
    %143 = vector.broadcast %142 : vector<8x1xf32> to vector<8x8xf32>
    %144 = arith.mulf %139, %143 : vector<8x8xf32>
    %145 = vector.extract_strided_slice %110 {offsets = [0, 8], sizes = [8, 8], strides = [1, 1]} : vector<8x32xf32> to vector<8x8xf32>
    %cst_59 = arith.constant dense<0.000000e+00> : vector<8x8xf32>
    %146 = tpu.matmul %144, %145, %cst_59 {dimension_numbers = #tpu.dot_dimension_numbers<[1], [0], [0], [1], [0, 0, 1, 1], [], []>} : vector<8x8xf32>, vector<8x8xf32>, vector<8x8xf32> -> vector<8x8xf32>
    %147 = vector.extract_strided_slice %12 {offsets = [8, 0], sizes = [8, 32], strides = [1, 1]} : vector<32x32xf32> to vector<8x32xf32>
    %cst_60 = arith.constant dense<0.000000e+00> : vector<8x32xf32>
    %148 = tpu.matmul %146, %147, %cst_60 {dimension_numbers = #tpu.dot_dimension_numbers<[1], [0], [0], [1], [0, 0, 1, 1], [], []>} : vector<8x8xf32>, vector<8x32xf32>, vector<8x32xf32> -> vector<8x32xf32>
    %149 = arith.addf %130, %148 : vector<8x32xf32>
    %150 = vector.extract_strided_slice %108 {offsets = [0, 16], sizes = [8, 8], strides = [1, 1]} : vector<8x32xf32> to vector<8x8xf32>
    %151 = vector.extract_strided_slice %109 {offsets = [0, 16], sizes = [8, 8], strides = [1, 1]} : vector<8x32xf32> to vector<8x8xf32>
    %152 = tpu.transpose %151, [1, 0] : vector<8x8xf32> -> vector<8x8xf32>
    %cst_61 = arith.constant dense<0.000000e+00> : vector<8x8xf32>
    %153 = tpu.matmul %150, %152, %cst_61 {dimension_numbers = #tpu.dot_dimension_numbers<[1], [0], [0], [1], [0, 0, 1, 1], [], []>} : vector<8x8xf32>, vector<8x8xf32>, vector<8x8xf32> -> vector<8x8xf32>
    %cst_62 = arith.constant dense<0xFF800000> : vector<8xf32>
    %154 = vector.multi_reduction <maximumf>, %153, %cst_62 [1] : vector<8x8xf32> to vector<8xf32>
    %155 = vector.shape_cast %154 : vector<8xf32> to vector<8x1xf32>
    %156 = vector.broadcast %155 : vector<8x1xf32> to vector<8x8xf32>
    %157 = arith.subf %153, %156 : vector<8x8xf32>
    %158 = math.exp %157 : vector<8x8xf32>
    %cst_63 = arith.constant dense<0.000000e+00> : vector<8xf32>
    %159 = vector.multi_reduction <add>, %158, %cst_63 [1] : vector<8x8xf32> to vector<8xf32>
    %160 = vector.shape_cast %159 : vector<8xf32> to vector<8x1xf32>
    %161 = tpu.reciprocal %160 {approx = true} : vector<8x1xf32> -> vector<8x1xf32>
    %162 = vector.broadcast %161 : vector<8x1xf32> to vector<8x8xf32>
    %163 = arith.mulf %158, %162 : vector<8x8xf32>
    %164 = vector.extract_strided_slice %110 {offsets = [0, 16], sizes = [8, 8], strides = [1, 1]} : vector<8x32xf32> to vector<8x8xf32>
    %cst_64 = arith.constant dense<0.000000e+00> : vector<8x8xf32>
    %165 = tpu.matmul %163, %164, %cst_64 {dimension_numbers = #tpu.dot_dimension_numbers<[1], [0], [0], [1], [0, 0, 1, 1], [], []>} : vector<8x8xf32>, vector<8x8xf32>, vector<8x8xf32> -> vector<8x8xf32>
    %166 = vector.extract_strided_slice %12 {offsets = [16, 0], sizes = [8, 32], strides = [1, 1]} : vector<32x32xf32> to vector<8x32xf32>
    %cst_65 = arith.constant dense<0.000000e+00> : vector<8x32xf32>
    %167 = tpu.matmul %165, %166, %cst_65 {dimension_numbers = #tpu.dot_dimension_numbers<[1], [0], [0], [1], [0, 0, 1, 1], [], []>} : vector<8x8xf32>, vector<8x32xf32>, vector<8x32xf32> -> vector<8x32xf32>
    %168 = arith.addf %149, %167 : vector<8x32xf32>
    %169 = vector.extract_strided_slice %108 {offsets = [0, 24], sizes = [8, 8], strides = [1, 1]} : vector<8x32xf32> to vector<8x8xf32>
    %170 = vector.extract_strided_slice %109 {offsets = [0, 24], sizes = [8, 8], strides = [1, 1]} : vector<8x32xf32> to vector<8x8xf32>
    %171 = tpu.transpose %170, [1, 0] : vector<8x8xf32> -> vector<8x8xf32>
    %cst_66 = arith.constant dense<0.000000e+00> : vector<8x8xf32>
    %172 = tpu.matmul %169, %171, %cst_66 {dimension_numbers = #tpu.dot_dimension_numbers<[1], [0], [0], [1], [0, 0, 1, 1], [], []>} : vector<8x8xf32>, vector<8x8xf32>, vector<8x8xf32> -> vector<8x8xf32>
    %cst_67 = arith.constant dense<0xFF800000> : vector<8xf32>
    %173 = vector.multi_reduction <maximumf>, %172, %cst_67 [1] : vector<8x8xf32> to vector<8xf32>
    %174 = vector.shape_cast %173 : vector<8xf32> to vector<8x1xf32>
    %175 = vector.broadcast %174 : vector<8x1xf32> to vector<8x8xf32>
    %176 = arith.subf %172, %175 : vector<8x8xf32>
    %177 = math.exp %176 : vector<8x8xf32>
    %cst_68 = arith.constant dense<0.000000e+00> : vector<8xf32>
    %178 = vector.multi_reduction <add>, %177, %cst_68 [1] : vector<8x8xf32> to vector<8xf32>
    %179 = vector.shape_cast %178 : vector<8xf32> to vector<8x1xf32>
    %180 = tpu.reciprocal %179 {approx = true} : vector<8x1xf32> -> vector<8x1xf32>
    %181 = vector.broadcast %180 : vector<8x1xf32> to vector<8x8xf32>
    %182 = arith.mulf %177, %181 : vector<8x8xf32>
    %183 = vector.extract_strided_slice %110 {offsets = [0, 24], sizes = [8, 8], strides = [1, 1]} : vector<8x32xf32> to vector<8x8xf32>
    %cst_69 = arith.constant dense<0.000000e+00> : vector<8x8xf32>
    %184 = tpu.matmul %182, %183, %cst_69 {dimension_numbers = #tpu.dot_dimension_numbers<[1], [0], [0], [1], [0, 0, 1, 1], [], []>} : vector<8x8xf32>, vector<8x8xf32>, vector<8x8xf32> -> vector<8x8xf32>
    %185 = vector.extract_strided_slice %12 {offsets = [24, 0], sizes = [8, 32], strides = [1, 1]} : vector<32x32xf32> to vector<8x32xf32>
    %cst_70 = arith.constant dense<0.000000e+00> : vector<8x32xf32>
    %186 = tpu.matmul %184, %185, %cst_70 {dimension_numbers = #tpu.dot_dimension_numbers<[1], [0], [0], [1], [0, 0, 1, 1], [], []>} : vector<8x8xf32>, vector<8x32xf32>, vector<8x32xf32> -> vector<8x32xf32>
    %187 = arith.addf %168, %186 : vector<8x32xf32>
    %188 = tpu.concatenate %107, %187 in 0 : vector<8x32xf32>, vector<8x32xf32> -> vector<16x32xf32>
    %c0_71 = arith.constant 0 : index
    %c0_72 = arith.constant 0 : index
    %c0_73 = arith.constant 0 : index
    %189 = vector.load %arg10[%c0_71, %c0_72, %c0_73] : memref<2x1x32xf32, #tpu.memory_space<vmem>>, vector<1x1x32xf32>
    %190 = vector.shape_cast %189 : vector<1x1x32xf32> to vector<1x32xf32>
    %191 = vector.broadcast %190 : vector<1x32xf32> to vector<16x32xf32>
    %192 = arith.addf %188, %191 : vector<16x32xf32>
    %193 = arith.addf %4, %192 : vector<16x32xf32>
    %cst_74 = arith.constant dense<0.000000e+00> : vector<16xf32>
    %194 = vector.multi_reduction <add>, %193, %cst_74 [1] : vector<16x32xf32> to vector<16xf32>
    %195 = vector.shape_cast %194 : vector<16xf32> to vector<16x1xf32>
    %cst_75 = arith.constant 3.200000e+01 : f32
    %196 = vector.broadcast %cst_75 : f32 to vector<16x1xf32>
    %197 = arith.divf %195, %196 : vector<16x1xf32>
    %198 = vector.broadcast %197 : vector<16x1xf32> to vector<16x32xf32>
    %199 = arith.subf %193, %198 : vector<16x32xf32>
    %200 = arith.mulf %199, %199 : vector<16x32xf32>
    %cst_76 = arith.constant dense<0.000000e+00> : vector<16xf32>
    %201 = vector.multi_reduction <add>, %200, %cst_76 [1] : vector<16x32xf32> to vector<16xf32>
    %202 = vector.shape_cast %201 : vector<16xf32> to vector<16x1xf32>
    %cst_77 = arith.constant 3.200000e+01 : f32
    %203 = vector.broadcast %cst_77 : f32 to vector<16x1xf32>
    %204 = arith.divf %202, %203 : vector<16x1xf32>
    %205 = vector.broadcast %197 : vector<16x1xf32> to vector<16x32xf32>
    %206 = arith.subf %193, %205 : vector<16x32xf32>
    %cst_78 = arith.constant 9.99999974E-6 : f32
    %207 = vector.broadcast %cst_78 : f32 to vector<16x1xf32>
    %208 = arith.addf %204, %207 : vector<16x1xf32>
    %209 = math.rsqrt %208 : vector<16x1xf32>
    %210 = vector.broadcast %209 : vector<16x1xf32> to vector<16x32xf32>
    %211 = arith.mulf %206, %210 : vector<16x32xf32>
    %c0_79 = arith.constant 0 : index
    %c0_80 = arith.constant 0 : index
    %c0_81 = arith.constant 0 : index
    %212 = vector.load %arg11[%c0_79, %c0_80, %c0_81] : memref<2x1x32xf32, #tpu.memory_space<vmem>>, vector<1x1x32xf32>
    %213 = vector.shape_cast %212 : vector<1x1x32xf32> to vector<1x32xf32>
    %214 = vector.broadcast %213 : vector<1x32xf32> to vector<16x32xf32>
    %215 = arith.mulf %211, %214 : vector<16x32xf32>
    %c0_82 = arith.constant 0 : index
    %c0_83 = arith.constant 0 : index
    %c0_84 = arith.constant 0 : index
    %216 = vector.load %arg12[%c0_82, %c0_83, %c0_84] : memref<2x1x32xf32, #tpu.memory_space<vmem>>, vector<1x1x32xf32>
    %217 = vector.shape_cast %216 : vector<1x1x32xf32> to vector<1x32xf32>
    %218 = vector.broadcast %217 : vector<1x32xf32> to vector<16x32xf32>
    %219 = arith.addf %215, %218 : vector<16x32xf32>
    %c0_85 = arith.constant 0 : index
    %c0_86 = arith.constant 0 : index
    %c0_87 = arith.constant 0 : index
    %220 = vector.load %arg13[%c0_85, %c0_86, %c0_87] : memref<2x32x64xf32, #tpu.memory_space<vmem>>, vector<1x32x64xf32>
    %221 = vector.shape_cast %220 : vector<1x32x64xf32> to vector<32x64xf32>
    %cst_88 = arith.constant dense<0.000000e+00> : vector<16x64xf32>
    %222 = tpu.matmul %219, %221, %cst_88 {dimension_numbers = #tpu.dot_dimension_numbers<[1], [0], [0], [1], [0, 0, 1, 1], [], []>} : vector<16x32xf32>, vector<32x64xf32>, vector<16x64xf32> -> vector<16x64xf32>
    %c0_89 = arith.constant 0 : index
    %c0_90 = arith.constant 0 : index
    %c0_91 = arith.constant 0 : index
    %223 = vector.load %arg14[%c0_89, %c0_90, %c0_91] : memref<2x1x64xf32, #tpu.memory_space<vmem>>, vector<1x1x64xf32>
    %224 = vector.shape_cast %223 : vector<1x1x64xf32> to vector<1x64xf32>
    %225 = vector.broadcast %224 : vector<1x64xf32> to vector<16x64xf32>
    %226 = arith.addf %222, %225 : vector<16x64xf32>
    %cst_92 = arith.constant 0.000000e+00 : f32
    %227 = vector.broadcast %cst_92 : f32 to vector<16x64xf32>
    %228 = arith.maximumf %226, %227 : vector<16x64xf32>
    %c0_93 = arith.constant 0 : index
    %c0_94 = arith.constant 0 : index
    %c0_95 = arith.constant 0 : index
    %229 = vector.load %arg15[%c0_93, %c0_94, %c0_95] : memref<2x64x32xf32, #tpu.memory_space<vmem>>, vector<1x64x32xf32>
    %230 = vector.shape_cast %229 : vector<1x64x32xf32> to vector<64x32xf32>
    %cst_96 = arith.constant dense<0.000000e+00> : vector<16x32xf32>
    %231 = tpu.matmul %228, %230, %cst_96 {dimension_numbers = #tpu.dot_dimension_numbers<[1], [0], [0], [1], [0, 0, 1, 1], [], []>} : vector<16x64xf32>, vector<64x32xf32>, vector<16x32xf32> -> vector<16x32xf32>
    %c0_97 = arith.constant 0 : index
    %c0_98 = arith.constant 0 : index
    %c0_99 = arith.constant 0 : index
    %232 = vector.load %arg16[%c0_97, %c0_98, %c0_99] : memref<2x1x32xf32, #tpu.memory_space<vmem>>, vector<1x1x32xf32>
    %233 = vector.shape_cast %232 : vector<1x1x32xf32> to vector<1x32xf32>
    %234 = vector.broadcast %233 : vector<1x32xf32> to vector<16x32xf32>
    %235 = arith.addf %231, %234 : vector<16x32xf32>
    %236 = arith.addf %219, %235 : vector<16x32xf32>
    %cst_100 = arith.constant dense<0.000000e+00> : vector<16xf32>
    %237 = vector.multi_reduction <add>, %236, %cst_100 [1] : vector<16x32xf32> to vector<16xf32>
    %238 = vector.shape_cast %237 : vector<16xf32> to vector<16x1xf32>
    %cst_101 = arith.constant 3.200000e+01 : f32
    %239 = vector.broadcast %cst_101 : f32 to vector<16x1xf32>
    %240 = arith.divf %238, %239 : vector<16x1xf32>
    %241 = vector.broadcast %240 : vector<16x1xf32> to vector<16x32xf32>
    %242 = arith.subf %236, %241 : vector<16x32xf32>
    %243 = arith.mulf %242, %242 : vector<16x32xf32>
    %cst_102 = arith.constant dense<0.000000e+00> : vector<16xf32>
    %244 = vector.multi_reduction <add>, %243, %cst_102 [1] : vector<16x32xf32> to vector<16xf32>
    %245 = vector.shape_cast %244 : vector<16xf32> to vector<16x1xf32>
    %cst_103 = arith.constant 3.200000e+01 : f32
    %246 = vector.broadcast %cst_103 : f32 to vector<16x1xf32>
    %247 = arith.divf %245, %246 : vector<16x1xf32>
    %248 = vector.broadcast %240 : vector<16x1xf32> to vector<16x32xf32>
    %249 = arith.subf %236, %248 : vector<16x32xf32>
    %cst_104 = arith.constant 9.99999974E-6 : f32
    %250 = vector.broadcast %cst_104 : f32 to vector<16x1xf32>
    %251 = arith.addf %247, %250 : vector<16x1xf32>
    %252 = math.rsqrt %251 : vector<16x1xf32>
    %253 = vector.broadcast %252 : vector<16x1xf32> to vector<16x32xf32>
    %254 = arith.mulf %249, %253 : vector<16x32xf32>
    %c0_105 = arith.constant 0 : index
    %c0_106 = arith.constant 0 : index
    %c0_107 = arith.constant 0 : index
    %255 = vector.load %arg17[%c0_105, %c0_106, %c0_107] : memref<2x1x32xf32, #tpu.memory_space<vmem>>, vector<1x1x32xf32>
    %256 = vector.shape_cast %255 : vector<1x1x32xf32> to vector<1x32xf32>
    %257 = vector.broadcast %256 : vector<1x32xf32> to vector<16x32xf32>
    %258 = arith.mulf %254, %257 : vector<16x32xf32>
    %c0_108 = arith.constant 0 : index
    %c0_109 = arith.constant 0 : index
    %c0_110 = arith.constant 0 : index
    %259 = vector.load %arg18[%c0_108, %c0_109, %c0_110] : memref<2x1x32xf32, #tpu.memory_space<vmem>>, vector<1x1x32xf32>
    %260 = vector.shape_cast %259 : vector<1x1x32xf32> to vector<1x32xf32>
    %261 = vector.broadcast %260 : vector<1x32xf32> to vector<16x32xf32>
    %262 = arith.addf %258, %261 : vector<16x32xf32>
    %c1 = arith.constant 1 : index
    %c0_111 = arith.constant 0 : index
    %c0_112 = arith.constant 0 : index
    %263 = vector.load %arg3[%c1, %c0_111, %c0_112] : memref<2x32x32xf32, #tpu.memory_space<vmem>>, vector<1x32x32xf32>
    %264 = vector.shape_cast %263 : vector<1x32x32xf32> to vector<32x32xf32>
    %c1_113 = arith.constant 1 : index
    %c0_114 = arith.constant 0 : index
    %c0_115 = arith.constant 0 : index
    %265 = vector.load %arg4[%c1_113, %c0_114, %c0_115] : memref<2x32x32xf32, #tpu.memory_space<vmem>>, vector<1x32x32xf32>
    %266 = vector.shape_cast %265 : vector<1x32x32xf32> to vector<32x32xf32>
    %c1_116 = arith.constant 1 : index
    %c0_117 = arith.constant 0 : index
    %c0_118 = arith.constant 0 : index
    %267 = vector.load %arg5[%c1_116, %c0_117, %c0_118] : memref<2x32x32xf32, #tpu.memory_space<vmem>>, vector<1x32x32xf32>
    %268 = vector.shape_cast %267 : vector<1x32x32xf32> to vector<32x32xf32>
    %c1_119 = arith.constant 1 : index
    %c0_120 = arith.constant 0 : index
    %c0_121 = arith.constant 0 : index
    %269 = vector.load %arg9[%c1_119, %c0_120, %c0_121] : memref<2x32x32xf32, #tpu.memory_space<vmem>>, vector<1x32x32xf32>
    %270 = vector.shape_cast %269 : vector<1x32x32xf32> to vector<32x32xf32>
    %cst_122 = arith.constant dense<0.000000e+00> : vector<16x32xf32>
    %271 = tpu.matmul %262, %264, %cst_122 {dimension_numbers = #tpu.dot_dimension_numbers<[1], [0], [0], [1], [0, 0, 1, 1], [], []>} : vector<16x32xf32>, vector<32x32xf32>, vector<16x32xf32> -> vector<16x32xf32>
    %c1_123 = arith.constant 1 : index
    %c0_124 = arith.constant 0 : index
    %c0_125 = arith.constant 0 : index
    %272 = vector.load %arg6[%c1_123, %c0_124, %c0_125] : memref<2x1x32xf32, #tpu.memory_space<vmem>>, vector<1x1x32xf32>
    %273 = vector.shape_cast %272 : vector<1x1x32xf32> to vector<1x32xf32>
    %274 = vector.broadcast %273 : vector<1x32xf32> to vector<16x32xf32>
    %275 = arith.addf %271, %274 : vector<16x32xf32>
    %cst_126 = arith.constant dense<0.000000e+00> : vector<16x32xf32>
    %276 = tpu.matmul %262, %266, %cst_126 {dimension_numbers = #tpu.dot_dimension_numbers<[1], [0], [0], [1], [0, 0, 1, 1], [], []>} : vector<16x32xf32>, vector<32x32xf32>, vector<16x32xf32> -> vector<16x32xf32>
    %c1_127 = arith.constant 1 : index
    %c0_128 = arith.constant 0 : index
    %c0_129 = arith.constant 0 : index
    %277 = vector.load %arg7[%c1_127, %c0_128, %c0_129] : memref<2x1x32xf32, #tpu.memory_space<vmem>>, vector<1x1x32xf32>
    %278 = vector.shape_cast %277 : vector<1x1x32xf32> to vector<1x32xf32>
    %279 = vector.broadcast %278 : vector<1x32xf32> to vector<16x32xf32>
    %280 = arith.addf %276, %279 : vector<16x32xf32>
    %cst_130 = arith.constant dense<0.000000e+00> : vector<16x32xf32>
    %281 = tpu.matmul %262, %268, %cst_130 {dimension_numbers = #tpu.dot_dimension_numbers<[1], [0], [0], [1], [0, 0, 1, 1], [], []>} : vector<16x32xf32>, vector<32x32xf32>, vector<16x32xf32> -> vector<16x32xf32>
    %c1_131 = arith.constant 1 : index
    %c0_132 = arith.constant 0 : index
    %c0_133 = arith.constant 0 : index
    %282 = vector.load %arg8[%c1_131, %c0_132, %c0_133] : memref<2x1x32xf32, #tpu.memory_space<vmem>>, vector<1x1x32xf32>
    %283 = vector.shape_cast %282 : vector<1x1x32xf32> to vector<1x32xf32>
    %284 = vector.broadcast %283 : vector<1x32xf32> to vector<16x32xf32>
    %285 = arith.addf %281, %284 : vector<16x32xf32>
    %286 = vector.extract_strided_slice %275 {offsets = [0, 0], sizes = [8, 32], strides = [1, 1]} : vector<16x32xf32> to vector<8x32xf32>
    %287 = vector.extract_strided_slice %280 {offsets = [0, 0], sizes = [8, 32], strides = [1, 1]} : vector<16x32xf32> to vector<8x32xf32>
    %288 = vector.extract_strided_slice %285 {offsets = [0, 0], sizes = [8, 32], strides = [1, 1]} : vector<16x32xf32> to vector<8x32xf32>
    %cst_134 = arith.constant 0.000000e+00 : f32
    %289 = vector.broadcast %cst_134 : f32 to vector<8x32xf32>
    %290 = vector.extract_strided_slice %286 {offsets = [0, 0], sizes = [8, 8], strides = [1, 1]} : vector<8x32xf32> to vector<8x8xf32>
    %291 = vector.extract_strided_slice %287 {offsets = [0, 0], sizes = [8, 8], strides = [1, 1]} : vector<8x32xf32> to vector<8x8xf32>
    %292 = tpu.transpose %291, [1, 0] : vector<8x8xf32> -> vector<8x8xf32>
    %cst_135 = arith.constant dense<0.000000e+00> : vector<8x8xf32>
    %293 = tpu.matmul %290, %292, %cst_135 {dimension_numbers = #tpu.dot_dimension_numbers<[1], [0], [0], [1], [0, 0, 1, 1], [], []>} : vector<8x8xf32>, vector<8x8xf32>, vector<8x8xf32> -> vector<8x8xf32>
    %cst_136 = arith.constant dense<0xFF800000> : vector<8xf32>
    %294 = vector.multi_reduction <maximumf>, %293, %cst_136 [1] : vector<8x8xf32> to vector<8xf32>
    %295 = vector.shape_cast %294 : vector<8xf32> to vector<8x1xf32>
    %296 = vector.broadcast %295 : vector<8x1xf32> to vector<8x8xf32>
    %297 = arith.subf %293, %296 : vector<8x8xf32>
    %298 = math.exp %297 : vector<8x8xf32>
    %cst_137 = arith.constant dense<0.000000e+00> : vector<8xf32>
    %299 = vector.multi_reduction <add>, %298, %cst_137 [1] : vector<8x8xf32> to vector<8xf32>
    %300 = vector.shape_cast %299 : vector<8xf32> to vector<8x1xf32>
    %301 = tpu.reciprocal %300 {approx = true} : vector<8x1xf32> -> vector<8x1xf32>
    %302 = vector.broadcast %301 : vector<8x1xf32> to vector<8x8xf32>
    %303 = arith.mulf %298, %302 : vector<8x8xf32>
    %304 = vector.extract_strided_slice %288 {offsets = [0, 0], sizes = [8, 8], strides = [1, 1]} : vector<8x32xf32> to vector<8x8xf32>
    %cst_138 = arith.constant dense<0.000000e+00> : vector<8x8xf32>
    %305 = tpu.matmul %303, %304, %cst_138 {dimension_numbers = #tpu.dot_dimension_numbers<[1], [0], [0], [1], [0, 0, 1, 1], [], []>} : vector<8x8xf32>, vector<8x8xf32>, vector<8x8xf32> -> vector<8x8xf32>
    %306 = vector.extract_strided_slice %270 {offsets = [0, 0], sizes = [8, 32], strides = [1, 1]} : vector<32x32xf32> to vector<8x32xf32>
    %cst_139 = arith.constant dense<0.000000e+00> : vector<8x32xf32>
    %307 = tpu.matmul %305, %306, %cst_139 {dimension_numbers = #tpu.dot_dimension_numbers<[1], [0], [0], [1], [0, 0, 1, 1], [], []>} : vector<8x8xf32>, vector<8x32xf32>, vector<8x32xf32> -> vector<8x32xf32>
    %308 = arith.addf %289, %307 : vector<8x32xf32>
    %309 = vector.extract_strided_slice %286 {offsets = [0, 8], sizes = [8, 8], strides = [1, 1]} : vector<8x32xf32> to vector<8x8xf32>
    %310 = vector.extract_strided_slice %287 {offsets = [0, 8], sizes = [8, 8], strides = [1, 1]} : vector<8x32xf32> to vector<8x8xf32>
    %311 = tpu.transpose %310, [1, 0] : vector<8x8xf32> -> vector<8x8xf32>
    %cst_140 = arith.constant dense<0.000000e+00> : vector<8x8xf32>
    %312 = tpu.matmul %309, %311, %cst_140 {dimension_numbers = #tpu.dot_dimension_numbers<[1], [0], [0], [1], [0, 0, 1, 1], [], []>} : vector<8x8xf32>, vector<8x8xf32>, vector<8x8xf32> -> vector<8x8xf32>
    %cst_141 = arith.constant dense<0xFF800000> : vector<8xf32>
    %313 = vector.multi_reduction <maximumf>, %312, %cst_141 [1] : vector<8x8xf32> to vector<8xf32>
    %314 = vector.shape_cast %313 : vector<8xf32> to vector<8x1xf32>
    %315 = vector.broadcast %314 : vector<8x1xf32> to vector<8x8xf32>
    %316 = arith.subf %312, %315 : vector<8x8xf32>
    %317 = math.exp %316 : vector<8x8xf32>
    %cst_142 = arith.constant dense<0.000000e+00> : vector<8xf32>
    %318 = vector.multi_reduction <add>, %317, %cst_142 [1] : vector<8x8xf32> to vector<8xf32>
    %319 = vector.shape_cast %318 : vector<8xf32> to vector<8x1xf32>
    %320 = tpu.reciprocal %319 {approx = true} : vector<8x1xf32> -> vector<8x1xf32>
    %321 = vector.broadcast %320 : vector<8x1xf32> to vector<8x8xf32>
    %322 = arith.mulf %317, %321 : vector<8x8xf32>
    %323 = vector.extract_strided_slice %288 {offsets = [0, 8], sizes = [8, 8], strides = [1, 1]} : vector<8x32xf32> to vector<8x8xf32>
    %cst_143 = arith.constant dense<0.000000e+00> : vector<8x8xf32>
    %324 = tpu.matmul %322, %323, %cst_143 {dimension_numbers = #tpu.dot_dimension_numbers<[1], [0], [0], [1], [0, 0, 1, 1], [], []>} : vector<8x8xf32>, vector<8x8xf32>, vector<8x8xf32> -> vector<8x8xf32>
    %325 = vector.extract_strided_slice %270 {offsets = [8, 0], sizes = [8, 32], strides = [1, 1]} : vector<32x32xf32> to vector<8x32xf32>
    %cst_144 = arith.constant dense<0.000000e+00> : vector<8x32xf32>
    %326 = tpu.matmul %324, %325, %cst_144 {dimension_numbers = #tpu.dot_dimension_numbers<[1], [0], [0], [1], [0, 0, 1, 1], [], []>} : vector<8x8xf32>, vector<8x32xf32>, vector<8x32xf32> -> vector<8x32xf32>
    %327 = arith.addf %308, %326 : vector<8x32xf32>
    %328 = vector.extract_strided_slice %286 {offsets = [0, 16], sizes = [8, 8], strides = [1, 1]} : vector<8x32xf32> to vector<8x8xf32>
    %329 = vector.extract_strided_slice %287 {offsets = [0, 16], sizes = [8, 8], strides = [1, 1]} : vector<8x32xf32> to vector<8x8xf32>
    %330 = tpu.transpose %329, [1, 0] : vector<8x8xf32> -> vector<8x8xf32>
    %cst_145 = arith.constant dense<0.000000e+00> : vector<8x8xf32>
    %331 = tpu.matmul %328, %330, %cst_145 {dimension_numbers = #tpu.dot_dimension_numbers<[1], [0], [0], [1], [0, 0, 1, 1], [], []>} : vector<8x8xf32>, vector<8x8xf32>, vector<8x8xf32> -> vector<8x8xf32>
    %cst_146 = arith.constant dense<0xFF800000> : vector<8xf32>
    %332 = vector.multi_reduction <maximumf>, %331, %cst_146 [1] : vector<8x8xf32> to vector<8xf32>
    %333 = vector.shape_cast %332 : vector<8xf32> to vector<8x1xf32>
    %334 = vector.broadcast %333 : vector<8x1xf32> to vector<8x8xf32>
    %335 = arith.subf %331, %334 : vector<8x8xf32>
    %336 = math.exp %335 : vector<8x8xf32>
    %cst_147 = arith.constant dense<0.000000e+00> : vector<8xf32>
    %337 = vector.multi_reduction <add>, %336, %cst_147 [1] : vector<8x8xf32> to vector<8xf32>
    %338 = vector.shape_cast %337 : vector<8xf32> to vector<8x1xf32>
    %339 = tpu.reciprocal %338 {approx = true} : vector<8x1xf32> -> vector<8x1xf32>
    %340 = vector.broadcast %339 : vector<8x1xf32> to vector<8x8xf32>
    %341 = arith.mulf %336, %340 : vector<8x8xf32>
    %342 = vector.extract_strided_slice %288 {offsets = [0, 16], sizes = [8, 8], strides = [1, 1]} : vector<8x32xf32> to vector<8x8xf32>
    %cst_148 = arith.constant dense<0.000000e+00> : vector<8x8xf32>
    %343 = tpu.matmul %341, %342, %cst_148 {dimension_numbers = #tpu.dot_dimension_numbers<[1], [0], [0], [1], [0, 0, 1, 1], [], []>} : vector<8x8xf32>, vector<8x8xf32>, vector<8x8xf32> -> vector<8x8xf32>
    %344 = vector.extract_strided_slice %270 {offsets = [16, 0], sizes = [8, 32], strides = [1, 1]} : vector<32x32xf32> to vector<8x32xf32>
    %cst_149 = arith.constant dense<0.000000e+00> : vector<8x32xf32>
    %345 = tpu.matmul %343, %344, %cst_149 {dimension_numbers = #tpu.dot_dimension_numbers<[1], [0], [0], [1], [0, 0, 1, 1], [], []>} : vector<8x8xf32>, vector<8x32xf32>, vector<8x32xf32> -> vector<8x32xf32>
    %346 = arith.addf %327, %345 : vector<8x32xf32>
    %347 = vector.extract_strided_slice %286 {offsets = [0, 24], sizes = [8, 8], strides = [1, 1]} : vector<8x32xf32> to vector<8x8xf32>
    %348 = vector.extract_strided_slice %287 {offsets = [0, 24], sizes = [8, 8], strides = [1, 1]} : vector<8x32xf32> to vector<8x8xf32>
    %349 = tpu.transpose %348, [1, 0] : vector<8x8xf32> -> vector<8x8xf32>
    %cst_150 = arith.constant dense<0.000000e+00> : vector<8x8xf32>
    %350 = tpu.matmul %347, %349, %cst_150 {dimension_numbers = #tpu.dot_dimension_numbers<[1], [0], [0], [1], [0, 0, 1, 1], [], []>} : vector<8x8xf32>, vector<8x8xf32>, vector<8x8xf32> -> vector<8x8xf32>
    %cst_151 = arith.constant dense<0xFF800000> : vector<8xf32>
    %351 = vector.multi_reduction <maximumf>, %350, %cst_151 [1] : vector<8x8xf32> to vector<8xf32>
    %352 = vector.shape_cast %351 : vector<8xf32> to vector<8x1xf32>
    %353 = vector.broadcast %352 : vector<8x1xf32> to vector<8x8xf32>
    %354 = arith.subf %350, %353 : vector<8x8xf32>
    %355 = math.exp %354 : vector<8x8xf32>
    %cst_152 = arith.constant dense<0.000000e+00> : vector<8xf32>
    %356 = vector.multi_reduction <add>, %355, %cst_152 [1] : vector<8x8xf32> to vector<8xf32>
    %357 = vector.shape_cast %356 : vector<8xf32> to vector<8x1xf32>
    %358 = tpu.reciprocal %357 {approx = true} : vector<8x1xf32> -> vector<8x1xf32>
    %359 = vector.broadcast %358 : vector<8x1xf32> to vector<8x8xf32>
    %360 = arith.mulf %355, %359 : vector<8x8xf32>
    %361 = vector.extract_strided_slice %288 {offsets = [0, 24], sizes = [8, 8], strides = [1, 1]} : vector<8x32xf32> to vector<8x8xf32>
    %cst_153 = arith.constant dense<0.000000e+00> : vector<8x8xf32>
    %362 = tpu.matmul %360, %361, %cst_153 {dimension_numbers = #tpu.dot_dimension_numbers<[1], [0], [0], [1], [0, 0, 1, 1], [], []>} : vector<8x8xf32>, vector<8x8xf32>, vector<8x8xf32> -> vector<8x8xf32>
    %363 = vector.extract_strided_slice %270 {offsets = [24, 0], sizes = [8, 32], strides = [1, 1]} : vector<32x32xf32> to vector<8x32xf32>
    %cst_154 = arith.constant dense<0.000000e+00> : vector<8x32xf32>
    %364 = tpu.matmul %362, %363, %cst_154 {dimension_numbers = #tpu.dot_dimension_numbers<[1], [0], [0], [1], [0, 0, 1, 1], [], []>} : vector<8x8xf32>, vector<8x32xf32>, vector<8x32xf32> -> vector<8x32xf32>
    %365 = arith.addf %346, %364 : vector<8x32xf32>
    %366 = vector.extract_strided_slice %275 {offsets = [8, 0], sizes = [8, 32], strides = [1, 1]} : vector<16x32xf32> to vector<8x32xf32>
    %367 = vector.extract_strided_slice %280 {offsets = [8, 0], sizes = [8, 32], strides = [1, 1]} : vector<16x32xf32> to vector<8x32xf32>
    %368 = vector.extract_strided_slice %285 {offsets = [8, 0], sizes = [8, 32], strides = [1, 1]} : vector<16x32xf32> to vector<8x32xf32>
    %cst_155 = arith.constant 0.000000e+00 : f32
    %369 = vector.broadcast %cst_155 : f32 to vector<8x32xf32>
    %370 = vector.extract_strided_slice %366 {offsets = [0, 0], sizes = [8, 8], strides = [1, 1]} : vector<8x32xf32> to vector<8x8xf32>
    %371 = vector.extract_strided_slice %367 {offsets = [0, 0], sizes = [8, 8], strides = [1, 1]} : vector<8x32xf32> to vector<8x8xf32>
    %372 = tpu.transpose %371, [1, 0] : vector<8x8xf32> -> vector<8x8xf32>
    %cst_156 = arith.constant dense<0.000000e+00> : vector<8x8xf32>
    %373 = tpu.matmul %370, %372, %cst_156 {dimension_numbers = #tpu.dot_dimension_numbers<[1], [0], [0], [1], [0, 0, 1, 1], [], []>} : vector<8x8xf32>, vector<8x8xf32>, vector<8x8xf32> -> vector<8x8xf32>
    %cst_157 = arith.constant dense<0xFF800000> : vector<8xf32>
    %374 = vector.multi_reduction <maximumf>, %373, %cst_157 [1] : vector<8x8xf32> to vector<8xf32>
    %375 = vector.shape_cast %374 : vector<8xf32> to vector<8x1xf32>
    %376 = vector.broadcast %375 : vector<8x1xf32> to vector<8x8xf32>
    %377 = arith.subf %373, %376 : vector<8x8xf32>
    %378 = math.exp %377 : vector<8x8xf32>
    %cst_158 = arith.constant dense<0.000000e+00> : vector<8xf32>
    %379 = vector.multi_reduction <add>, %378, %cst_158 [1] : vector<8x8xf32> to vector<8xf32>
    %380 = vector.shape_cast %379 : vector<8xf32> to vector<8x1xf32>
    %381 = tpu.reciprocal %380 {approx = true} : vector<8x1xf32> -> vector<8x1xf32>
    %382 = vector.broadcast %381 : vector<8x1xf32> to vector<8x8xf32>
    %383 = arith.mulf %378, %382 : vector<8x8xf32>
    %384 = vector.extract_strided_slice %368 {offsets = [0, 0], sizes = [8, 8], strides = [1, 1]} : vector<8x32xf32> to vector<8x8xf32>
    %cst_159 = arith.constant dense<0.000000e+00> : vector<8x8xf32>
    %385 = tpu.matmul %383, %384, %cst_159 {dimension_numbers = #tpu.dot_dimension_numbers<[1], [0], [0], [1], [0, 0, 1, 1], [], []>} : vector<8x8xf32>, vector<8x8xf32>, vector<8x8xf32> -> vector<8x8xf32>
    %386 = vector.extract_strided_slice %270 {offsets = [0, 0], sizes = [8, 32], strides = [1, 1]} : vector<32x32xf32> to vector<8x32xf32>
    %cst_160 = arith.constant dense<0.000000e+00> : vector<8x32xf32>
    %387 = tpu.matmul %385, %386, %cst_160 {dimension_numbers = #tpu.dot_dimension_numbers<[1], [0], [0], [1], [0, 0, 1, 1], [], []>} : vector<8x8xf32>, vector<8x32xf32>, vector<8x32xf32> -> vector<8x32xf32>
    %388 = arith.addf %369, %387 : vector<8x32xf32>
    %389 = vector.extract_strided_slice %366 {offsets = [0, 8], sizes = [8, 8], strides = [1, 1]} : vector<8x32xf32> to vector<8x8xf32>
    %390 = vector.extract_strided_slice %367 {offsets = [0, 8], sizes = [8, 8], strides = [1, 1]} : vector<8x32xf32> to vector<8x8xf32>
    %391 = tpu.transpose %390, [1, 0] : vector<8x8xf32> -> vector<8x8xf32>
    %cst_161 = arith.constant dense<0.000000e+00> : vector<8x8xf32>
    %392 = tpu.matmul %389, %391, %cst_161 {dimension_numbers = #tpu.dot_dimension_numbers<[1], [0], [0], [1], [0, 0, 1, 1], [], []>} : vector<8x8xf32>, vector<8x8xf32>, vector<8x8xf32> -> vector<8x8xf32>
    %cst_162 = arith.constant dense<0xFF800000> : vector<8xf32>
    %393 = vector.multi_reduction <maximumf>, %392, %cst_162 [1] : vector<8x8xf32> to vector<8xf32>
    %394 = vector.shape_cast %393 : vector<8xf32> to vector<8x1xf32>
    %395 = vector.broadcast %394 : vector<8x1xf32> to vector<8x8xf32>
    %396 = arith.subf %392, %395 : vector<8x8xf32>
    %397 = math.exp %396 : vector<8x8xf32>
    %cst_163 = arith.constant dense<0.000000e+00> : vector<8xf32>
    %398 = vector.multi_reduction <add>, %397, %cst_163 [1] : vector<8x8xf32> to vector<8xf32>
    %399 = vector.shape_cast %398 : vector<8xf32> to vector<8x1xf32>
    %400 = tpu.reciprocal %399 {approx = true} : vector<8x1xf32> -> vector<8x1xf32>
    %401 = vector.broadcast %400 : vector<8x1xf32> to vector<8x8xf32>
    %402 = arith.mulf %397, %401 : vector<8x8xf32>
    %403 = vector.extract_strided_slice %368 {offsets = [0, 8], sizes = [8, 8], strides = [1, 1]} : vector<8x32xf32> to vector<8x8xf32>
    %cst_164 = arith.constant dense<0.000000e+00> : vector<8x8xf32>
    %404 = tpu.matmul %402, %403, %cst_164 {dimension_numbers = #tpu.dot_dimension_numbers<[1], [0], [0], [1], [0, 0, 1, 1], [], []>} : vector<8x8xf32>, vector<8x8xf32>, vector<8x8xf32> -> vector<8x8xf32>
    %405 = vector.extract_strided_slice %270 {offsets = [8, 0], sizes = [8, 32], strides = [1, 1]} : vector<32x32xf32> to vector<8x32xf32>
    %cst_165 = arith.constant dense<0.000000e+00> : vector<8x32xf32>
    %406 = tpu.matmul %404, %405, %cst_165 {dimension_numbers = #tpu.dot_dimension_numbers<[1], [0], [0], [1], [0, 0, 1, 1], [], []>} : vector<8x8xf32>, vector<8x32xf32>, vector<8x32xf32> -> vector<8x32xf32>
    %407 = arith.addf %388, %406 : vector<8x32xf32>
    %408 = vector.extract_strided_slice %366 {offsets = [0, 16], sizes = [8, 8], strides = [1, 1]} : vector<8x32xf32> to vector<8x8xf32>
    %409 = vector.extract_strided_slice %367 {offsets = [0, 16], sizes = [8, 8], strides = [1, 1]} : vector<8x32xf32> to vector<8x8xf32>
    %410 = tpu.transpose %409, [1, 0] : vector<8x8xf32> -> vector<8x8xf32>
    %cst_166 = arith.constant dense<0.000000e+00> : vector<8x8xf32>
    %411 = tpu.matmul %408, %410, %cst_166 {dimension_numbers = #tpu.dot_dimension_numbers<[1], [0], [0], [1], [0, 0, 1, 1], [], []>} : vector<8x8xf32>, vector<8x8xf32>, vector<8x8xf32> -> vector<8x8xf32>
    %cst_167 = arith.constant dense<0xFF800000> : vector<8xf32>
    %412 = vector.multi_reduction <maximumf>, %411, %cst_167 [1] : vector<8x8xf32> to vector<8xf32>
    %413 = vector.shape_cast %412 : vector<8xf32> to vector<8x1xf32>
    %414 = vector.broadcast %413 : vector<8x1xf32> to vector<8x8xf32>
    %415 = arith.subf %411, %414 : vector<8x8xf32>
    %416 = math.exp %415 : vector<8x8xf32>
    %cst_168 = arith.constant dense<0.000000e+00> : vector<8xf32>
    %417 = vector.multi_reduction <add>, %416, %cst_168 [1] : vector<8x8xf32> to vector<8xf32>
    %418 = vector.shape_cast %417 : vector<8xf32> to vector<8x1xf32>
    %419 = tpu.reciprocal %418 {approx = true} : vector<8x1xf32> -> vector<8x1xf32>
    %420 = vector.broadcast %419 : vector<8x1xf32> to vector<8x8xf32>
    %421 = arith.mulf %416, %420 : vector<8x8xf32>
    %422 = vector.extract_strided_slice %368 {offsets = [0, 16], sizes = [8, 8], strides = [1, 1]} : vector<8x32xf32> to vector<8x8xf32>
    %cst_169 = arith.constant dense<0.000000e+00> : vector<8x8xf32>
    %423 = tpu.matmul %421, %422, %cst_169 {dimension_numbers = #tpu.dot_dimension_numbers<[1], [0], [0], [1], [0, 0, 1, 1], [], []>} : vector<8x8xf32>, vector<8x8xf32>, vector<8x8xf32> -> vector<8x8xf32>
    %424 = vector.extract_strided_slice %270 {offsets = [16, 0], sizes = [8, 32], strides = [1, 1]} : vector<32x32xf32> to vector<8x32xf32>
    %cst_170 = arith.constant dense<0.000000e+00> : vector<8x32xf32>
    %425 = tpu.matmul %423, %424, %cst_170 {dimension_numbers = #tpu.dot_dimension_numbers<[1], [0], [0], [1], [0, 0, 1, 1], [], []>} : vector<8x8xf32>, vector<8x32xf32>, vector<8x32xf32> -> vector<8x32xf32>
    %426 = arith.addf %407, %425 : vector<8x32xf32>
    %427 = vector.extract_strided_slice %366 {offsets = [0, 24], sizes = [8, 8], strides = [1, 1]} : vector<8x32xf32> to vector<8x8xf32>
    %428 = vector.extract_strided_slice %367 {offsets = [0, 24], sizes = [8, 8], strides = [1, 1]} : vector<8x32xf32> to vector<8x8xf32>
    %429 = tpu.transpose %428, [1, 0] : vector<8x8xf32> -> vector<8x8xf32>
    %cst_171 = arith.constant dense<0.000000e+00> : vector<8x8xf32>
    %430 = tpu.matmul %427, %429, %cst_171 {dimension_numbers = #tpu.dot_dimension_numbers<[1], [0], [0], [1], [0, 0, 1, 1], [], []>} : vector<8x8xf32>, vector<8x8xf32>, vector<8x8xf32> -> vector<8x8xf32>
    %cst_172 = arith.constant dense<0xFF800000> : vector<8xf32>
    %431 = vector.multi_reduction <maximumf>, %430, %cst_172 [1] : vector<8x8xf32> to vector<8xf32>
    %432 = vector.shape_cast %431 : vector<8xf32> to vector<8x1xf32>
    %433 = vector.broadcast %432 : vector<8x1xf32> to vector<8x8xf32>
    %434 = arith.subf %430, %433 : vector<8x8xf32>
    %435 = math.exp %434 : vector<8x8xf32>
    %cst_173 = arith.constant dense<0.000000e+00> : vector<8xf32>
    %436 = vector.multi_reduction <add>, %435, %cst_173 [1] : vector<8x8xf32> to vector<8xf32>
    %437 = vector.shape_cast %436 : vector<8xf32> to vector<8x1xf32>
    %438 = tpu.reciprocal %437 {approx = true} : vector<8x1xf32> -> vector<8x1xf32>
    %439 = vector.broadcast %438 : vector<8x1xf32> to vector<8x8xf32>
    %440 = arith.mulf %435, %439 : vector<8x8xf32>
    %441 = vector.extract_strided_slice %368 {offsets = [0, 24], sizes = [8, 8], strides = [1, 1]} : vector<8x32xf32> to vector<8x8xf32>
    %cst_174 = arith.constant dense<0.000000e+00> : vector<8x8xf32>
    %442 = tpu.matmul %440, %441, %cst_174 {dimension_numbers = #tpu.dot_dimension_numbers<[1], [0], [0], [1], [0, 0, 1, 1], [], []>} : vector<8x8xf32>, vector<8x8xf32>, vector<8x8xf32> -> vector<8x8xf32>
    %443 = vector.extract_strided_slice %270 {offsets = [24, 0], sizes = [8, 32], strides = [1, 1]} : vector<32x32xf32> to vector<8x32xf32>
    %cst_175 = arith.constant dense<0.000000e+00> : vector<8x32xf32>
    %444 = tpu.matmul %442, %443, %cst_175 {dimension_numbers = #tpu.dot_dimension_numbers<[1], [0], [0], [1], [0, 0, 1, 1], [], []>} : vector<8x8xf32>, vector<8x32xf32>, vector<8x32xf32> -> vector<8x32xf32>
    %445 = arith.addf %426, %444 : vector<8x32xf32>
    %446 = tpu.concatenate %365, %445 in 0 : vector<8x32xf32>, vector<8x32xf32> -> vector<16x32xf32>
    %c1_176 = arith.constant 1 : index
    %c0_177 = arith.constant 0 : index
    %c0_178 = arith.constant 0 : index
    %447 = vector.load %arg10[%c1_176, %c0_177, %c0_178] : memref<2x1x32xf32, #tpu.memory_space<vmem>>, vector<1x1x32xf32>
    %448 = vector.shape_cast %447 : vector<1x1x32xf32> to vector<1x32xf32>
    %449 = vector.broadcast %448 : vector<1x32xf32> to vector<16x32xf32>
    %450 = arith.addf %446, %449 : vector<16x32xf32>
    %451 = arith.addf %262, %450 : vector<16x32xf32>
    %cst_179 = arith.constant dense<0.000000e+00> : vector<16xf32>
    %452 = vector.multi_reduction <add>, %451, %cst_179 [1] : vector<16x32xf32> to vector<16xf32>
    %453 = vector.shape_cast %452 : vector<16xf32> to vector<16x1xf32>
    %cst_180 = arith.constant 3.200000e+01 : f32
    %454 = vector.broadcast %cst_180 : f32 to vector<16x1xf32>
    %455 = arith.divf %453, %454 : vector<16x1xf32>
    %456 = vector.broadcast %455 : vector<16x1xf32> to vector<16x32xf32>
    %457 = arith.subf %451, %456 : vector<16x32xf32>
    %458 = arith.mulf %457, %457 : vector<16x32xf32>
    %cst_181 = arith.constant dense<0.000000e+00> : vector<16xf32>
    %459 = vector.multi_reduction <add>, %458, %cst_181 [1] : vector<16x32xf32> to vector<16xf32>
    %460 = vector.shape_cast %459 : vector<16xf32> to vector<16x1xf32>
    %cst_182 = arith.constant 3.200000e+01 : f32
    %461 = vector.broadcast %cst_182 : f32 to vector<16x1xf32>
    %462 = arith.divf %460, %461 : vector<16x1xf32>
    %463 = vector.broadcast %455 : vector<16x1xf32> to vector<16x32xf32>
    %464 = arith.subf %451, %463 : vector<16x32xf32>
    %cst_183 = arith.constant 9.99999974E-6 : f32
    %465 = vector.broadcast %cst_183 : f32 to vector<16x1xf32>
    %466 = arith.addf %462, %465 : vector<16x1xf32>
    %467 = math.rsqrt %466 : vector<16x1xf32>
    %468 = vector.broadcast %467 : vector<16x1xf32> to vector<16x32xf32>
    %469 = arith.mulf %464, %468 : vector<16x32xf32>
    %c1_184 = arith.constant 1 : index
    %c0_185 = arith.constant 0 : index
    %c0_186 = arith.constant 0 : index
    %470 = vector.load %arg11[%c1_184, %c0_185, %c0_186] : memref<2x1x32xf32, #tpu.memory_space<vmem>>, vector<1x1x32xf32>
    %471 = vector.shape_cast %470 : vector<1x1x32xf32> to vector<1x32xf32>
    %472 = vector.broadcast %471 : vector<1x32xf32> to vector<16x32xf32>
    %473 = arith.mulf %469, %472 : vector<16x32xf32>
    %c1_187 = arith.constant 1 : index
    %c0_188 = arith.constant 0 : index
    %c0_189 = arith.constant 0 : index
    %474 = vector.load %arg12[%c1_187, %c0_188, %c0_189] : memref<2x1x32xf32, #tpu.memory_space<vmem>>, vector<1x1x32xf32>
    %475 = vector.shape_cast %474 : vector<1x1x32xf32> to vector<1x32xf32>
    %476 = vector.broadcast %475 : vector<1x32xf32> to vector<16x32xf32>
    %477 = arith.addf %473, %476 : vector<16x32xf32>
    %c1_190 = arith.constant 1 : index
    %c0_191 = arith.constant 0 : index
    %c0_192 = arith.constant 0 : index
    %478 = vector.load %arg13[%c1_190, %c0_191, %c0_192] : memref<2x32x64xf32, #tpu.memory_space<vmem>>, vector<1x32x64xf32>
    %479 = vector.shape_cast %478 : vector<1x32x64xf32> to vector<32x64xf32>
    %cst_193 = arith.constant dense<0.000000e+00> : vector<16x64xf32>
    %480 = tpu.matmul %477, %479, %cst_193 {dimension_numbers = #tpu.dot_dimension_numbers<[1], [0], [0], [1], [0, 0, 1, 1], [], []>} : vector<16x32xf32>, vector<32x64xf32>, vector<16x64xf32> -> vector<16x64xf32>
    %c1_194 = arith.constant 1 : index
    %c0_195 = arith.constant 0 : index
    %c0_196 = arith.constant 0 : index
    %481 = vector.load %arg14[%c1_194, %c0_195, %c0_196] : memref<2x1x64xf32, #tpu.memory_space<vmem>>, vector<1x1x64xf32>
    %482 = vector.shape_cast %481 : vector<1x1x64xf32> to vector<1x64xf32>
    %483 = vector.broadcast %482 : vector<1x64xf32> to vector<16x64xf32>
    %484 = arith.addf %480, %483 : vector<16x64xf32>
    %cst_197 = arith.constant 0.000000e+00 : f32
    %485 = vector.broadcast %cst_197 : f32 to vector<16x64xf32>
    %486 = arith.maximumf %484, %485 : vector<16x64xf32>
    %c1_198 = arith.constant 1 : index
    %c0_199 = arith.constant 0 : index
    %c0_200 = arith.constant 0 : index
    %487 = vector.load %arg15[%c1_198, %c0_199, %c0_200] : memref<2x64x32xf32, #tpu.memory_space<vmem>>, vector<1x64x32xf32>
    %488 = vector.shape_cast %487 : vector<1x64x32xf32> to vector<64x32xf32>
    %cst_201 = arith.constant dense<0.000000e+00> : vector<16x32xf32>
    %489 = tpu.matmul %486, %488, %cst_201 {dimension_numbers = #tpu.dot_dimension_numbers<[1], [0], [0], [1], [0, 0, 1, 1], [], []>} : vector<16x64xf32>, vector<64x32xf32>, vector<16x32xf32> -> vector<16x32xf32>
    %c1_202 = arith.constant 1 : index
    %c0_203 = arith.constant 0 : index
    %c0_204 = arith.constant 0 : index
    %490 = vector.load %arg16[%c1_202, %c0_203, %c0_204] : memref<2x1x32xf32, #tpu.memory_space<vmem>>, vector<1x1x32xf32>
    %491 = vector.shape_cast %490 : vector<1x1x32xf32> to vector<1x32xf32>
    %492 = vector.broadcast %491 : vector<1x32xf32> to vector<16x32xf32>
    %493 = arith.addf %489, %492 : vector<16x32xf32>
    %494 = arith.addf %477, %493 : vector<16x32xf32>
    %cst_205 = arith.constant dense<0.000000e+00> : vector<16xf32>
    %495 = vector.multi_reduction <add>, %494, %cst_205 [1] : vector<16x32xf32> to vector<16xf32>
    %496 = vector.shape_cast %495 : vector<16xf32> to vector<16x1xf32>
    %cst_206 = arith.constant 3.200000e+01 : f32
    %497 = vector.broadcast %cst_206 : f32 to vector<16x1xf32>
    %498 = arith.divf %496, %497 : vector<16x1xf32>
    %499 = vector.broadcast %498 : vector<16x1xf32> to vector<16x32xf32>
    %500 = arith.subf %494, %499 : vector<16x32xf32>
    %501 = arith.mulf %500, %500 : vector<16x32xf32>
    %cst_207 = arith.constant dense<0.000000e+00> : vector<16xf32>
    %502 = vector.multi_reduction <add>, %501, %cst_207 [1] : vector<16x32xf32> to vector<16xf32>
    %503 = vector.shape_cast %502 : vector<16xf32> to vector<16x1xf32>
    %cst_208 = arith.constant 3.200000e+01 : f32
    %504 = vector.broadcast %cst_208 : f32 to vector<16x1xf32>
    %505 = arith.divf %503, %504 : vector<16x1xf32>
    %506 = vector.broadcast %498 : vector<16x1xf32> to vector<16x32xf32>
    %507 = arith.subf %494, %506 : vector<16x32xf32>
    %cst_209 = arith.constant 9.99999974E-6 : f32
    %508 = vector.broadcast %cst_209 : f32 to vector<16x1xf32>
    %509 = arith.addf %505, %508 : vector<16x1xf32>
    %510 = math.rsqrt %509 : vector<16x1xf32>
    %511 = vector.broadcast %510 : vector<16x1xf32> to vector<16x32xf32>
    %512 = arith.mulf %507, %511 : vector<16x32xf32>
    %c1_210 = arith.constant 1 : index
    %c0_211 = arith.constant 0 : index
    %c0_212 = arith.constant 0 : index
    %513 = vector.load %arg17[%c1_210, %c0_211, %c0_212] : memref<2x1x32xf32, #tpu.memory_space<vmem>>, vector<1x1x32xf32>
    %514 = vector.shape_cast %513 : vector<1x1x32xf32> to vector<1x32xf32>
    %515 = vector.broadcast %514 : vector<1x32xf32> to vector<16x32xf32>
    %516 = arith.mulf %512, %515 : vector<16x32xf32>
    %c1_213 = arith.constant 1 : index
    %c0_214 = arith.constant 0 : index
    %c0_215 = arith.constant 0 : index
    %517 = vector.load %arg18[%c1_213, %c0_214, %c0_215] : memref<2x1x32xf32, #tpu.memory_space<vmem>>, vector<1x1x32xf32>
    %518 = vector.shape_cast %517 : vector<1x1x32xf32> to vector<1x32xf32>
    %519 = vector.broadcast %518 : vector<1x32xf32> to vector<16x32xf32>
    %520 = arith.addf %516, %519 : vector<16x32xf32>
    %521 = vector.extract_strided_slice %520 {offsets = [7, 0], sizes = [1, 32], strides = [1, 1]} : vector<16x32xf32> to vector<1x32xf32>
    %522 = vector.extract_strided_slice %520 {offsets = [15, 0], sizes = [1, 32], strides = [1, 1]} : vector<16x32xf32> to vector<1x32xf32>
    %523 = tpu.concatenate %521, %522 in 0 : vector<1x32xf32>, vector<1x32xf32> -> vector<2x32xf32>
    %c0_216 = arith.constant 0 : index
    %c0_217 = arith.constant 0 : index
    %524 = vector.load %arg19[%c0_216, %c0_217] : memref<32x8xf32, #tpu.memory_space<vmem>>, vector<32x8xf32>
    %cst_218 = arith.constant dense<0.000000e+00> : vector<2x8xf32>
    %525 = tpu.matmul %523, %524, %cst_218 {dimension_numbers = #tpu.dot_dimension_numbers<[1], [0], [0], [1], [0, 0, 1, 1], [], []>} : vector<2x32xf32>, vector<32x8xf32>, vector<2x8xf32> -> vector<2x8xf32>
    %c0_219 = arith.constant 0 : index
    %c0_220 = arith.constant 0 : index
    %526 = vector.load %arg20[%c0_219, %c0_220] : memref<1x8xf32, #tpu.memory_space<vmem>>, vector<1x8xf32>
    %527 = vector.broadcast %526 : vector<1x8xf32> to vector<2x8xf32>
    %528 = arith.addf %525, %527 : vector<2x8xf32>
    %cst_221 = arith.constant dense<0xFF800000> : vector<2xf32>
    %529 = vector.multi_reduction <maximumf>, %528, %cst_221 [1] : vector<2x8xf32> to vector<2xf32>
    %530 = vector.shape_cast %529 : vector<2xf32> to vector<2x1xf32>
    %531 = vector.broadcast %530 : vector<2x1xf32> to vector<2x8xf32>
    %532 = arith.subf %528, %531 : vector<2x8xf32>
    %533 = math.exp %532 : vector<2x8xf32>
    %cst_222 = arith.constant dense<0.000000e+00> : vector<2xf32>
    %534 = vector.multi_reduction <add>, %533, %cst_222 [1] : vector<2x8xf32> to vector<2xf32>
    %535 = vector.shape_cast %534 : vector<2xf32> to vector<2x1xf32>
    %536 = vector.broadcast %535 : vector<2x1xf32> to vector<2x8xf32>
    %537 = arith.divf %533, %536 : vector<2x8xf32>
    %c0_223 = arith.constant 0 : index
    %c0_224 = arith.constant 0 : index
    %538 = vector.load %arg21[%c0_223, %c0_224] : memref<2x8xf32, #tpu.memory_space<vmem>>, vector<2x8xf32>
    tpu.vector_store %arg21[%c0_223, %c0_224], %537 {strides = array<i32>} : memref<2x8xf32, #tpu.memory_space<vmem>>, vector<2x8xf32>,
    return
  }
}

</mosaic_0001>

<llo_original>
// kernel: tpu_custom_call.1
$region0: #{tpu_custom_call.1}
  #allocation0 [shape = 'u32[]', space=smem, size = 0x4, offset = 0x4, fixed_abs, tag = 'smem constant byte address 0x4 - core index']
  #allocation1 [shape = 'u32[72,128]{1,0:T(1,128)}', space=vmem, size = 0x9000, scoped, tag = 'internal scratch']
  %s0 = inlined_call_operand.vmem [shape: f32[16,4], index: 0, kind: input, shape index: {}]
  %s1 = inlined_call_operand.hbm [shape: f32[4,32], index: 1, kind: input, shape index: {}]
  %s2 = inlined_call_operand.hbm [shape: f32[16,32], index: 2, kind: input, shape index: {}]
  %s3 = inlined_call_operand.vmem [shape: f32[2,32,32], index: 3, kind: input, shape index: {}]
  %s4 = inlined_call_operand.vmem [shape: f32[2,32,32], index: 4, kind: input, shape index: {}]
  %s5 = inlined_call_operand.vmem [shape: f32[2,32,32], index: 5, kind: input, shape index: {}]
  %s6 = inlined_call_operand.vmem [shape: f32[2,1,32], index: 6, kind: input, shape index: {}]
  %s7 = inlined_call_operand.hbm [shape: f32[2,1,32], index: 7, kind: input, shape index: {}]
  %s8 = inlined_call_operand.hbm [shape: f32[2,1,32], index: 8, kind: input, shape index: {}]
  %s9 = inlined_call_operand.hbm [shape: f32[2,32,32], index: 9, kind: input, shape index: {}]
  %s10 = inlined_call_operand.hbm [shape: f32[2,1,32], index: 10, kind: input, shape index: {}]
  %s11 = inlined_call_operand.hbm [shape: f32[2,1,32], index: 11, kind: input, shape index: {}]
  %s12 = inlined_call_operand.hbm [shape: f32[2,1,32], index: 12, kind: input, shape index: {}]
  %s13 = inlined_call_operand.hbm [shape: f32[2,32,64], index: 13, kind: input, shape index: {}]
  %s14 = inlined_call_operand.hbm [shape: f32[2,1,64], index: 14, kind: input, shape index: {}]
  %s15 = inlined_call_operand.vmem [shape: f32[2,64,32], index: 15, kind: input, shape index: {}]
  %s16 = inlined_call_operand.hbm [shape: f32[2,1,32], index: 16, kind: input, shape index: {}]
  %s17 = inlined_call_operand.hbm [shape: f32[2,1,32], index: 17, kind: input, shape index: {}]
  %s18 = inlined_call_operand.vmem [shape: f32[2,1,32], index: 18, kind: input, shape index: {}]
  %s19 = inlined_call_operand.vmem [shape: f32[32,8], index: 19, kind: input, shape index: {}]
  %s20 = inlined_call_operand.vmem [shape: f32[1,8], index: 20, kind: input, shape index: {}]
  %s21 = inlined_call_operand.hbm [shape: f32[2,8], index: 21, kind: output, shape index: {}]
  %s22 = sld [smem:[#allocation0]]
  $region142: #{tpu_custom_call.1} parent=0
    _
  %s24 = ssub.s32 1, %s22
  %s25 = scalar_select 0, %s24, %s22
  $region1: #{tpu_custom_call.1} parent=0
    #allocation2 [shape = 'u8[2048]{0}', space=vmem, size = 0x800, scoped, tag = 'input window, operand 1, single buffered']
    #allocation3 [shape = 's32[1]{0}', space=sflag, size = 0x4, scoped, tag = 'scoped memory for tpu_custom_call.1']
    #allocation4 [shape = 's32[1]{0}', space=sflag, size = 0x4, scoped, tag = 'scoped memory for tpu_custom_call.1']
    #allocation5 [shape = 'u8[8192]{0}', space=vmem, size = 0x2000, scoped, tag = 'input window, operand 2, single buffered']
    #allocation6 [shape = 's32[1]{0}', space=sflag, size = 0x4, scoped, tag = 'scoped memory for tpu_custom_call.1']
    #allocation7 [shape = 'u8[1024]{0}', space=vmem, size = 0x400, scoped, tag = 'input window, operand 7, single buffered']
    #allocation8 [shape = 'u8[1024]{0}', space=vmem, size = 0x400, scoped, tag = 'input window, operand 8, single buffered']
    #allocation9 [shape = 's32[1]{0}', space=sflag, size = 0x4, scoped, tag = 'scoped memory for tpu_custom_call.1']
    #allocation10 [shape = 'u8[32768]{0}', space=vmem, size = 0x8000, scoped, tag = 'input window, operand 9, single buffered']
    #allocation11 [shape = 'u8[1024]{0}', space=vmem, size = 0x400, scoped, tag = 'input window, operand 10, single buffered']
    #allocation12 [shape = 's32[1]{0}', space=sflag, size = 0x4, scoped, tag = 'scoped memory for tpu_custom_call.1']
    #allocation13 [shape = 'u8[1024]{0}', space=vmem, size = 0x400, scoped, tag = 'input window, operand 11, single buffered']
    #allocation14 [shape = 'u8[1024]{0}', space=vmem, size = 0x400, scoped, tag = 'input window, operand 12, single buffered']
    #allocation15 [shape = 's32[1]{0}', space=sflag, size = 0x4, scoped, tag = 'scoped memory for tpu_custom_call.1']
    #allocation16 [shape = 'u8[32768]{0}', space=vmem, size = 0x8000, scoped, tag = 'input window, operand 13, single buffered']
    #allocation17 [shape = 'u8[1024]{0}', space=vmem, size = 0x400, scoped, tag = 'input window, operand 14, single buffered']
    #allocation18 [shape = 's32[1]{0}', space=sflag, size = 0x4, scoped, tag = 'scoped memory for tpu_custom_call.1']
    #allocation19 [shape = 'u8[1024]{0}', space=vmem, size = 0x400, scoped, tag = 'input window, operand 16, single buffered']
    #allocation20 [shape = 'u8[1024]{0}', space=vmem, size = 0x400, scoped, tag = 'input window, operand 17, single buffered']
    #allocation21 [shape = 's32[1]{0}', space=sflag, size = 0x4, scoped, tag = 'scoped memory for tpu_custom_call.1']
    #allocation22 [shape = 'u8[1024]{0}', space=vmem, size = 0x400, scoped, tag = 'output window, operand 0, single buffered']
    %26 = vsyncpa [#allocation3], 0
    %27 = vsyncpa [#allocation6], 0
    %28 = vsyncpa [#allocation9], 0
    %29 = vsyncpa [#allocation12], 0
    %30 = vsyncpa [#allocation15], 0
    %31 = vsyncpa [#allocation18], 0
    %32 = vsyncpa [#allocation21], 0
    %33 = vsyncpa [#allocation4], 0
    // Predicated region
    $region2: #{tpu_custom_call.1} parent=1 // pred_check
      _
    $region3: #{tpu_custom_call.1} parent=1 // pred_check_branch
      %35 = sbr.rel (0) target = $region5
    $region4: #{tpu_custom_call.1} parent=1 // pred_region
      _
    $region5: #{tpu_custom_call.1} parent=1 // pred_fallthru
      _
    // Predicated region
    $region6: #{tpu_custom_call.1} parent=1 // pred_check
      _
    $region7: #{tpu_custom_call.1} parent=1 // pred_check_branch
      %37 = sbr.rel (0) target = $region9
    $region8: #{tpu_custom_call.1} parent=1 // pred_region
      %39 = vsyncadd [#allocation3], 0
      %s41 = sshll.u32 %s1, 4
      %s42 = int_to_ptr.hbm [resolvable:$true] %s41
      %s43 = sshll.u32 [#allocation2], 4
      %s44 = int_to_ptr.vmem [resolvable:$true] %s43
      %46 = dma.hbm_to_vmem [thread:$0]  %s42, 64, %s44, [#allocation3]
    $region9: #{tpu_custom_call.1} parent=1 // pred_fallthru
      _
    // Predicated region
    $region10: #{tpu_custom_call.1} parent=1 // pred_check
      _
    $region11: #{tpu_custom_call.1} parent=1 // pred_check_branch
      %48 = sbr.rel (0) target = $region13
    $region12: #{tpu_custom_call.1} parent=1 // pred_region
      %50 = vsyncadd [#allocation6], 0
      %s51 = sshll.u32 %s2, 4
      %s52 = int_to_ptr.hbm [resolvable:$true] %s51
      %s53 = sshll.u32 [#allocation5], 4
      %s54 = int_to_ptr.vmem [resolvable:$true] %s53
      %59 = dma.hbm_to_vmem [thread:$0]  %s52, 256, %s54, [#allocation6], 128, 128, 8
    $region13: #{tpu_custom_call.1} parent=1 // pred_fallthru
      _
    // Predicated region
    $region14: #{tpu_custom_call.1} parent=1 // pred_check
      _
    $region15: #{tpu_custom_call.1} parent=1 // pred_check_branch
      %61 = sbr.rel (0) target = $region17
    $region16: #{tpu_custom_call.1} parent=1 // pred_region
      _
    $region17: #{tpu_custom_call.1} parent=1 // pred_fallthru
      _
    // Predicated region
    $region18: #{tpu_custom_call.1} parent=1 // pred_check
      _
    $region19: #{tpu_custom_call.1} parent=1 // pred_check_branch
      %63 = sbr.rel (0) target = $region21
    $region20: #{tpu_custom_call.1} parent=1 // pred_region
      _
    $region21: #{tpu_custom_call.1} parent=1 // pred_fallthru
      _
    // Predicated region
    $region22: #{tpu_custom_call.1} parent=1 // pred_check
      _
    $region23: #{tpu_custom_call.1} parent=1 // pred_check_branch
      %65 = sbr.rel (0) target = $region25
    $region24: #{tpu_custom_call.1} parent=1 // pred_region
      _
    $region25: #{tpu_custom_call.1} parent=1 // pred_fallthru
      _
    // Predicated region
    $region26: #{tpu_custom_call.1} parent=1 // pred_check
      _
    $region27: #{tpu_custom_call.1} parent=1 // pred_check_branch
      %67 = sbr.rel (0) target = $region29
    $region28: #{tpu_custom_call.1} parent=1 // pred_region
      _
    $region29: #{tpu_custom_call.1} parent=1 // pred_fallthru
      _
    // Predicated region
    $region30: #{tpu_custom_call.1} parent=1 // pred_check
      _
    $region31: #{tpu_custom_call.1} parent=1 // pred_check_branch
      %69 = sbr.rel (0) target = $region33
    $region32: #{tpu_custom_call.1} parent=1 // pred_region
      %71 = vsyncadd [#allocation6], 0
      %s72 = sshll.u32 %s7, 4
      %s73 = int_to_ptr.hbm [resolvable:$true] %s72
      %s74 = sshll.u32 [#allocation7], 4
      %s75 = int_to_ptr.vmem [resolvable:$true] %s74
      %80 = dma.hbm_to_vmem [thread:$0]  %s73, 32, %s75, [#allocation6], 16, 16, 1
    $region33: #{tpu_custom_call.1} parent=1 // pred_fallthru
      _
    // Predicated region
    $region34: #{tpu_custom_call.1} parent=1 // pred_check
      _
    $region35: #{tpu_custom_call.1} parent=1 // pred_check_branch
      %82 = sbr.rel (0) target = $region37
    $region36: #{tpu_custom_call.1} parent=1 // pred_region
      %84 = vsyncadd [#allocation9], 0
      %s85 = sshll.u32 %s8, 4
      %s86 = int_to_ptr.hbm [resolvable:$true] %s85
      %s87 = sshll.u32 [#allocation8], 4
      %s88 = int_to_ptr.vmem [resolvable:$true] %s87
      %93 = dma.hbm_to_vmem [thread:$0]  %s86, 32, %s88, [#allocation9], 16, 16, 1
    $region37: #{tpu_custom_call.1} parent=1 // pred_fallthru
      _
    // Predicated region
    $region38: #{tpu_custom_call.1} parent=1 // pred_check
      _
    $region39: #{tpu_custom_call.1} parent=1 // pred_check_branch
      %95 = sbr.rel (0) target = $region41
    $region40: #{tpu_custom_call.1} parent=1 // pred_region
      %97 = vsyncadd [#allocation9], 0
      %s98 = sshll.u32 %s9, 4
      %s99 = int_to_ptr.hbm [resolvable:$true] %s98
      %s100 = sshll.u32 [#allocation10], 4
      %s101 = int_to_ptr.vmem [resolvable:$true] %s100
      %106 = dma.hbm_to_vmem [thread:$0]  %s99, 1024, %s101, [#allocation9], 128, 128, 8
    $region41: #{tpu_custom_call.1} parent=1 // pred_fallthru
      _
    // Predicated region
    $region42: #{tpu_custom_call.1} parent=1 // pred_check
      _
    $region43: #{tpu_custom_call.1} parent=1 // pred_check_branch
      %108 = sbr.rel (0) target = $region45
    $region44: #{tpu_custom_call.1} parent=1 // pred_region
      %110 = vsyncadd [#allocation12], 0
      %s111 = sshll.u32 %s10, 4
      %s112 = int_to_ptr.hbm [resolvable:$true] %s111
      %s113 = sshll.u32 [#allocation11], 4
      %s114 = int_to_ptr.vmem [resolvable:$true] %s113
      %119 = dma.hbm_to_vmem [thread:$0]  %s112, 32, %s114, [#allocation12], 16, 16, 1
    $region45: #{tpu_custom_call.1} parent=1 // pred_fallthru
      _
    // Predicated region
    $region46: #{tpu_custom_call.1} parent=1 // pred_check
      _
    $region47: #{tpu_custom_call.1} parent=1 // pred_check_branch
      %121 = sbr.rel (0) target = $region49
    $region48: #{tpu_custom_call.1} parent=1 // pred_region
      %123 = vsyncadd [#allocation12], 0
      %s124 = sshll.u32 %s11, 4
      %s125 = int_to_ptr.hbm [resolvable:$true] %s124
      %s126 = sshll.u32 [#allocation13], 4
      %s127 = int_to_ptr.vmem [resolvable:$true] %s126
      %132 = dma.hbm_to_vmem [thread:$0]  %s125, 32, %s127, [#allocation12], 16, 16, 1
    $region49: #{tpu_custom_call.1} parent=1 // pred_fallthru
      _
    // Predicated region
    $region50: #{tpu_custom_call.1} parent=1 // pred_check
      _
    $region51: #{tpu_custom_call.1} parent=1 // pred_check_branch
      %134 = sbr.rel (0) target = $region53
    $region52: #{tpu_custom_call.1} parent=1 // pred_region
      %136 = vsyncadd [#allocation15], 0
      %s137 = sshll.u32 %s12, 4
      %s138 = int_to_ptr.hbm [resolvable:$true] %s137
      %s139 = sshll.u32 [#allocation14], 4
      %s140 = int_to_ptr.vmem [resolvable:$true] %s139
      %145 = dma.hbm_to_vmem [thread:$0]  %s138, 32, %s140, [#allocation15], 16, 16, 1
    $region53: #{tpu_custom_call.1} parent=1 // pred_fallthru
      _
    // Predicated region
    $region54: #{tpu_custom_call.1} parent=1 // pred_check
      _
    $region55: #{tpu_custom_call.1} parent=1 // pred_check_branch
      %147 = sbr.rel (0) target = $region57
    $region56: #{tpu_custom_call.1} parent=1 // pred_region
      %149 = vsyncadd [#allocation15], 0
      %s150 = sshll.u32 %s13, 4
      %s151 = int_to_ptr.hbm [resolvable:$true] %s150
      %s152 = sshll.u32 [#allocation16], 4
      %s153 = int_to_ptr.vmem [resolvable:$true] %s152
      %158 = dma.hbm_to_vmem [thread:$0]  %s151, 1024, %s153, [#allocation15], 128, 128, 8
    $region57: #{tpu_custom_call.1} parent=1 // pred_fallthru
      _
    // Predicated region
    $region58: #{tpu_custom_call.1} parent=1 // pred_check
      _
    $region59: #{tpu_custom_call.1} parent=1 // pred_check_branch
      %160 = sbr.rel (0) target = $region61
    $region60: #{tpu_custom_call.1} parent=1 // pred_region
      %162 = vsyncadd [#allocation18], 0
      %s163 = sshll.u32 %s14, 4
      %s164 = int_to_ptr.hbm [resolvable:$true] %s163
      %s165 = sshll.u32 [#allocation17], 4
      %s166 = int_to_ptr.vmem [resolvable:$true] %s165
      %171 = dma.hbm_to_vmem [thread:$0]  %s164, 32, %s166, [#allocation18], 16, 16, 1
    $region61: #{tpu_custom_call.1} parent=1 // pred_fallthru
      _
    // Predicated region
    $region62: #{tpu_custom_call.1} parent=1 // pred_check
      _
    $region63: #{tpu_custom_call.1} parent=1 // pred_check_branch
      %173 = sbr.rel (0) target = $region65
    $region64: #{tpu_custom_call.1} parent=1 // pred_region
      _
    $region65: #{tpu_custom_call.1} parent=1 // pred_fallthru
      _
    // Predicated region
    $region66: #{tpu_custom_call.1} parent=1 // pred_check
      _
    $region67: #{tpu_custom_call.1} parent=1 // pred_check_branch
      %175 = sbr.rel (0) target = $region69
    $region68: #{tpu_custom_call.1} parent=1 // pred_region
      %177 = vsyncadd [#allocation18], 0
      %s178 = sshll.u32 %s16, 4
      %s179 = int_to_ptr.hbm [resolvable:$true] %s178
      %s180 = sshll.u32 [#allocation19], 4
      %s181 = int_to_ptr.vmem [resolvable:$true] %s180
      %186 = dma.hbm_to_vmem [thread:$0]  %s179, 32, %s181, [#allocation18], 16, 16, 1
    $region69: #{tpu_custom_call.1} parent=1 // pred_fallthru
      _
    // Predicated region
    $region70: #{tpu_custom_call.1} parent=1 // pred_check
      _
    $region71: #{tpu_custom_call.1} parent=1 // pred_check_branch
      %188 = sbr.rel (0) target = $region73
    $region72: #{tpu_custom_call.1} parent=1 // pred_region
      %190 = vsyncadd [#allocation21], 0
      %s191 = sshll.u32 %s17, 4
      %s192 = int_to_ptr.hbm [resolvable:$true] %s191
      %s193 = sshll.u32 [#allocation20], 4
      %s194 = int_to_ptr.vmem [resolvable:$true] %s193
      %199 = dma.hbm_to_vmem [thread:$0]  %s192, 32, %s194, [#allocation21], 16, 16, 1
    $region73: #{tpu_custom_call.1} parent=1 // pred_fallthru
      _
    // Predicated region
    $region74: #{tpu_custom_call.1} parent=1 // pred_check
      _
    $region75: #{tpu_custom_call.1} parent=1 // pred_check_branch
      %201 = sbr.rel (0) target = $region77
    $region76: #{tpu_custom_call.1} parent=1 // pred_region
      _
    $region77: #{tpu_custom_call.1} parent=1 // pred_fallthru
      _
    // Predicated region
    $region78: #{tpu_custom_call.1} parent=1 // pred_check
      _
    $region79: #{tpu_custom_call.1} parent=1 // pred_check_branch
      %203 = sbr.rel (0) target = $region81
    $region80: #{tpu_custom_call.1} parent=1 // pred_region
      _
    $region81: #{tpu_custom_call.1} parent=1 // pred_fallthru
      _
    // Predicated region
    $region82: #{tpu_custom_call.1} parent=1 // pred_check
      _
    $region83: #{tpu_custom_call.1} parent=1 // pred_check_branch
      %205 = sbr.rel (0) target = $region85
    $region84: #{tpu_custom_call.1} parent=1 // pred_region
      _
    $region85: #{tpu_custom_call.1} parent=1 // pred_fallthru
      _
    // Predicated region
    $region86: #{tpu_custom_call.1} parent=1 // pred_check
      _
    $region87: #{tpu_custom_call.1} parent=1 // pred_check_branch
      %207 = sbr.rel (0) target = $region89
    $region88: #{tpu_custom_call.1} parent=1 // pred_region
      %209 = dma.done [#allocation3], 64
    $region89: #{tpu_custom_call.1} parent=1 // pred_fallthru
      _
    // Predicated region
    $region90: #{tpu_custom_call.1} parent=1 // pred_check
      _
    $region91: #{tpu_custom_call.1} parent=1 // pred_check_branch
      %211 = sbr.rel (0) target = $region93
    $region92: #{tpu_custom_call.1} parent=1 // pred_region
      %213 = dma.done [#allocation6], 256
    $region93: #{tpu_custom_call.1} parent=1 // pred_fallthru
      _
    // Predicated region
    $region94: #{tpu_custom_call.1} parent=1 // pred_check
      _
    $region95: #{tpu_custom_call.1} parent=1 // pred_check_branch
      %215 = sbr.rel (0) target = $region97
    $region96: #{tpu_custom_call.1} parent=1 // pred_region
      %217 = dma.done [#allocation6], 32
    $region97: #{tpu_custom_call.1} parent=1 // pred_fallthru
      _
    // Predicated region
    $region98: #{tpu_custom_call.1} parent=1 // pred_check
      _
    $region99: #{tpu_custom_call.1} parent=1 // pred_check_branch
      %219 = sbr.rel (0) target = $region101
    $region100: #{tpu_custom_call.1} parent=1 // pred_region
      %221 = dma.done [#allocation9], 32
    $region101: #{tpu_custom_call.1} parent=1 // pred_fallthru
      _
    // Predicated region
    $region102: #{tpu_custom_call.1} parent=1 // pred_check
      _
    $region103: #{tpu_custom_call.1} parent=1 // pred_check_branch
      %223 = sbr.rel (0) target = $region105
    $region104: #{tpu_custom_call.1} parent=1 // pred_region
      %225 = dma.done [#allocation9], 1024
    $region105: #{tpu_custom_call.1} parent=1 // pred_fallthru
      _
    // Predicated region
    $region106: #{tpu_custom_call.1} parent=1 // pred_check
      _
    $region107: #{tpu_custom_call.1} parent=1 // pred_check_branch
      %227 = sbr.rel (0) target = $region109
    $region108: #{tpu_custom_call.1} parent=1 // pred_region
      %229 = dma.done [#allocation12], 32
    $region109: #{tpu_custom_call.1} parent=1 // pred_fallthru
      _
    // Predicated region
    $region110: #{tpu_custom_call.1} parent=1 // pred_check
      _
    $region111: #{tpu_custom_call.1} parent=1 // pred_check_branch
      %231 = sbr.rel (0) target = $region113
    $region112: #{tpu_custom_call.1} parent=1 // pred_region
      %233 = dma.done [#allocation12], 32
    $region113: #{tpu_custom_call.1} parent=1 // pred_fallthru
      _
    // Predicated region
    $region114: #{tpu_custom_call.1} parent=1 // pred_check
      _
    $region115: #{tpu_custom_call.1} parent=1 // pred_check_branch
      %235 = sbr.rel (0) target = $region117
    $region116: #{tpu_custom_call.1} parent=1 // pred_region
      %237 = dma.done [#allocation15], 32
    $region117: #{tpu_custom_call.1} parent=1 // pred_fallthru
      _
    // Predicated region
    $region118: #{tpu_custom_call.1} parent=1 // pred_check
      _
    $region119: #{tpu_custom_call.1} parent=1 // pred_check_branch
      %239 = sbr.rel (0) target = $region121
    $region120: #{tpu_custom_call.1} parent=1 // pred_region
      %241 = dma.done [#allocation15], 1024
    $region121: #{tpu_custom_call.1} parent=1 // pred_fallthru
      _
    // Predicated region
    $region122: #{tpu_custom_call.1} parent=1 // pred_check
      _
    $region123: #{tpu_custom_call.1} parent=1 // pred_check_branch
      %243 = sbr.rel (0) target = $region125
    $region124: #{tpu_custom_call.1} parent=1 // pred_region
      %245 = dma.done [#allocation18], 32
    $region125: #{tpu_custom_call.1} parent=1 // pred_fallthru
      _
    // Predicated region
    $region126: #{tpu_custom_call.1} parent=1 // pred_check
      _
    $region127: #{tpu_custom_call.1} parent=1 // pred_check_branch
      %247 = sbr.rel (0) target = $region129
    $region128: #{tpu_custom_call.1} parent=1 // pred_region
      %249 = dma.done [#allocation18], 32
    $region129: #{tpu_custom_call.1} parent=1 // pred_fallthru
      _
    // Predicated region
    $region130: #{tpu_custom_call.1} parent=1 // pred_check
      _
    $region131: #{tpu_custom_call.1} parent=1 // pred_check_branch
      %251 = sbr.rel (0) target = $region133
    $region132: #{tpu_custom_call.1} parent=1 // pred_region
      %253 = dma.done [#allocation21], 32
    $region133: #{tpu_custom_call.1} parent=1 // pred_fallthru
      _
    %v254 = vld [vmem:[%s0] sm:$0xff]
    %v255 = vld [vmem:[%s0 + $0x8] sm:$0xff]
    %v256 = vld [vmem:[#allocation2] sm:$0xf]
    %v257 = vld [vmem:[#allocation5] sm:$0xff]
    %v258 = vld [vmem:[#allocation5 + $0x8] sm:$0xff]
    %vm259 = vcmask 31744
    %v261 = vsel %vm259, %v254, 0
    %v264 = vsel %vm259, %v255, 0
    %vm266 = vcmask 1043456
    %v268 = vsel %vm266, %v256, 0
    %270 = vmatpush.msra.mxu0 0.0
    %271 = vmatpush.msra.mxu0 0.0
    %272 = vmatpush.msra.mxu0 0.0
    %273 = vmatpush.msra.mxu0 0.0
    %274 = vmatpush.msra.mxu0 0.0
    %275 = vmatpush.msra.mxu0 0.0
    %276 = vmatpush.msra.mxu0 0.0
    %277 = vmatpush.msra.mxu0 0.0
    %278 = vmatpush.msra.mxu0 0.0
    %279 = vmatpush.msra.mxu0 0.0
    %280 = vmatpush.msra.mxu0 0.0
    %281 = vmatpush.msra.mxu0 0.0
    %282 = vmatpush.msra.mxu0 0.0
    %283 = vmatpush.msra.mxu0 0.0
    %284 = vmatpush.msra.mxu0 0.0
    %285 = vmatpush.msra.mxu0 %v268
    %286 = vmatmul.f32.gmra.mxu0 %v261
    %v287 = vpop.f32.mrf.mxu0
    %v288 = vadd.f32 %v257, %v287
    %289 = vmatmul.f32.gmra.mxu0 %v264
    %v290 = vpop.f32.mrf.mxu0
    %v291 = vadd.f32 %v258, %v290
    %292 = vdwg.mxu0
    %v293 = vld [vmem:[%s3] sm:$0xff]
    %v294 = vld [vmem:[%s3 + $0x8] sm:$0xff]
    %v295 = vld [vmem:[%s3 + $0x10] sm:$0xff]
    %v296 = vld [vmem:[%s3 + $0x18] sm:$0xff]
    %v297 = vld [vmem:[%s4] sm:$0xff]
    %v298 = vld [vmem:[%s4 + $0x8] sm:$0xff]
    %v299 = vld [vmem:[%s4 + $0x10] sm:$0xff]
    %v300 = vld [vmem:[%s4 + $0x18] sm:$0xff]
    %v301 = vld [vmem:[%s5] sm:$0xff]
    %v302 = vld [vmem:[%s5 + $0x8] sm:$0xff]
    %v303 = vld [vmem:[%s5 + $0x10] sm:$0xff]
    %v304 = vld [vmem:[%s5 + $0x18] sm:$0xff]
    %v305 = vld [vmem:[#allocation10] sm:$0xff]
    %v306 = vld [vmem:[#allocation10 + $0x8] sm:$0xff]
    %v307 = vld [vmem:[#allocation10 + $0x10] sm:$0xff]
    %v308 = vld [vmem:[#allocation10 + $0x18] sm:$0xff]
    %v309 = vld [vmem:[%s6] sm:$0x1]
    %v311 = vperm.slane %v309, 0
    %vm313 = vcmask 261120
    %v315 = vsel %vm313, %v288, 0
    %v318 = vsel %vm313, %v291, 0
    %320 = vmatpush.msra.mxu0 0.0
    %321 = vmatpush.msra.mxu0 0.0
    %322 = vmatpush.msra.mxu0 0.0
    %323 = vmatpush.msra.mxu0 0.0
    %324 = vmatpush.msra.mxu0 0.0
    %325 = vmatpush.msra.mxu0 0.0
    %326 = vmatpush.msra.mxu0 0.0
    %327 = vmatpush.msra.mxu0 0.0
    %328 = vmatpush.msra.mxu0 0.0
    %329 = vmatpush.msra.mxu0 0.0
    %330 = vmatpush.msra.mxu0 0.0
    %331 = vmatpush.msra.mxu0 0.0
    %332 = vmatpush.msra.mxu0 %v296
    %333 = vmatpush.msra.mxu0 %v295
    %334 = vmatpush.msra.mxu0 %v294
    %335 = vmatpush.msra.mxu0 %v293
    %336 = vmatmul.f32.gmra.mxu0 %v315
    %v337 = vpop.f32.mrf.mxu0
    %v338 = vadd.f32 %v311, %v337
    %339 = vmatmul.f32.gmra.mxu0 %v318
    %v340 = vpop.f32.mrf.mxu0
    %v341 = vadd.f32 %v311, %v340
    %342 = vdwg.mxu0
    %v343 = vld [vmem:[#allocation7] sm:$0x1]
    %v345 = vperm.slane %v343, 0
    %347 = vmatpush.msra.mxu0 0.0
    %348 = vmatpush.msra.mxu0 0.0
    %349 = vmatpush.msra.mxu0 0.0
    %350 = vmatpush.msra.mxu0 0.0
    %351 = vmatpush.msra.mxu0 0.0
    %352 = vmatpush.msra.mxu0 0.0
    %353 = vmatpush.msra.mxu0 0.0
    %354 = vmatpush.msra.mxu0 0.0
    %355 = vmatpush.msra.mxu0 0.0
    %356 = vmatpush.msra.mxu0 0.0
    %357 = vmatpush.msra.mxu0 0.0
    %358 = vmatpush.msra.mxu0 0.0
    %359 = vmatpush.msra.mxu0 %v300
    %360 = vmatpush.msra.mxu0 %v299
    %361 = vmatpush.msra.mxu0 %v298
    %362 = vmatpush.msra.mxu0 %v297
    %363 = vmatmul.f32.gmra.mxu0 %v315
    %v364 = vpop.f32.mrf.mxu0
    %v365 = vadd.f32 %v345, %v364
    %366 = vmatmul.f32.gmra.mxu0 %v318
    %v367 = vpop.f32.mrf.mxu0
    %v368 = vadd.f32 %v345, %v367
    %369 = vdwg.mxu0
    %v370 = vld [vmem:[#allocation8] sm:$0x1]
    %v372 = vperm.slane %v370, 0
    %374 = vmatpush.msra.mxu0 0.0
    %375 = vmatpush.msra.mxu0 0.0
    %376 = vmatpush.msra.mxu0 0.0
    %377 = vmatpush.msra.mxu0 0.0
    %378 = vmatpush.msra.mxu0 0.0
    %379 = vmatpush.msra.mxu0 0.0
    %380 = vmatpush.msra.mxu0 0.0
    %381 = vmatpush.msra.mxu0 0.0
    %382 = vmatpush.msra.mxu0 0.0
    %383 = vmatpush.msra.mxu0 0.0
    %384 = vmatpush.msra.mxu0 0.0
    %385 = vmatpush.msra.mxu0 0.0
    %386 = vmatpush.msra.mxu0 %v304
    %387 = vmatpush.msra.mxu0 %v303
    %388 = vmatpush.msra.mxu0 %v302
    %389 = vmatpush.msra.mxu0 %v301
    %390 = vmatmul.f32.gmra.mxu0 %v315
    %v391 = vpop.f32.mrf.mxu0
    %v392 = vadd.f32 %v372, %v391
    %393 = vmatmul.f32.gmra.mxu0 %v318
    %v394 = vpop.f32.mrf.mxu0
    %v395 = vadd.f32 %v372, %v394
    %396 = vdwg.mxu0
    %vm397 = vcmask 64512
    %v399 = vsel %vm397, %v338, 0
    %v402 = vsel %vm397, %v365, 0
    %404 = vmatpush.xpose.msra.mxu0 0.0
    %405 = vmatpush.xpose.msra.mxu0 0.0
    %406 = vmatpush.xpose.msra.mxu0 0.0
    %407 = vmatpush.xpose.msra.mxu0 0.0
    %408 = vmatpush.xpose.msra.mxu0 0.0
    %409 = vmatpush.xpose.msra.mxu0 0.0
    %410 = vmatpush.xpose.msra.mxu0 0.0
    %411 = vmatpush.xpose.msra.mxu0 0.0
    %412 = vmatpush.xpose.msra.mxu0 0.0
    %413 = vmatpush.xpose.msra.mxu0 0.0
    %414 = vmatpush.xpose.msra.mxu0 0.0
    %415 = vmatpush.xpose.msra.mxu0 0.0
    %416 = vmatpush.xpose.msra.mxu0 0.0
    %417 = vmatpush.xpose.msra.mxu0 0.0
    %418 = vmatpush.xpose.msra.mxu0 0.0
    %419 = vmatpush.xpose.msra.mxu0 %v402
    %420 = vmatmul.f32.gmra.mxu0 %v399
    %v421 = vpop.f32.mrf.mxu0
    %v422 = vadd.f32 0.0, %v421
    %423 = vdwg.mxu0
    %v424 = vsel %vm397, %v422, -inf
    %425 = vmax.xlane.f32.xlu0 %v424
    %v426 = vpop.xlane.xlu0 %425
    %v427 = vsub.f32 %v422, %v426
    %v428 = vmul.f32 %v427, 1.442695
    %v429 = vpow.pop %v428
    %v430 = vsel %vm397, %v429, 0.0
    %431 = vadd.xlane.f32.xlu0 %v430
    %v432 = vpop.xlane.xlu0 %431
    %v433 = vrcp.pop %v432
    %v434 = vmul.f32 %v429, %v433
    %v436 = vsel %vm397, %v434, 0
    %438 = vmatpush.msra.mxu0 0.0
    %439 = vmatpush.msra.mxu0 0.0
    %440 = vmatpush.msra.mxu0 0.0
    %441 = vmatpush.msra.mxu0 0.0
    %442 = vmatpush.msra.mxu0 0.0
    %443 = vmatpush.msra.mxu0 0.0
    %444 = vmatpush.msra.mxu0 0.0
    %445 = vmatpush.msra.mxu0 0.0
    %446 = vmatpush.msra.mxu0 0.0
    %447 = vmatpush.msra.mxu0 0.0
    %448 = vmatpush.msra.mxu0 0.0
    %449 = vmatpush.msra.mxu0 0.0
    %450 = vmatpush.msra.mxu0 0.0
    %451 = vmatpush.msra.mxu0 0.0
    %452 = vmatpush.msra.mxu0 0.0
    %453 = vmatpush.msra.mxu0 %v392
    %454 = vmatmul.f32.gmra.mxu0 %v436
    %v455 = vpop.f32.mrf.mxu0
    %v456 = vadd.f32 0.0, %v455
    %457 = vdwg.mxu0
    %458 = vrot.lane.b32.xlu0 %v338, 120
    %v459 = vpop.permute.xlu0 %458
    %460 = vrot.lane.b32.xlu0 %v365, 120
    %v461 = vpop.permute.xlu0 %460
    %v462 = vsel %vm397, %v459, 0
    %v464 = vsel %vm397, %v461, 0
    %466 = vmatpush.xpose.msra.mxu0 0.0
    %467 = vmatpush.xpose.msra.mxu0 0.0
    %468 = vmatpush.xpose.msra.mxu0 0.0
    %469 = vmatpush.xpose.msra.mxu0 0.0
    %470 = vmatpush.xpose.msra.mxu0 0.0
    %471 = vmatpush.xpose.msra.mxu0 0.0
    %472 = vmatpush.xpose.msra.mxu0 0.0
    %473 = vmatpush.xpose.msra.mxu0 0.0
    %474 = vmatpush.xpose.msra.mxu0 0.0
    %475 = vmatpush.xpose.msra.mxu0 0.0
    %476 = vmatpush.xpose.msra.mxu0 0.0
    %477 = vmatpush.xpose.msra.mxu0 0.0
    %478 = vmatpush.xpose.msra.mxu0 0.0
    %479 = vmatpush.xpose.msra.mxu0 0.0
    %480 = vmatpush.xpose.msra.mxu0 0.0
    %481 = vmatpush.xpose.msra.mxu0 %v464
    %482 = vmatmul.f32.gmra.mxu0 %v462
    %v483 = vpop.f32.mrf.mxu0
    %v484 = vadd.f32 0.0, %v483
    %485 = vdwg.mxu0
    %v486 = vsel %vm397, %v484, -inf
    %487 = vmax.xlane.f32.xlu0 %v486
    %v488 = vpop.xlane.xlu0 %487
    %v489 = vsub.f32 %v484, %v488
    %v490 = vmul.f32 %v489, 1.442695
    %v491 = vpow.pop %v490
    %v492 = vsel %vm397, %v491, 0.0
    %493 = vadd.xlane.f32.xlu0 %v492
    %v494 = vpop.xlane.xlu0 %493
    %v495 = vrcp.pop %v494
    %v496 = vmul.f32 %v491, %v495
    %498 = vrot.lane.b32.xlu0 %v392, 120
    %v499 = vpop.permute.xlu0 %498
    %v502 = vsel %vm397, %v496, 0
    %504 = vmatpush.msra.mxu0 0.0
    %505 = vmatpush.msra.mxu0 0.0
    %506 = vmatpush.msra.mxu0 0.0
    %507 = vmatpush.msra.mxu0 0.0
    %508 = vmatpush.msra.mxu0 0.0
    %509 = vmatpush.msra.mxu0 0.0
    %510 = vmatpush.msra.mxu0 0.0
    %511 = vmatpush.msra.mxu0 0.0
    %512 = vmatpush.msra.mxu0 0.0
    %513 = vmatpush.msra.mxu0 0.0
    %514 = vmatpush.msra.mxu0 0.0
    %515 = vmatpush.msra.mxu0 0.0
    %516 = vmatpush.msra.mxu0 0.0
    %517 = vmatpush.msra.mxu0 0.0
    %518 = vmatpush.msra.mxu0 0.0
    %519 = vmatpush.msra.mxu0 %v499
    %520 = vmatmul.f32.gmra.mxu0 %v502
    %v521 = vpop.f32.mrf.mxu0
    %v522 = vadd.f32 0.0, %v521
    %523 = vdwg.mxu0
    %v525 = vsel %vm397, %v522, 0
    %527 = vmatpush.msra.mxu0 0.0
    %528 = vmatpush.msra.mxu0 0.0
    %529 = vmatpush.msra.mxu0 0.0
    %530 = vmatpush.msra.mxu0 0.0
    %531 = vmatpush.msra.mxu0 0.0
    %532 = vmatpush.msra.mxu0 0.0
    %533 = vmatpush.msra.mxu0 0.0
    %534 = vmatpush.msra.mxu0 0.0
    %535 = vmatpush.msra.mxu0 0.0
    %536 = vmatpush.msra.mxu0 0.0
    %537 = vmatpush.msra.mxu0 0.0
    %538 = vmatpush.msra.mxu0 0.0
    %539 = vmatpush.msra.mxu0 0.0
    %540 = vmatpush.msra.mxu0 0.0
    %541 = vmatpush.msra.mxu0 0.0
    %542 = vmatpush.msra.mxu0 %v306
    %543 = vmatmul.f32.gmra.mxu0 %v525
    %v544 = vpop.f32.mrf.mxu0
    %v545 = vadd.f32 0.0, %v544
    %546 = vdwg.mxu0
    %v548 = vsel %vm397, %v456, 0
    %550 = vmatpush.msra.mxu0 0.0
    %551 = vmatpush.msra.mxu0 0.0
    %552 = vmatpush.msra.mxu0 0.0
    %553 = vmatpush.msra.mxu0 0.0
    %554 = vmatpush.msra.mxu0 0.0
    %555 = vmatpush.msra.mxu0 0.0
    %556 = vmatpush.msra.mxu0 0.0
    %557 = vmatpush.msra.mxu0 0.0
    %558 = vmatpush.msra.mxu0 0.0
    %559 = vmatpush.msra.mxu0 0.0
    %560 = vmatpush.msra.mxu0 0.0
    %561 = vmatpush.msra.mxu0 0.0
    %562 = vmatpush.msra.mxu0 0.0
    %563 = vmatpush.msra.mxu0 0.0
    %564 = vmatpush.msra.mxu0 0.0
    %565 = vmatpush.msra.mxu0 %v305
    %566 = vmatmul.f32.gmra.mxu0 %v548
    %v567 = vpop.f32.mrf.mxu0
    %v568 = vadd.f32 %v545, %v567
    %569 = vdwg.mxu0
    %570 = vrot.lane.b32.xlu0 %v338, 112
    %v571 = vpop.permute.xlu0 %570
    %572 = vrot.lane.b32.xlu0 %v365, 112
    %v573 = vpop.permute.xlu0 %572
    %v574 = vsel %vm397, %v571, 0
    %v576 = vsel %vm397, %v573, 0
    %578 = vmatpush.xpose.msra.mxu0 0.0
    %579 = vmatpush.xpose.msra.mxu0 0.0
    %580 = vmatpush.xpose.msra.mxu0 0.0
    %581 = vmatpush.xpose.msra.mxu0 0.0
    %582 = vmatpush.xpose.msra.mxu0 0.0
    %583 = vmatpush.xpose.msra.mxu0 0.0
    %584 = vmatpush.xpose.msra.mxu0 0.0
    %585 = vmatpush.xpose.msra.mxu0 0.0
    %586 = vmatpush.xpose.msra.mxu0 0.0
    %587 = vmatpush.xpose.msra.mxu0 0.0
    %588 = vmatpush.xpose.msra.mxu0 0.0
    %589 = vmatpush.xpose.msra.mxu0 0.0
    %590 = vmatpush.xpose.msra.mxu0 0.0
    %591 = vmatpush.xpose.msra.mxu0 0.0
    %592 = vmatpush.xpose.msra.mxu0 0.0
    %593 = vmatpush.xpose.msra.mxu0 %v576
    %594 = vmatmul.f32.gmra.mxu0 %v574
    %v595 = vpop.f32.mrf.mxu0
    %v596 = vadd.f32 0.0, %v595
    %597 = vdwg.mxu0
    %v598 = vsel %vm397, %v596, -inf
    %599 = vmax.xlane.f32.xlu0 %v598
    %v600 = vpop.xlane.xlu0 %599
    %v601 = vsub.f32 %v596, %v600
    %v602 = vmul.f32 %v601, 1.442695
    %v603 = vpow.pop %v602
    %v604 = vsel %vm397, %v603, 0.0
    %605 = vadd.xlane.f32.xlu0 %v604
    %v606 = vpop.xlane.xlu0 %605
    %v607 = vrcp.pop %v606
    %v608 = vmul.f32 %v603, %v607
    %609 = vrot.lane.b32.xlu0 %v392, 112
    %v610 = vpop.permute.xlu0 %609
    %v613 = vsel %vm397, %v608, 0
    %615 = vmatpush.msra.mxu0 0.0
    %616 = vmatpush.msra.mxu0 0.0
    %617 = vmatpush.msra.mxu0 0.0
    %618 = vmatpush.msra.mxu0 0.0
    %619 = vmatpush.msra.mxu0 0.0
    %620 = vmatpush.msra.mxu0 0.0
    %621 = vmatpush.msra.mxu0 0.0
    %622 = vmatpush.msra.mxu0 0.0
    %623 = vmatpush.msra.mxu0 0.0
    %624 = vmatpush.msra.mxu0 0.0
    %625 = vmatpush.msra.mxu0 0.0
    %626 = vmatpush.msra.mxu0 0.0
    %627 = vmatpush.msra.mxu0 0.0
    %628 = vmatpush.msra.mxu0 0.0
    %629 = vmatpush.msra.mxu0 0.0
    %630 = vmatpush.msra.mxu0 %v610
    %631 = vmatmul.f32.gmra.mxu0 %v613
    %v632 = vpop.f32.mrf.mxu0
    %v633 = vadd.f32 0.0, %v632
    %634 = vdwg.mxu0
    %v636 = vsel %vm397, %v633, 0
    %638 = vmatpush.msra.mxu0 0.0
    %639 = vmatpush.msra.mxu0 0.0
    %640 = vmatpush.msra.mxu0 0.0
    %641 = vmatpush.msra.mxu0 0.0
    %642 = vmatpush.msra.mxu0 0.0
    %643 = vmatpush.msra.mxu0 0.0
    %644 = vmatpush.msra.mxu0 0.0
    %645 = vmatpush.msra.mxu0 0.0
    %646 = vmatpush.msra.mxu0 0.0
    %647 = vmatpush.msra.mxu0 0.0
    %648 = vmatpush.msra.mxu0 0.0
    %649 = vmatpush.msra.mxu0 0.0
    %650 = vmatpush.msra.mxu0 0.0
    %651 = vmatpush.msra.mxu0 0.0
    %652 = vmatpush.msra.mxu0 0.0
    %653 = vmatpush.msra.mxu0 %v307
    %654 = vmatmul.f32.gmra.mxu0 %v636
    %v655 = vpop.f32.mrf.mxu0
    %v656 = vadd.f32 0.0, %v655
    %657 = vdwg.mxu0
    %v658 = vadd.f32 %v568, %v656
    %659 = vrot.lane.b32.xlu0 %v338, 104
    %v660 = vpop.permute.xlu0 %659
    %661 = vrot.lane.b32.xlu0 %v365, 104
    %v662 = vpop.permute.xlu0 %661
    %v663 = vsel %vm397, %v660, 0
    %v665 = vsel %vm397, %v662, 0
    %667 = vmatpush.xpose.msra.mxu0 0.0
    %668 = vmatpush.xpose.msra.mxu0 0.0
    %669 = vmatpush.xpose.msra.mxu0 0.0
    %670 = vmatpush.xpose.msra.mxu0 0.0
    %671 = vmatpush.xpose.msra.mxu0 0.0
    %672 = vmatpush.xpose.msra.mxu0 0.0
    %673 = vmatpush.xpose.msra.mxu0 0.0
    %674 = vmatpush.xpose.msra.mxu0 0.0
    %675 = vmatpush.xpose.msra.mxu0 0.0
    %676 = vmatpush.xpose.msra.mxu0 0.0
    %677 = vmatpush.xpose.msra.mxu0 0.0
    %678 = vmatpush.xpose.msra.mxu0 0.0
    %679 = vmatpush.xpose.msra.mxu0 0.0
    %680 = vmatpush.xpose.msra.mxu0 0.0
    %681 = vmatpush.xpose.msra.mxu0 0.0
    %682 = vmatpush.xpose.msra.mxu0 %v665
    %683 = vmatmul.f32.gmra.mxu0 %v663
    %v684 = vpop.f32.mrf.mxu0
    %v685 = vadd.f32 0.0, %v684
    %686 = vdwg.mxu0
    %v687 = vsel %vm397, %v685, -inf
    %688 = vmax.xlane.f32.xlu0 %v687
    %v689 = vpop.xlane.xlu0 %688
    %v690 = vsub.f32 %v685, %v689
    %v691 = vmul.f32 %v690, 1.442695
    %v692 = vpow.pop %v691
    %v693 = vsel %vm397, %v692, 0.0
    %694 = vadd.xlane.f32.xlu0 %v693
    %v695 = vpop.xlane.xlu0 %694
    %v696 = vrcp.pop %v695
    %v697 = vmul.f32 %v692, %v696
    %698 = vrot.lane.b32.xlu0 %v392, 104
    %v699 = vpop.permute.xlu0 %698
    %v702 = vsel %vm397, %v697, 0
    %704 = vmatpush.msra.mxu0 0.0
    %705 = vmatpush.msra.mxu0 0.0
    %706 = vmatpush.msra.mxu0 0.0
    %707 = vmatpush.msra.mxu0 0.0
    %708 = vmatpush.msra.mxu0 0.0
    %709 = vmatpush.msra.mxu0 0.0
    %710 = vmatpush.msra.mxu0 0.0
    %711 = vmatpush.msra.mxu0 0.0
    %712 = vmatpush.msra.mxu0 0.0
    %713 = vmatpush.msra.mxu0 0.0
    %714 = vmatpush.msra.mxu0 0.0
    %715 = vmatpush.msra.mxu0 0.0
    %716 = vmatpush.msra.mxu0 0.0
    %717 = vmatpush.msra.mxu0 0.0
    %718 = vmatpush.msra.mxu0 0.0
    %719 = vmatpush.msra.mxu0 %v699
    %720 = vmatmul.f32.gmra.mxu0 %v702
    %v721 = vpop.f32.mrf.mxu0
    %v722 = vadd.f32 0.0, %v721
    %723 = vdwg.mxu0
    %v725 = vsel %vm397, %v722, 0
    %727 = vmatpush.msra.mxu0 0.0
    %728 = vmatpush.msra.mxu0 0.0
    %729 = vmatpush.msra.mxu0 0.0
    %730 = vmatpush.msra.mxu0 0.0
    %731 = vmatpush.msra.mxu0 0.0
    %732 = vmatpush.msra.mxu0 0.0
    %733 = vmatpush.msra.mxu0 0.0
    %734 = vmatpush.msra.mxu0 0.0
    %735 = vmatpush.msra.mxu0 0.0
    %736 = vmatpush.msra.mxu0 0.0
    %737 = vmatpush.msra.mxu0 0.0
    %738 = vmatpush.msra.mxu0 0.0
    %739 = vmatpush.msra.mxu0 0.0
    %740 = vmatpush.msra.mxu0 0.0
    %741 = vmatpush.msra.mxu0 0.0
    %742 = vmatpush.msra.mxu0 %v308
    %743 = vmatmul.f32.gmra.mxu0 %v725
    %v744 = vpop.f32.mrf.mxu0
    %v745 = vadd.f32 0.0, %v744
    %746 = vdwg.mxu0
    %v747 = vadd.f32 %v658, %v745
    %v749 = vsel %vm397, %v341, 0
    %v752 = vsel %vm397, %v368, 0
    %754 = vmatpush.xpose.msra.mxu0 0.0
    %755 = vmatpush.xpose.msra.mxu0 0.0
    %756 = vmatpush.xpose.msra.mxu0 0.0
    %757 = vmatpush.xpose.msra.mxu0 0.0
    %758 = vmatpush.xpose.msra.mxu0 0.0
    %759 = vmatpush.xpose.msra.mxu0 0.0
    %760 = vmatpush.xpose.msra.mxu0 0.0
    %761 = vmatpush.xpose.msra.mxu0 0.0
    %762 = vmatpush.xpose.msra.mxu0 0.0
    %763 = vmatpush.xpose.msra.mxu0 0.0
    %764 = vmatpush.xpose.msra.mxu0 0.0
    %765 = vmatpush.xpose.msra.mxu0 0.0
    %766 = vmatpush.xpose.msra.mxu0 0.0
    %767 = vmatpush.xpose.msra.mxu0 0.0
    %768 = vmatpush.xpose.msra.mxu0 0.0
    %769 = vmatpush.xpose.msra.mxu0 %v752
    %770 = vmatmul.f32.gmra.mxu0 %v749
    %v771 = vpop.f32.mrf.mxu0
    %v772 = vadd.f32 0.0, %v771
    %773 = vdwg.mxu0
    %v774 = vsel %vm397, %v772, -inf
    %775 = vmax.xlane.f32.xlu0 %v774
    %v776 = vpop.xlane.xlu0 %775
    %v777 = vsub.f32 %v772, %v776
    %v778 = vmul.f32 %v777, 1.442695
    %v779 = vpow.pop %v778
    %v780 = vsel %vm397, %v779, 0.0
    %781 = vadd.xlane.f32.xlu0 %v780
    %v782 = vpop.xlane.xlu0 %781
    %v783 = vrcp.pop %v782
    %v784 = vmul.f32 %v779, %v783
    %v786 = vsel %vm397, %v784, 0
    %788 = vmatpush.msra.mxu0 0.0
    %789 = vmatpush.msra.mxu0 0.0
    %790 = vmatpush.msra.mxu0 0.0
    %791 = vmatpush.msra.mxu0 0.0
    %792 = vmatpush.msra.mxu0 0.0
    %793 = vmatpush.msra.mxu0 0.0
    %794 = vmatpush.msra.mxu0 0.0
    %795 = vmatpush.msra.mxu0 0.0
    %796 = vmatpush.msra.mxu0 0.0
    %797 = vmatpush.msra.mxu0 0.0
    %798 = vmatpush.msra.mxu0 0.0
    %799 = vmatpush.msra.mxu0 0.0
    %800 = vmatpush.msra.mxu0 0.0
    %801 = vmatpush.msra.mxu0 0.0
    %802 = vmatpush.msra.mxu0 0.0
    %803 = vmatpush.msra.mxu0 %v395
    %804 = vmatmul.f32.gmra.mxu0 %v786
    %v805 = vpop.f32.mrf.mxu0
    %v806 = vadd.f32 0.0, %v805
    %807 = vdwg.mxu0
    %808 = vrot.lane.b32.xlu0 %v341, 120
    %v809 = vpop.permute.xlu0 %808
    %810 = vrot.lane.b32.xlu0 %v368, 120
    %v811 = vpop.permute.xlu0 %810
    %v812 = vsel %vm397, %v809, 0
    %v814 = vsel %vm397, %v811, 0
    %816 = vmatpush.xpose.msra.mxu0 0.0
    %817 = vmatpush.xpose.msra.mxu0 0.0
    %818 = vmatpush.xpose.msra.mxu0 0.0
    %819 = vmatpush.xpose.msra.mxu0 0.0
    %820 = vmatpush.xpose.msra.mxu0 0.0
    %821 = vmatpush.xpose.msra.mxu0 0.0
    %822 = vmatpush.xpose.msra.mxu0 0.0
    %823 = vmatpush.xpose.msra.mxu0 0.0
    %824 = vmatpush.xpose.msra.mxu0 0.0
    %825 = vmatpush.xpose.msra.mxu0 0.0
    %826 = vmatpush.xpose.msra.mxu0 0.0
    %827 = vmatpush.xpose.msra.mxu0 0.0
    %828 = vmatpush.xpose.msra.mxu0 0.0
    %829 = vmatpush.xpose.msra.mxu0 0.0
    %830 = vmatpush.xpose.msra.mxu0 0.0
    %831 = vmatpush.xpose.msra.mxu0 %v814
    %832 = vmatmul.f32.gmra.mxu0 %v812
    %v833 = vpop.f32.mrf.mxu0
    %v834 = vadd.f32 0.0, %v833
    %835 = vdwg.mxu0
    %v836 = vsel %vm397, %v834, -inf
    %837 = vmax.xlane.f32.xlu0 %v836
    %v838 = vpop.xlane.xlu0 %837
    %v839 = vsub.f32 %v834, %v838
    %v840 = vmul.f32 %v839, 1.442695
    %v841 = vpow.pop %v840
    %v842 = vsel %vm397, %v841, 0.0
    %843 = vadd.xlane.f32.xlu0 %v842
    %v844 = vpop.xlane.xlu0 %843
    %v845 = vrcp.pop %v844
    %v846 = vmul.f32 %v841, %v845
    %848 = vrot.lane.b32.xlu0 %v395, 120
    %v849 = vpop.permute.xlu0 %848
    %v852 = vsel %vm397, %v846, 0
    %854 = vmatpush.msra.mxu0 0.0
    %855 = vmatpush.msra.mxu0 0.0
    %856 = vmatpush.msra.mxu0 0.0
    %857 = vmatpush.msra.mxu0 0.0
    %858 = vmatpush.msra.mxu0 0.0
    %859 = vmatpush.msra.mxu0 0.0
    %860 = vmatpush.msra.mxu0 0.0
    %861 = vmatpush.msra.mxu0 0.0
    %862 = vmatpush.msra.mxu0 0.0
    %863 = vmatpush.msra.mxu0 0.0
    %864 = vmatpush.msra.mxu0 0.0
    %865 = vmatpush.msra.mxu0 0.0
    %866 = vmatpush.msra.mxu0 0.0
    %867 = vmatpush.msra.mxu0 0.0
    %868 = vmatpush.msra.mxu0 0.0
    %869 = vmatpush.msra.mxu0 %v849
    %870 = vmatmul.f32.gmra.mxu0 %v852
    %v871 = vpop.f32.mrf.mxu0
    %v872 = vadd.f32 0.0, %v871
    %873 = vdwg.mxu0
    %v875 = vsel %vm397, %v872, 0
    %877 = vmatpush.msra.mxu0 0.0
    %878 = vmatpush.msra.mxu0 0.0
    %879 = vmatpush.msra.mxu0 0.0
    %880 = vmatpush.msra.mxu0 0.0
    %881 = vmatpush.msra.mxu0 0.0
    %882 = vmatpush.msra.mxu0 0.0
    %883 = vmatpush.msra.mxu0 0.0
    %884 = vmatpush.msra.mxu0 0.0
    %885 = vmatpush.msra.mxu0 0.0
    %886 = vmatpush.msra.mxu0 0.0
    %887 = vmatpush.msra.mxu0 0.0
    %888 = vmatpush.msra.mxu0 0.0
    %889 = vmatpush.msra.mxu0 0.0
    %890 = vmatpush.msra.mxu0 0.0
    %891 = vmatpush.msra.mxu0 0.0
    %892 = vmatpush.msra.mxu0 %v306
    %893 = vmatmul.f32.gmra.mxu0 %v875
    %v894 = vpop.f32.mrf.mxu0
    %v895 = vadd.f32 0.0, %v894
    %896 = vdwg.mxu0
    %v898 = vsel %vm397, %v806, 0
    %900 = vmatpush.msra.mxu0 0.0
    %901 = vmatpush.msra.mxu0 0.0
    %902 = vmatpush.msra.mxu0 0.0
    %903 = vmatpush.msra.mxu0 0.0
    %904 = vmatpush.msra.mxu0 0.0
    %905 = vmatpush.msra.mxu0 0.0
    %906 = vmatpush.msra.mxu0 0.0
    %907 = vmatpush.msra.mxu0 0.0
    %908 = vmatpush.msra.mxu0 0.0
    %909 = vmatpush.msra.mxu0 0.0
    %910 = vmatpush.msra.mxu0 0.0
    %911 = vmatpush.msra.mxu0 0.0
    %912 = vmatpush.msra.mxu0 0.0
    %913 = vmatpush.msra.mxu0 0.0
    %914 = vmatpush.msra.mxu0 0.0
    %915 = vmatpush.msra.mxu0 %v305
    %916 = vmatmul.f32.gmra.mxu0 %v898
    %v917 = vpop.f32.mrf.mxu0
    %v918 = vadd.f32 %v895, %v917
    %919 = vdwg.mxu0
    %920 = vrot.lane.b32.xlu0 %v341, 112
    %v921 = vpop.permute.xlu0 %920
    %922 = vrot.lane.b32.xlu0 %v368, 112
    %v923 = vpop.permute.xlu0 %922
    %v924 = vsel %vm397, %v921, 0
    %v926 = vsel %vm397, %v923, 0
    %928 = vmatpush.xpose.msra.mxu0 0.0
    %929 = vmatpush.xpose.msra.mxu0 0.0
    %930 = vmatpush.xpose.msra.mxu0 0.0
    %931 = vmatpush.xpose.msra.mxu0 0.0
    %932 = vmatpush.xpose.msra.mxu0 0.0
    %933 = vmatpush.xpose.msra.mxu0 0.0
    %934 = vmatpush.xpose.msra.mxu0 0.0
    %935 = vmatpush.xpose.msra.mxu0 0.0
    %936 = vmatpush.xpose.msra.mxu0 0.0
    %937 = vmatpush.xpose.msra.mxu0 0.0
    %938 = vmatpush.xpose.msra.mxu0 0.0
    %939 = vmatpush.xpose.msra.mxu0 0.0
    %940 = vmatpush.xpose.msra.mxu0 0.0
    %941 = vmatpush.xpose.msra.mxu0 0.0
    %942 = vmatpush.xpose.msra.mxu0 0.0
    %943 = vmatpush.xpose.msra.mxu0 %v926
    %944 = vmatmul.f32.gmra.mxu0 %v924
    %v945 = vpop.f32.mrf.mxu0
    %v946 = vadd.f32 0.0, %v945
    %947 = vdwg.mxu0
    %v948 = vsel %vm397, %v946, -inf
    %949 = vmax.xlane.f32.xlu0 %v948
    %v950 = vpop.xlane.xlu0 %949
    %v951 = vsub.f32 %v946, %v950
    %v952 = vmul.f32 %v951, 1.442695
    %v953 = vpow.pop %v952
    %v954 = vsel %vm397, %v953, 0.0
    %955 = vadd.xlane.f32.xlu0 %v954
    %v956 = vpop.xlane.xlu0 %955
    %v957 = vrcp.pop %v956
    %v958 = vmul.f32 %v953, %v957
    %959 = vrot.lane.b32.xlu0 %v395, 112
    %v960 = vpop.permute.xlu0 %959
    %v963 = vsel %vm397, %v958, 0
    %965 = vmatpush.msra.mxu0 0.0
    %966 = vmatpush.msra.mxu0 0.0
    %967 = vmatpush.msra.mxu0 0.0
    %968 = vmatpush.msra.mxu0 0.0
    %969 = vmatpush.msra.mxu0 0.0
    %970 = vmatpush.msra.mxu0 0.0
    %971 = vmatpush.msra.mxu0 0.0
    %972 = vmatpush.msra.mxu0 0.0
    %973 = vmatpush.msra.mxu0 0.0
    %974 = vmatpush.msra.mxu0 0.0
    %975 = vmatpush.msra.mxu0 0.0
    %976 = vmatpush.msra.mxu0 0.0
    %977 = vmatpush.msra.mxu0 0.0
    %978 = vmatpush.msra.mxu0 0.0
    %979 = vmatpush.msra.mxu0 0.0
    %980 = vmatpush.msra.mxu0 %v960
    %981 = vmatmul.f32.gmra.mxu0 %v963
    %v982 = vpop.f32.mrf.mxu0
    %v983 = vadd.f32 0.0, %v982
    %984 = vdwg.mxu0
    %v986 = vsel %vm397, %v983, 0
    %988 = vmatpush.msra.mxu0 0.0
    %989 = vmatpush.msra.mxu0 0.0
    %990 = vmatpush.msra.mxu0 0.0
    %991 = vmatpush.msra.mxu0 0.0
    %992 = vmatpush.msra.mxu0 0.0
    %993 = vmatpush.msra.mxu0 0.0
    %994 = vmatpush.msra.mxu0 0.0
    %995 = vmatpush.msra.mxu0 0.0
    %996 = vmatpush.msra.mxu0 0.0
    %997 = vmatpush.msra.mxu0 0.0
    %998 = vmatpush.msra.mxu0 0.0
    %999 = vmatpush.msra.mxu0 0.0
    %1000 = vmatpush.msra.mxu0 0.0
    %1001 = vmatpush.msra.mxu0 0.0
    %1002 = vmatpush.msra.mxu0 0.0
    %1003 = vmatpush.msra.mxu0 %v307
    %1004 = vmatmul.f32.gmra.mxu0 %v986
    %v1005 = vpop.f32.mrf.mxu0
    %v1006 = vadd.f32 0.0, %v1005
    %1007 = vdwg.mxu0
    %v1008 = vadd.f32 %v918, %v1006
    %1009 = vrot.lane.b32.xlu0 %v341, 104
    %v1010 = vpop.permute.xlu0 %1009
    %1011 = vrot.lane.b32.xlu0 %v368, 104
    %v1012 = vpop.permute.xlu0 %1011
    %v1013 = vsel %vm397, %v1010, 0
    %v1015 = vsel %vm397, %v1012, 0
    %1017 = vmatpush.xpose.msra.mxu0 0.0
    %1018 = vmatpush.xpose.msra.mxu0 0.0
    %1019 = vmatpush.xpose.msra.mxu0 0.0
    %1020 = vmatpush.xpose.msra.mxu0 0.0
    %1021 = vmatpush.xpose.msra.mxu0 0.0
    %1022 = vmatpush.xpose.msra.mxu0 0.0
    %1023 = vmatpush.xpose.msra.mxu0 0.0
    %1024 = vmatpush.xpose.msra.mxu0 0.0
    %1025 = vmatpush.xpose.msra.mxu0 0.0
    %1026 = vmatpush.xpose.msra.mxu0 0.0
    %1027 = vmatpush.xpose.msra.mxu0 0.0
    %1028 = vmatpush.xpose.msra.mxu0 0.0
    %1029 = vmatpush.xpose.msra.mxu0 0.0
    %1030 = vmatpush.xpose.msra.mxu0 0.0
    %1031 = vmatpush.xpose.msra.mxu0 0.0
    %1032 = vmatpush.xpose.msra.mxu0 %v1015
    %1033 = vmatmul.f32.gmra.mxu0 %v1013
    %v1034 = vpop.f32.mrf.mxu0
    %v1035 = vadd.f32 0.0, %v1034
    %1036 = vdwg.mxu0
    %v1037 = vsel %vm397, %v1035, -inf
    %1038 = vmax.xlane.f32.xlu0 %v1037
    %v1039 = vpop.xlane.xlu0 %1038
    %v1040 = vsub.f32 %v1035, %v1039
    %v1041 = vmul.f32 %v1040, 1.442695
    %v1042 = vpow.pop %v1041
    %v1043 = vsel %vm397, %v1042, 0.0
    %1044 = vadd.xlane.f32.xlu0 %v1043
    %v1045 = vpop.xlane.xlu0 %1044
    %v1046 = vrcp.pop %v1045
    %v1047 = vmul.f32 %v1042, %v1046
    %1048 = vrot.lane.b32.xlu0 %v395, 104
    %v1049 = vpop.permute.xlu0 %1048
    %v1052 = vsel %vm397, %v1047, 0
    %1054 = vmatpush.msra.mxu0 0.0
    %1055 = vmatpush.msra.mxu0 0.0
    %1056 = vmatpush.msra.mxu0 0.0
    %1057 = vmatpush.msra.mxu0 0.0
    %1058 = vmatpush.msra.mxu0 0.0
    %1059 = vmatpush.msra.mxu0 0.0
    %1060 = vmatpush.msra.mxu0 0.0
    %1061 = vmatpush.msra.mxu0 0.0
    %1062 = vmatpush.msra.mxu0 0.0
    %1063 = vmatpush.msra.mxu0 0.0
    %1064 = vmatpush.msra.mxu0 0.0
    %1065 = vmatpush.msra.mxu0 0.0
    %1066 = vmatpush.msra.mxu0 0.0
    %1067 = vmatpush.msra.mxu0 0.0
    %1068 = vmatpush.msra.mxu0 0.0
    %1069 = vmatpush.msra.mxu0 %v1049
    %1070 = vmatmul.f32.gmra.mxu0 %v1052
    %v1071 = vpop.f32.mrf.mxu0
    %v1072 = vadd.f32 0.0, %v1071
    %1073 = vdwg.mxu0
    %v1075 = vsel %vm397, %v1072, 0
    %1077 = vmatpush.msra.mxu0 0.0
    %1078 = vmatpush.msra.mxu0 0.0
    %1079 = vmatpush.msra.mxu0 0.0
    %1080 = vmatpush.msra.mxu0 0.0
    %1081 = vmatpush.msra.mxu0 0.0
    %1082 = vmatpush.msra.mxu0 0.0
    %1083 = vmatpush.msra.mxu0 0.0
    %1084 = vmatpush.msra.mxu0 0.0
    %1085 = vmatpush.msra.mxu0 0.0
    %1086 = vmatpush.msra.mxu0 0.0
    %1087 = vmatpush.msra.mxu0 0.0
    %1088 = vmatpush.msra.mxu0 0.0
    %1089 = vmatpush.msra.mxu0 0.0
    %1090 = vmatpush.msra.mxu0 0.0
    %1091 = vmatpush.msra.mxu0 0.0
    %1092 = vmatpush.msra.mxu0 %v308
    %1093 = vmatmul.f32.gmra.mxu0 %v1075
    %v1094 = vpop.f32.mrf.mxu0
    %v1095 = vadd.f32 0.0, %v1094
    %1096 = vdwg.mxu0
    %v1097 = vadd.f32 %v1008, %v1095
    %v1098 = vld [vmem:[#allocation11] sm:$0x1]
    %v1100 = vperm.slane %v1098, 0
    %v1102 = vadd.f32 %v747, %v1100
    %v1103 = vadd.f32 %v1097, %v1100
    %v1104 = vadd.f32 %v288, %v1102
    %v1105 = vadd.f32 %v291, %v1103
    %v1106 = vsel %vm313, %v1104, 0.0
    %1107 = vadd.xlane.f32.xlu0 %v1106
    %v1108 = vpop.xlane.xlu0 %1107
    %v1109 = vsel %vm313, %v1105, 0.0
    %1110 = vadd.xlane.f32.xlu0 %v1109
    %v1111 = vpop.xlane.xlu0 %1110
    %v1112 = vrcp.pop 32.0
    %v1113 = vmul.f32 32.0, %v1112
    %v1114 = vsub.f32 1.0, %v1113
    %v1115 = vmul.f32 %v1112, %v1114
    %v1116 = vadd.f32 %v1112, %v1115
    %vm1117 = vweird.f32 %v1112
    %v1118 = vsel %vm1117, %v1112, %v1116
    %v1119 = vmul.f32 %v1108, %v1118
    %v1120 = vmul.f32 %v1111, %v1118
    %v1121 = vsub.f32 %v1104, %v1119
    %v1122 = vsub.f32 %v1105, %v1120
    %v1123 = vmul.f32 %v1121, %v1121
    %v1124 = vmul.f32 %v1122, %v1122
    %v1125 = vsel %vm313, %v1123, 0.0
    %1126 = vadd.xlane.f32.xlu0 %v1125
    %v1127 = vpop.xlane.xlu0 %1126
    %v1128 = vsel %vm313, %v1124, 0.0
    %1129 = vadd.xlane.f32.xlu0 %v1128
    %v1130 = vpop.xlane.xlu0 %1129
    %v1131 = vmul.f32 %v1127, %v1118
    %v1132 = vmul.f32 %v1130, %v1118
    %v1133 = vadd.f32 %v1131, 1e-05
    %v1134 = vadd.f32 %v1132, 1e-05
    %v1135 = vrsqrt.pop %v1133
    %v1136 = vmul.f32 %v1135, %v1133
    %v1137 = vmul.f32 %v1136, %v1135
    %v1138 = vmul.f32 0.5, %v1137
    %v1139 = vsub.f32 1.5, %v1138
    %v1140 = vmul.f32 %v1135, %v1139
    %vm1141 = vweird.f32 %v1133
    %vm1142 = vweird.f32 %v1135
    %vm1143 = vmor %vm1141, %vm1142
    %v1144 = vsel %vm1143, %v1135, %v1140
    %v1145 = vrsqrt.pop %v1134
    %v1146 = vmul.f32 %v1145, %v1134
    %v1147 = vmul.f32 %v1146, %v1145
    %v1148 = vmul.f32 0.5, %v1147
    %v1149 = vsub.f32 1.5, %v1148
    %v1150 = vmul.f32 %v1145, %v1149
    %vm1151 = vweird.f32 %v1134
    %vm1152 = vweird.f32 %v1145
    %vm1153 = vmor %vm1151, %vm1152
    %v1154 = vsel %vm1153, %v1145, %v1150
    %v1155 = vmul.f32 %v1121, %v1144
    %v1156 = vmul.f32 %v1122, %v1154
    %v1157 = vld [vmem:[#allocation13] sm:$0x1]
    %v1159 = vperm.slane %v1157, 0
    %v1161 = vmul.f32 %v1155, %v1159
    %v1162 = vmul.f32 %v1156, %v1159
    %v1163 = vld [vmem:[#allocation14] sm:$0x1]
    %v1165 = vperm.slane %v1163, 0
    %v1167 = vadd.f32 %v1161, %v1165
    %v1168 = vadd.f32 %v1162, %v1165
    %v1169 = vld [vmem:[#allocation16] sm:$0xff]
    %v1170 = vld [vmem:[#allocation16 + $0x8] sm:$0xff]
    %v1171 = vld [vmem:[#allocation16 + $0x10] sm:$0xff]
    %v1172 = vld [vmem:[#allocation16 + $0x18] sm:$0xff]
    %v1173 = vld [vmem:[#allocation17] sm:$0x1]
    %v1175 = vperm.slane %v1173, 0
    %v1178 = vsel %vm313, %v1167, 0
    %v1181 = vsel %vm313, %v1168, 0
    %1183 = vmatpush.msra.mxu0 0.0
    %1184 = vmatpush.msra.mxu0 0.0
    %1185 = vmatpush.msra.mxu0 0.0
    %1186 = vmatpush.msra.mxu0 0.0
    %1187 = vmatpush.msra.mxu0 0.0
    %1188 = vmatpush.msra.mxu0 0.0
    %1189 = vmatpush.msra.mxu0 0.0
    %1190 = vmatpush.msra.mxu0 0.0
    %1191 = vmatpush.msra.mxu0 0.0
    %1192 = vmatpush.msra.mxu0 0.0
    %1193 = vmatpush.msra.mxu0 0.0
    %1194 = vmatpush.msra.mxu0 0.0
    %1195 = vmatpush.msra.mxu0 %v1172
    %1196 = vmatpush.msra.mxu0 %v1171
    %1197 = vmatpush.msra.mxu0 %v1170
    %1198 = vmatpush.msra.mxu0 %v1169
    %1199 = vmatmul.f32.gmra.mxu0 %v1178
    %v1200 = vpop.f32.mrf.mxu0
    %v1201 = vadd.f32 %v1175, %v1200
    %1202 = vmatmul.f32.gmra.mxu0 %v1181
    %v1203 = vpop.f32.mrf.mxu0
    %v1204 = vadd.f32 %v1175, %v1203
    %1205 = vdwg.mxu0
    %v1206 = vmax.f32 %v1201, 0.0
    %v1207 = vmax.f32 %v1204, 0.0
    %v1208 = vld [vmem:[%s15] sm:$0xff]
    %v1209 = vld [vmem:[%s15 + $0x8] sm:$0xff]
    %v1210 = vld [vmem:[%s15 + $0x10] sm:$0xff]
    %v1211 = vld [vmem:[%s15 + $0x18] sm:$0xff]
    %v1212 = vld [vmem:[%s15 + $0x20] sm:$0xff]
    %v1213 = vld [vmem:[%s15 + $0x28] sm:$0xff]
    %v1214 = vld [vmem:[%s15 + $0x30] sm:$0xff]
    %v1215 = vld [vmem:[%s15 + $0x38] sm:$0xff]
    %v1216 = vld [vmem:[#allocation19] sm:$0x1]
    %v1218 = vperm.slane %v1216, 0
    %vm1220 = vcmask 523264
    %v1222 = vsel %vm1220, %v1206, 0
    %v1225 = vsel %vm1220, %v1207, 0
    %1227 = vmatpush.msra.mxu0 0.0
    %1228 = vmatpush.msra.mxu0 0.0
    %1229 = vmatpush.msra.mxu0 0.0
    %1230 = vmatpush.msra.mxu0 0.0
    %1231 = vmatpush.msra.mxu0 0.0
    %1232 = vmatpush.msra.mxu0 0.0
    %1233 = vmatpush.msra.mxu0 0.0
    %1234 = vmatpush.msra.mxu0 0.0
    %1235 = vmatpush.msra.mxu0 %v1215
    %1236 = vmatpush.msra.mxu0 %v1214
    %1237 = vmatpush.msra.mxu0 %v1213
    %1238 = vmatpush.msra.mxu0 %v1212
    %1239 = vmatpush.msra.mxu0 %v1211
    %1240 = vmatpush.msra.mxu0 %v1210
    %1241 = vmatpush.msra.mxu0 %v1209
    %1242 = vmatpush.msra.mxu0 %v1208
    %1243 = vmatmul.f32.gmra.mxu0 %v1222
    %v1244 = vpop.f32.mrf.mxu0
    %v1245 = vadd.f32 %v1218, %v1244
    %1246 = vmatmul.f32.gmra.mxu0 %v1225
    %v1247 = vpop.f32.mrf.mxu0
    %v1248 = vadd.f32 %v1218, %v1247
    %1249 = vdwg.mxu0
    %v1250 = vadd.f32 %v1167, %v1245
    %v1251 = vadd.f32 %v1168, %v1248
    %v1252 = vsel %vm313, %v1250, 0.0
    %1253 = vadd.xlane.f32.xlu0 %v1252
    %v1254 = vpop.xlane.xlu0 %1253
    %v1255 = vsel %vm313, %v1251, 0.0
    %1256 = vadd.xlane.f32.xlu0 %v1255
    %v1257 = vpop.xlane.xlu0 %1256
    %v1258 = vmul.f32 %v1254, %v1118
    %v1259 = vmul.f32 %v1257, %v1118
    %v1260 = vsub.f32 %v1250, %v1258
    %v1261 = vsub.f32 %v1251, %v1259
    %v1262 = vmul.f32 %v1260, %v1260
    %v1263 = vmul.f32 %v1261, %v1261
    %v1264 = vsel %vm313, %v1262, 0.0
    %1265 = vadd.xlane.f32.xlu0 %v1264
    %v1266 = vpop.xlane.xlu0 %1265
    %v1267 = vsel %vm313, %v1263, 0.0
    %1268 = vadd.xlane.f32.xlu0 %v1267
    %v1269 = vpop.xlane.xlu0 %1268
    %v1270 = vmul.f32 %v1266, %v1118
    %v1271 = vmul.f32 %v1269, %v1118
    %v1272 = vadd.f32 %v1270, 1e-05
    %v1273 = vadd.f32 %v1271, 1e-05
    %v1274 = vrsqrt.pop %v1272
    %v1275 = vmul.f32 %v1274, %v1272
    %v1276 = vmul.f32 %v1275, %v1274
    %v1277 = vmul.f32 0.5, %v1276
    %v1278 = vsub.f32 1.5, %v1277
    %v1279 = vmul.f32 %v1274, %v1278
    %vm1280 = vweird.f32 %v1272
    %vm1281 = vweird.f32 %v1274
    %vm1282 = vmor %vm1280, %vm1281
    %v1283 = vsel %vm1282, %v1274, %v1279
    %v1284 = vrsqrt.pop %v1273
    %v1285 = vmul.f32 %v1284, %v1273
    %v1286 = vmul.f32 %v1285, %v1284
    %v1287 = vmul.f32 0.5, %v1286
    %v1288 = vsub.f32 1.5, %v1287
    %v1289 = vmul.f32 %v1284, %v1288
    %vm1290 = vweird.f32 %v1273
    %vm1291 = vweird.f32 %v1284
    %vm1292 = vmor %vm1290, %vm1291
    %v1293 = vsel %vm1292, %v1284, %v1289
    %v1294 = vmul.f32 %v1260, %v1283
    %v1295 = vmul.f32 %v1261, %v1293
    %v1296 = vld [vmem:[#allocation20] sm:$0x1]
    %v1298 = vperm.slane %v1296, 0
    %v1300 = vmul.f32 %v1294, %v1298
    %v1301 = vmul.f32 %v1295, %v1298
    %v1302 = vld [vmem:[%s18] sm:$0x1]
    %v1304 = vperm.slane %v1302, 0
    %v1306 = vadd.f32 %v1300, %v1304
    %v1307 = vadd.f32 %v1301, %v1304
    %s1308 = scalar_lea.vmem %s3, 32
    %v1309 = vld [vmem:[%s1308] sm:$0xff]
    %v1310 = vld [vmem:[%s1308 + $0x8] sm:$0xff]
    %v1311 = vld [vmem:[%s1308 + $0x10] sm:$0xff]
    %v1312 = vld [vmem:[%s1308 + $0x18] sm:$0xff]
    %s1313 = scalar_lea.vmem %s4, 32
    %v1314 = vld [vmem:[%s1313] sm:$0xff]
    %v1315 = vld [vmem:[%s1313 + $0x8] sm:$0xff]
    %v1316 = vld [vmem:[%s1313 + $0x10] sm:$0xff]
    %v1317 = vld [vmem:[%s1313 + $0x18] sm:$0xff]
    %s1318 = scalar_lea.vmem %s5, 32
    %v1319 = vld [vmem:[%s1318] sm:$0xff]
    %v1320 = vld [vmem:[%s1318 + $0x8] sm:$0xff]
    %v1321 = vld [vmem:[%s1318 + $0x10] sm:$0xff]
    %v1322 = vld [vmem:[%s1318 + $0x18] sm:$0xff]
    %s1323 = scalar_lea.vmem [#allocation10], 32
    %v1324 = vld [vmem:[%s1323] sm:$0xff]
    %v1325 = vld [vmem:[%s1323 + $0x8] sm:$0xff]
    %v1326 = vld [vmem:[%s1323 + $0x10] sm:$0xff]
    %v1327 = vld [vmem:[%s1323 + $0x18] sm:$0xff]
    %s1328 = scalar_lea.vmem %s6, 1
    %v1329 = vld [vmem:[%s1328] sm:$0x1]
    %v1331 = vperm.slane %v1329, 0
    %v1334 = vsel %vm313, %v1306, 0
    %v1337 = vsel %vm313, %v1307, 0
    %1339 = vmatpush.msra.mxu0 0.0
    %1340 = vmatpush.msra.mxu0 0.0
    %1341 = vmatpush.msra.mxu0 0.0
    %1342 = vmatpush.msra.mxu0 0.0
    %1343 = vmatpush.msra.mxu0 0.0
    %1344 = vmatpush.msra.mxu0 0.0
    %1345 = vmatpush.msra.mxu0 0.0
    %1346 = vmatpush.msra.mxu0 0.0
    %1347 = vmatpush.msra.mxu0 0.0
    %1348 = vmatpush.msra.mxu0 0.0
    %1349 = vmatpush.msra.mxu0 0.0
    %1350 = vmatpush.msra.mxu0 0.0
    %1351 = vmatpush.msra.mxu0 %v1312
    %1352 = vmatpush.msra.mxu0 %v1311
    %1353 = vmatpush.msra.mxu0 %v1310
    %1354 = vmatpush.msra.mxu0 %v1309
    %1355 = vmatmul.f32.gmra.mxu0 %v1334
    %v1356 = vpop.f32.mrf.mxu0
    %v1357 = vadd.f32 %v1331, %v1356
    %1358 = vmatmul.f32.gmra.mxu0 %v1337
    %v1359 = vpop.f32.mrf.mxu0
    %v1360 = vadd.f32 %v1331, %v1359
    %1361 = vdwg.mxu0
    %s1362 = scalar_lea.vmem [#allocation7], 1
    %v1363 = vld [vmem:[%s1362] sm:$0x1]
    %v1365 = vperm.slane %v1363, 0
    %1367 = vmatpush.msra.mxu0 0.0
    %1368 = vmatpush.msra.mxu0 0.0
    %1369 = vmatpush.msra.mxu0 0.0
    %1370 = vmatpush.msra.mxu0 0.0
    %1371 = vmatpush.msra.mxu0 0.0
    %1372 = vmatpush.msra.mxu0 0.0
    %1373 = vmatpush.msra.mxu0 0.0
    %1374 = vmatpush.msra.mxu0 0.0
    %1375 = vmatpush.msra.mxu0 0.0
    %1376 = vmatpush.msra.mxu0 0.0
    %1377 = vmatpush.msra.mxu0 0.0
    %1378 = vmatpush.msra.mxu0 0.0
    %1379 = vmatpush.msra.mxu0 %v1317
    %1380 = vmatpush.msra.mxu0 %v1316
    %1381 = vmatpush.msra.mxu0 %v1315
    %1382 = vmatpush.msra.mxu0 %v1314
    %1383 = vmatmul.f32.gmra.mxu0 %v1334
    %v1384 = vpop.f32.mrf.mxu0
    %v1385 = vadd.f32 %v1365, %v1384
    %1386 = vmatmul.f32.gmra.mxu0 %v1337
    %v1387 = vpop.f32.mrf.mxu0
    %v1388 = vadd.f32 %v1365, %v1387
    %1389 = vdwg.mxu0
    %s1390 = scalar_lea.vmem [#allocation8], 1
    %v1391 = vld [vmem:[%s1390] sm:$0x1]
    %v1393 = vperm.slane %v1391, 0
    %1395 = vmatpush.msra.mxu0 0.0
    %1396 = vmatpush.msra.mxu0 0.0
    %1397 = vmatpush.msra.mxu0 0.0
    %1398 = vmatpush.msra.mxu0 0.0
    %1399 = vmatpush.msra.mxu0 0.0
    %1400 = vmatpush.msra.mxu0 0.0
    %1401 = vmatpush.msra.mxu0 0.0
    %1402 = vmatpush.msra.mxu0 0.0
    %1403 = vmatpush.msra.mxu0 0.0
    %1404 = vmatpush.msra.mxu0 0.0
    %1405 = vmatpush.msra.mxu0 0.0
    %1406 = vmatpush.msra.mxu0 0.0
    %1407 = vmatpush.msra.mxu0 %v1322
    %1408 = vmatpush.msra.mxu0 %v1321
    %1409 = vmatpush.msra.mxu0 %v1320
    %1410 = vmatpush.msra.mxu0 %v1319
    %1411 = vmatmul.f32.gmra.mxu0 %v1334
    %v1412 = vpop.f32.mrf.mxu0
    %v1413 = vadd.f32 %v1393, %v1412
    %1414 = vmatmul.f32.gmra.mxu0 %v1337
    %v1415 = vpop.f32.mrf.mxu0
    %v1416 = vadd.f32 %v1393, %v1415
    %1417 = vdwg.mxu0
    %v1419 = vsel %vm397, %v1357, 0
    %v1422 = vsel %vm397, %v1385, 0
    %1424 = vmatpush.xpose.msra.mxu0 0.0
    %1425 = vmatpush.xpose.msra.mxu0 0.0
    %1426 = vmatpush.xpose.msra.mxu0 0.0
    %1427 = vmatpush.xpose.msra.mxu0 0.0
    %1428 = vmatpush.xpose.msra.mxu0 0.0
    %1429 = vmatpush.xpose.msra.mxu0 0.0
    %1430 = vmatpush.xpose.msra.mxu0 0.0
    %1431 = vmatpush.xpose.msra.mxu0 0.0
    %1432 = vmatpush.xpose.msra.mxu0 0.0
    %1433 = vmatpush.xpose.msra.mxu0 0.0
    %1434 = vmatpush.xpose.msra.mxu0 0.0
    %1435 = vmatpush.xpose.msra.mxu0 0.0
    %1436 = vmatpush.xpose.msra.mxu0 0.0
    %1437 = vmatpush.xpose.msra.mxu0 0.0
    %1438 = vmatpush.xpose.msra.mxu0 0.0
    %1439 = vmatpush.xpose.msra.mxu0 %v1422
    %1440 = vmatmul.f32.gmra.mxu0 %v1419
    %v1441 = vpop.f32.mrf.mxu0
    %v1442 = vadd.f32 0.0, %v1441
    %1443 = vdwg.mxu0
    %v1444 = vsel %vm397, %v1442, -inf
    %1445 = vmax.xlane.f32.xlu0 %v1444
    %v1446 = vpop.xlane.xlu0 %1445
    %v1447 = vsub.f32 %v1442, %v1446
    %v1448 = vmul.f32 %v1447, 1.442695
    %v1449 = vpow.pop %v1448
    %v1450 = vsel %vm397, %v1449, 0.0
    %1451 = vadd.xlane.f32.xlu0 %v1450
    %v1452 = vpop.xlane.xlu0 %1451
    %v1453 = vrcp.pop %v1452
    %v1454 = vmul.f32 %v1449, %v1453
    %v1456 = vsel %vm397, %v1454, 0
    %1458 = vmatpush.msra.mxu0 0.0
    %1459 = vmatpush.msra.mxu0 0.0
    %1460 = vmatpush.msra.mxu0 0.0
    %1461 = vmatpush.msra.mxu0 0.0
    %1462 = vmatpush.msra.mxu0 0.0
    %1463 = vmatpush.msra.mxu0 0.0
    %1464 = vmatpush.msra.mxu0 0.0
    %1465 = vmatpush.msra.mxu0 0.0
    %1466 = vmatpush.msra.mxu0 0.0
    %1467 = vmatpush.msra.mxu0 0.0
    %1468 = vmatpush.msra.mxu0 0.0
    %1469 = vmatpush.msra.mxu0 0.0
    %1470 = vmatpush.msra.mxu0 0.0
    %1471 = vmatpush.msra.mxu0 0.0
    %1472 = vmatpush.msra.mxu0 0.0
    %1473 = vmatpush.msra.mxu0 %v1413
    %1474 = vmatmul.f32.gmra.mxu0 %v1456
    %v1475 = vpop.f32.mrf.mxu0
    %v1476 = vadd.f32 0.0, %v1475
    %1477 = vdwg.mxu0
    %1478 = vrot.lane.b32.xlu0 %v1357, 120
    %v1479 = vpop.permute.xlu0 %1478
    %1480 = vrot.lane.b32.xlu0 %v1385, 120
    %v1481 = vpop.permute.xlu0 %1480
    %v1482 = vsel %vm397, %v1479, 0
    %v1484 = vsel %vm397, %v1481, 0
    %1486 = vmatpush.xpose.msra.mxu0 0.0
    %1487 = vmatpush.xpose.msra.mxu0 0.0
    %1488 = vmatpush.xpose.msra.mxu0 0.0
    %1489 = vmatpush.xpose.msra.mxu0 0.0
    %1490 = vmatpush.xpose.msra.mxu0 0.0
    %1491 = vmatpush.xpose.msra.mxu0 0.0
    %1492 = vmatpush.xpose.msra.mxu0 0.0
    %1493 = vmatpush.xpose.msra.mxu0 0.0
    %1494 = vmatpush.xpose.msra.mxu0 0.0
    %1495 = vmatpush.xpose.msra.mxu0 0.0
    %1496 = vmatpush.xpose.msra.mxu0 0.0
    %1497 = vmatpush.xpose.msra.mxu0 0.0
    %1498 = vmatpush.xpose.msra.mxu0 0.0
    %1499 = vmatpush.xpose.msra.mxu0 0.0
    %1500 = vmatpush.xpose.msra.mxu0 0.0
    %1501 = vmatpush.xpose.msra.mxu0 %v1484
    %1502 = vmatmul.f32.gmra.mxu0 %v1482
    %v1503 = vpop.f32.mrf.mxu0
    %v1504 = vadd.f32 0.0, %v1503
    %1505 = vdwg.mxu0
    %v1506 = vsel %vm397, %v1504, -inf
    %1507 = vmax.xlane.f32.xlu0 %v1506
    %v1508 = vpop.xlane.xlu0 %1507
    %v1509 = vsub.f32 %v1504, %v1508
    %v1510 = vmul.f32 %v1509, 1.442695
    %v1511 = vpow.pop %v1510
    %v1512 = vsel %vm397, %v1511, 0.0
    %1513 = vadd.xlane.f32.xlu0 %v1512
    %v1514 = vpop.xlane.xlu0 %1513
    %v1515 = vrcp.pop %v1514
    %v1516 = vmul.f32 %v1511, %v1515
    %1518 = vrot.lane.b32.xlu0 %v1413, 120
    %v1519 = vpop.permute.xlu0 %1518
    %v1522 = vsel %vm397, %v1516, 0
    %1524 = vmatpush.msra.mxu0 0.0
    %1525 = vmatpush.msra.mxu0 0.0
    %1526 = vmatpush.msra.mxu0 0.0
    %1527 = vmatpush.msra.mxu0 0.0
    %1528 = vmatpush.msra.mxu0 0.0
    %1529 = vmatpush.msra.mxu0 0.0
    %1530 = vmatpush.msra.mxu0 0.0
    %1531 = vmatpush.msra.mxu0 0.0
    %1532 = vmatpush.msra.mxu0 0.0
    %1533 = vmatpush.msra.mxu0 0.0
    %1534 = vmatpush.msra.mxu0 0.0
    %1535 = vmatpush.msra.mxu0 0.0
    %1536 = vmatpush.msra.mxu0 0.0
    %1537 = vmatpush.msra.mxu0 0.0
    %1538 = vmatpush.msra.mxu0 0.0
    %1539 = vmatpush.msra.mxu0 %v1519
    %1540 = vmatmul.f32.gmra.mxu0 %v1522
    %v1541 = vpop.f32.mrf.mxu0
    %v1542 = vadd.f32 0.0, %v1541
    %1543 = vdwg.mxu0
    %v1545 = vsel %vm397, %v1542, 0
    %1547 = vmatpush.msra.mxu0 0.0
    %1548 = vmatpush.msra.mxu0 0.0
    %1549 = vmatpush.msra.mxu0 0.0
    %1550 = vmatpush.msra.mxu0 0.0
    %1551 = vmatpush.msra.mxu0 0.0
    %1552 = vmatpush.msra.mxu0 0.0
    %1553 = vmatpush.msra.mxu0 0.0
    %1554 = vmatpush.msra.mxu0 0.0
    %1555 = vmatpush.msra.mxu0 0.0
    %1556 = vmatpush.msra.mxu0 0.0
    %1557 = vmatpush.msra.mxu0 0.0
    %1558 = vmatpush.msra.mxu0 0.0
    %1559 = vmatpush.msra.mxu0 0.0
    %1560 = vmatpush.msra.mxu0 0.0
    %1561 = vmatpush.msra.mxu0 0.0
    %1562 = vmatpush.msra.mxu0 %v1325
    %1563 = vmatmul.f32.gmra.mxu0 %v1545
    %v1564 = vpop.f32.mrf.mxu0
    %v1565 = vadd.f32 0.0, %v1564
    %1566 = vdwg.mxu0
    %v1568 = vsel %vm397, %v1476, 0
    %1570 = vmatpush.msra.mxu0 0.0
    %1571 = vmatpush.msra.mxu0 0.0
    %1572 = vmatpush.msra.mxu0 0.0
    %1573 = vmatpush.msra.mxu0 0.0
    %1574 = vmatpush.msra.mxu0 0.0
    %1575 = vmatpush.msra.mxu0 0.0
    %1576 = vmatpush.msra.mxu0 0.0
    %1577 = vmatpush.msra.mxu0 0.0
    %1578 = vmatpush.msra.mxu0 0.0
    %1579 = vmatpush.msra.mxu0 0.0
    %1580 = vmatpush.msra.mxu0 0.0
    %1581 = vmatpush.msra.mxu0 0.0
    %1582 = vmatpush.msra.mxu0 0.0
    %1583 = vmatpush.msra.mxu0 0.0
    %1584 = vmatpush.msra.mxu0 0.0
    %1585 = vmatpush.msra.mxu0 %v1324
    %1586 = vmatmul.f32.gmra.mxu0 %v1568
    %v1587 = vpop.f32.mrf.mxu0
    %v1588 = vadd.f32 %v1565, %v1587
    %1589 = vdwg.mxu0
    %1590 = vrot.lane.b32.xlu0 %v1357, 112
    %v1591 = vpop.permute.xlu0 %1590
    %1592 = vrot.lane.b32.xlu0 %v1385, 112
    %v1593 = vpop.permute.xlu0 %1592
    %v1594 = vsel %vm397, %v1591, 0
    %v1596 = vsel %vm397, %v1593, 0
    %1598 = vmatpush.xpose.msra.mxu0 0.0
    %1599 = vmatpush.xpose.msra.mxu0 0.0
    %1600 = vmatpush.xpose.msra.mxu0 0.0
    %1601 = vmatpush.xpose.msra.mxu0 0.0
    %1602 = vmatpush.xpose.msra.mxu0 0.0
    %1603 = vmatpush.xpose.msra.mxu0 0.0
    %1604 = vmatpush.xpose.msra.mxu0 0.0
    %1605 = vmatpush.xpose.msra.mxu0 0.0
    %1606 = vmatpush.xpose.msra.mxu0 0.0
    %1607 = vmatpush.xpose.msra.mxu0 0.0
    %1608 = vmatpush.xpose.msra.mxu0 0.0
    %1609 = vmatpush.xpose.msra.mxu0 0.0
    %1610 = vmatpush.xpose.msra.mxu0 0.0
    %1611 = vmatpush.xpose.msra.mxu0 0.0
    %1612 = vmatpush.xpose.msra.mxu0 0.0
    %1613 = vmatpush.xpose.msra.mxu0 %v1596
    %1614 = vmatmul.f32.gmra.mxu0 %v1594
    %v1615 = vpop.f32.mrf.mxu0
    %v1616 = vadd.f32 0.0, %v1615
    %1617 = vdwg.mxu0
    %v1618 = vsel %vm397, %v1616, -inf
    %1619 = vmax.xlane.f32.xlu0 %v1618
    %v1620 = vpop.xlane.xlu0 %1619
    %v1621 = vsub.f32 %v1616, %v1620
    %v1622 = vmul.f32 %v1621, 1.442695
    %v1623 = vpow.pop %v1622
    %v1624 = vsel %vm397, %v1623, 0.0
    %1625 = vadd.xlane.f32.xlu0 %v1624
    %v1626 = vpop.xlane.xlu0 %1625
    %v1627 = vrcp.pop %v1626
    %v1628 = vmul.f32 %v1623, %v1627
    %1629 = vrot.lane.b32.xlu0 %v1413, 112
    %v1630 = vpop.permute.xlu0 %1629
    %v1633 = vsel %vm397, %v1628, 0
    %1635 = vmatpush.msra.mxu0 0.0
    %1636 = vmatpush.msra.mxu0 0.0
    %1637 = vmatpush.msra.mxu0 0.0
    %1638 = vmatpush.msra.mxu0 0.0
    %1639 = vmatpush.msra.mxu0 0.0
    %1640 = vmatpush.msra.mxu0 0.0
    %1641 = vmatpush.msra.mxu0 0.0
    %1642 = vmatpush.msra.mxu0 0.0
    %1643 = vmatpush.msra.mxu0 0.0
    %1644 = vmatpush.msra.mxu0 0.0
    %1645 = vmatpush.msra.mxu0 0.0
    %1646 = vmatpush.msra.mxu0 0.0
    %1647 = vmatpush.msra.mxu0 0.0
    %1648 = vmatpush.msra.mxu0 0.0
    %1649 = vmatpush.msra.mxu0 0.0
    %1650 = vmatpush.msra.mxu0 %v1630
    %1651 = vmatmul.f32.gmra.mxu0 %v1633
    %v1652 = vpop.f32.mrf.mxu0
    %v1653 = vadd.f32 0.0, %v1652
    %1654 = vdwg.mxu0
    %v1656 = vsel %vm397, %v1653, 0
    %1658 = vmatpush.msra.mxu0 0.0
    %1659 = vmatpush.msra.mxu0 0.0
    %1660 = vmatpush.msra.mxu0 0.0
    %1661 = vmatpush.msra.mxu0 0.0
    %1662 = vmatpush.msra.mxu0 0.0
    %1663 = vmatpush.msra.mxu0 0.0
    %1664 = vmatpush.msra.mxu0 0.0
    %1665 = vmatpush.msra.mxu0 0.0
    %1666 = vmatpush.msra.mxu0 0.0
    %1667 = vmatpush.msra.mxu0 0.0
    %1668 = vmatpush.msra.mxu0 0.0
    %1669 = vmatpush.msra.mxu0 0.0
    %1670 = vmatpush.msra.mxu0 0.0
    %1671 = vmatpush.msra.mxu0 0.0
    %1672 = vmatpush.msra.mxu0 0.0
    %1673 = vmatpush.msra.mxu0 %v1326
    %1674 = vmatmul.f32.gmra.mxu0 %v1656
    %v1675 = vpop.f32.mrf.mxu0
    %v1676 = vadd.f32 0.0, %v1675
    %1677 = vdwg.mxu0
    %v1678 = vadd.f32 %v1588, %v1676
    %1679 = vrot.lane.b32.xlu0 %v1357, 104
    %v1680 = vpop.permute.xlu0 %1679
    %1681 = vrot.lane.b32.xlu0 %v1385, 104
    %v1682 = vpop.permute.xlu0 %1681
    %v1683 = vsel %vm397, %v1680, 0
    %v1685 = vsel %vm397, %v1682, 0
    %1687 = vmatpush.xpose.msra.mxu0 0.0
    %1688 = vmatpush.xpose.msra.mxu0 0.0
    %1689 = vmatpush.xpose.msra.mxu0 0.0
    %1690 = vmatpush.xpose.msra.mxu0 0.0
    %1691 = vmatpush.xpose.msra.mxu0 0.0
    %1692 = vmatpush.xpose.msra.mxu0 0.0
    %1693 = vmatpush.xpose.msra.mxu0 0.0
    %1694 = vmatpush.xpose.msra.mxu0 0.0
    %1695 = vmatpush.xpose.msra.mxu0 0.0
    %1696 = vmatpush.xpose.msra.mxu0 0.0
    %1697 = vmatpush.xpose.msra.mxu0 0.0
    %1698 = vmatpush.xpose.msra.mxu0 0.0
    %1699 = vmatpush.xpose.msra.mxu0 0.0
    %1700 = vmatpush.xpose.msra.mxu0 0.0
    %1701 = vmatpush.xpose.msra.mxu0 0.0
    %1702 = vmatpush.xpose.msra.mxu0 %v1685
    %1703 = vmatmul.f32.gmra.mxu0 %v1683
    %v1704 = vpop.f32.mrf.mxu0
    %v1705 = vadd.f32 0.0, %v1704
    %1706 = vdwg.mxu0
    %v1707 = vsel %vm397, %v1705, -inf
    %1708 = vmax.xlane.f32.xlu0 %v1707
    %v1709 = vpop.xlane.xlu0 %1708
    %v1710 = vsub.f32 %v1705, %v1709
    %v1711 = vmul.f32 %v1710, 1.442695
    %v1712 = vpow.pop %v1711
    %v1713 = vsel %vm397, %v1712, 0.0
    %1714 = vadd.xlane.f32.xlu0 %v1713
    %v1715 = vpop.xlane.xlu0 %1714
    %v1716 = vrcp.pop %v1715
    %v1717 = vmul.f32 %v1712, %v1716
    %1718 = vrot.lane.b32.xlu0 %v1413, 104
    %v1719 = vpop.permute.xlu0 %1718
    %v1722 = vsel %vm397, %v1717, 0
    %1724 = vmatpush.msra.mxu0 0.0
    %1725 = vmatpush.msra.mxu0 0.0
    %1726 = vmatpush.msra.mxu0 0.0
    %1727 = vmatpush.msra.mxu0 0.0
    %1728 = vmatpush.msra.mxu0 0.0
    %1729 = vmatpush.msra.mxu0 0.0
    %1730 = vmatpush.msra.mxu0 0.0
    %1731 = vmatpush.msra.mxu0 0.0
    %1732 = vmatpush.msra.mxu0 0.0
    %1733 = vmatpush.msra.mxu0 0.0
    %1734 = vmatpush.msra.mxu0 0.0
    %1735 = vmatpush.msra.mxu0 0.0
    %1736 = vmatpush.msra.mxu0 0.0
    %1737 = vmatpush.msra.mxu0 0.0
    %1738 = vmatpush.msra.mxu0 0.0
    %1739 = vmatpush.msra.mxu0 %v1719
    %1740 = vmatmul.f32.gmra.mxu0 %v1722
    %v1741 = vpop.f32.mrf.mxu0
    %v1742 = vadd.f32 0.0, %v1741
    %1743 = vdwg.mxu0
    %v1745 = vsel %vm397, %v1742, 0
    %1747 = vmatpush.msra.mxu0 0.0
    %1748 = vmatpush.msra.mxu0 0.0
    %1749 = vmatpush.msra.mxu0 0.0
    %1750 = vmatpush.msra.mxu0 0.0
    %1751 = vmatpush.msra.mxu0 0.0
    %1752 = vmatpush.msra.mxu0 0.0
    %1753 = vmatpush.msra.mxu0 0.0
    %1754 = vmatpush.msra.mxu0 0.0
    %1755 = vmatpush.msra.mxu0 0.0
    %1756 = vmatpush.msra.mxu0 0.0
    %1757 = vmatpush.msra.mxu0 0.0
    %1758 = vmatpush.msra.mxu0 0.0
    %1759 = vmatpush.msra.mxu0 0.0
    %1760 = vmatpush.msra.mxu0 0.0
    %1761 = vmatpush.msra.mxu0 0.0
    %1762 = vmatpush.msra.mxu0 %v1327
    %1763 = vmatmul.f32.gmra.mxu0 %v1745
    %v1764 = vpop.f32.mrf.mxu0
    %v1765 = vadd.f32 0.0, %v1764
    %1766 = vdwg.mxu0
    %v1767 = vadd.f32 %v1678, %v1765
    %v1769 = vsel %vm397, %v1360, 0
    %v1772 = vsel %vm397, %v1388, 0
    %1774 = vmatpush.xpose.msra.mxu0 0.0
    %1775 = vmatpush.xpose.msra.mxu0 0.0
    %1776 = vmatpush.xpose.msra.mxu0 0.0
    %1777 = vmatpush.xpose.msra.mxu0 0.0
    %1778 = vmatpush.xpose.msra.mxu0 0.0
    %1779 = vmatpush.xpose.msra.mxu0 0.0
    %1780 = vmatpush.xpose.msra.mxu0 0.0
    %1781 = vmatpush.xpose.msra.mxu0 0.0
    %1782 = vmatpush.xpose.msra.mxu0 0.0
    %1783 = vmatpush.xpose.msra.mxu0 0.0
    %1784 = vmatpush.xpose.msra.mxu0 0.0
    %1785 = vmatpush.xpose.msra.mxu0 0.0
    %1786 = vmatpush.xpose.msra.mxu0 0.0
    %1787 = vmatpush.xpose.msra.mxu0 0.0
    %1788 = vmatpush.xpose.msra.mxu0 0.0
    %1789 = vmatpush.xpose.msra.mxu0 %v1772
    %1790 = vmatmul.f32.gmra.mxu0 %v1769
    %v1791 = vpop.f32.mrf.mxu0
    %v1792 = vadd.f32 0.0, %v1791
    %1793 = vdwg.mxu0
    %v1794 = vsel %vm397, %v1792, -inf
    %1795 = vmax.xlane.f32.xlu0 %v1794
    %v1796 = vpop.xlane.xlu0 %1795
    %v1797 = vsub.f32 %v1792, %v1796
    %v1798 = vmul.f32 %v1797, 1.442695
    %v1799 = vpow.pop %v1798
    %v1800 = vsel %vm397, %v1799, 0.0
    %1801 = vadd.xlane.f32.xlu0 %v1800
    %v1802 = vpop.xlane.xlu0 %1801
    %v1803 = vrcp.pop %v1802
    %v1804 = vmul.f32 %v1799, %v1803
    %v1806 = vsel %vm397, %v1804, 0
    %1808 = vmatpush.msra.mxu0 0.0
    %1809 = vmatpush.msra.mxu0 0.0
    %1810 = vmatpush.msra.mxu0 0.0
    %1811 = vmatpush.msra.mxu0 0.0
    %1812 = vmatpush.msra.mxu0 0.0
    %1813 = vmatpush.msra.mxu0 0.0
    %1814 = vmatpush.msra.mxu0 0.0
    %1815 = vmatpush.msra.mxu0 0.0
    %1816 = vmatpush.msra.mxu0 0.0
    %1817 = vmatpush.msra.mxu0 0.0
    %1818 = vmatpush.msra.mxu0 0.0
    %1819 = vmatpush.msra.mxu0 0.0
    %1820 = vmatpush.msra.mxu0 0.0
    %1821 = vmatpush.msra.mxu0 0.0
    %1822 = vmatpush.msra.mxu0 0.0
    %1823 = vmatpush.msra.mxu0 %v1416
    %1824 = vmatmul.f32.gmra.mxu0 %v1806
    %v1825 = vpop.f32.mrf.mxu0
    %v1826 = vadd.f32 0.0, %v1825
    %1827 = vdwg.mxu0
    %1828 = vrot.lane.b32.xlu0 %v1360, 120
    %v1829 = vpop.permute.xlu0 %1828
    %1830 = vrot.lane.b32.xlu0 %v1388, 120
    %v1831 = vpop.permute.xlu0 %1830
    %v1832 = vsel %vm397, %v1829, 0
    %v1834 = vsel %vm397, %v1831, 0
    %1836 = vmatpush.xpose.msra.mxu0 0.0
    %1837 = vmatpush.xpose.msra.mxu0 0.0
    %1838 = vmatpush.xpose.msra.mxu0 0.0
    %1839 = vmatpush.xpose.msra.mxu0 0.0
    %1840 = vmatpush.xpose.msra.mxu0 0.0
    %1841 = vmatpush.xpose.msra.mxu0 0.0
    %1842 = vmatpush.xpose.msra.mxu0 0.0
    %1843 = vmatpush.xpose.msra.mxu0 0.0
    %1844 = vmatpush.xpose.msra.mxu0 0.0
    %1845 = vmatpush.xpose.msra.mxu0 0.0
    %1846 = vmatpush.xpose.msra.mxu0 0.0
    %1847 = vmatpush.xpose.msra.mxu0 0.0
    %1848 = vmatpush.xpose.msra.mxu0 0.0
    %1849 = vmatpush.xpose.msra.mxu0 0.0
    %1850 = vmatpush.xpose.msra.mxu0 0.0
    %1851 = vmatpush.xpose.msra.mxu0 %v1834
    %1852 = vmatmul.f32.gmra.mxu0 %v1832
    %v1853 = vpop.f32.mrf.mxu0
    %v1854 = vadd.f32 0.0, %v1853
    %1855 = vdwg.mxu0
    %v1856 = vsel %vm397, %v1854, -inf
    %1857 = vmax.xlane.f32.xlu0 %v1856
    %v1858 = vpop.xlane.xlu0 %1857
    %v1859 = vsub.f32 %v1854, %v1858
    %v1860 = vmul.f32 %v1859, 1.442695
    %v1861 = vpow.pop %v1860
    %v1862 = vsel %vm397, %v1861, 0.0
    %1863 = vadd.xlane.f32.xlu0 %v1862
    %v1864 = vpop.xlane.xlu0 %1863
    %v1865 = vrcp.pop %v1864
    %v1866 = vmul.f32 %v1861, %v1865
    %1868 = vrot.lane.b32.xlu0 %v1416, 120
    %v1869 = vpop.permute.xlu0 %1868
    %v1872 = vsel %vm397, %v1866, 0
    %1874 = vmatpush.msra.mxu0 0.0
    %1875 = vmatpush.msra.mxu0 0.0
    %1876 = vmatpush.msra.mxu0 0.0
    %1877 = vmatpush.msra.mxu0 0.0
    %1878 = vmatpush.msra.mxu0 0.0
    %1879 = vmatpush.msra.mxu0 0.0
    %1880 = vmatpush.msra.mxu0 0.0
    %1881 = vmatpush.msra.mxu0 0.0
    %1882 = vmatpush.msra.mxu0 0.0
    %1883 = vmatpush.msra.mxu0 0.0
    %1884 = vmatpush.msra.mxu0 0.0
    %1885 = vmatpush.msra.mxu0 0.0
    %1886 = vmatpush.msra.mxu0 0.0
    %1887 = vmatpush.msra.mxu0 0.0
    %1888 = vmatpush.msra.mxu0 0.0
    %1889 = vmatpush.msra.mxu0 %v1869
    %1890 = vmatmul.f32.gmra.mxu0 %v1872
    %v1891 = vpop.f32.mrf.mxu0
    %v1892 = vadd.f32 0.0, %v1891
    %1893 = vdwg.mxu0
    %v1895 = vsel %vm397, %v1892, 0
    %1897 = vmatpush.msra.mxu0 0.0
    %1898 = vmatpush.msra.mxu0 0.0
    %1899 = vmatpush.msra.mxu0 0.0
    %1900 = vmatpush.msra.mxu0 0.0
    %1901 = vmatpush.msra.mxu0 0.0
    %1902 = vmatpush.msra.mxu0 0.0
    %1903 = vmatpush.msra.mxu0 0.0
    %1904 = vmatpush.msra.mxu0 0.0
    %1905 = vmatpush.msra.mxu0 0.0
    %1906 = vmatpush.msra.mxu0 0.0
    %1907 = vmatpush.msra.mxu0 0.0
    %1908 = vmatpush.msra.mxu0 0.0
    %1909 = vmatpush.msra.mxu0 0.0
    %1910 = vmatpush.msra.mxu0 0.0
    %1911 = vmatpush.msra.mxu0 0.0
    %1912 = vmatpush.msra.mxu0 %v1325
    %1913 = vmatmul.f32.gmra.mxu0 %v1895
    %v1914 = vpop.f32.mrf.mxu0
    %v1915 = vadd.f32 0.0, %v1914
    %1916 = vdwg.mxu0
    %v1918 = vsel %vm397, %v1826, 0
    %1920 = vmatpush.msra.mxu0 0.0
    %1921 = vmatpush.msra.mxu0 0.0
    %1922 = vmatpush.msra.mxu0 0.0
    %1923 = vmatpush.msra.mxu0 0.0
    %1924 = vmatpush.msra.mxu0 0.0
    %1925 = vmatpush.msra.mxu0 0.0
    %1926 = vmatpush.msra.mxu0 0.0
    %1927 = vmatpush.msra.mxu0 0.0
    %1928 = vmatpush.msra.mxu0 0.0
    %1929 = vmatpush.msra.mxu0 0.0
    %1930 = vmatpush.msra.mxu0 0.0
    %1931 = vmatpush.msra.mxu0 0.0
    %1932 = vmatpush.msra.mxu0 0.0
    %1933 = vmatpush.msra.mxu0 0.0
    %1934 = vmatpush.msra.mxu0 0.0
    %1935 = vmatpush.msra.mxu0 %v1324
    %1936 = vmatmul.f32.gmra.mxu0 %v1918
    %v1937 = vpop.f32.mrf.mxu0
    %v1938 = vadd.f32 %v1915, %v1937
    %1939 = vdwg.mxu0
    %1940 = vrot.lane.b32.xlu0 %v1360, 112
    %v1941 = vpop.permute.xlu0 %1940
    %1942 = vrot.lane.b32.xlu0 %v1388, 112
    %v1943 = vpop.permute.xlu0 %1942
    %v1944 = vsel %vm397, %v1941, 0
    %v1946 = vsel %vm397, %v1943, 0
    %1948 = vmatpush.xpose.msra.mxu0 0.0
    %1949 = vmatpush.xpose.msra.mxu0 0.0
    %1950 = vmatpush.xpose.msra.mxu0 0.0
    %1951 = vmatpush.xpose.msra.mxu0 0.0
    %1952 = vmatpush.xpose.msra.mxu0 0.0
    %1953 = vmatpush.xpose.msra.mxu0 0.0
    %1954 = vmatpush.xpose.msra.mxu0 0.0
    %1955 = vmatpush.xpose.msra.mxu0 0.0
    %1956 = vmatpush.xpose.msra.mxu0 0.0
    %1957 = vmatpush.xpose.msra.mxu0 0.0
    %1958 = vmatpush.xpose.msra.mxu0 0.0
    %1959 = vmatpush.xpose.msra.mxu0 0.0
    %1960 = vmatpush.xpose.msra.mxu0 0.0
    %1961 = vmatpush.xpose.msra.mxu0 0.0
    %1962 = vmatpush.xpose.msra.mxu0 0.0
    %1963 = vmatpush.xpose.msra.mxu0 %v1946
    %1964 = vmatmul.f32.gmra.mxu0 %v1944
    %v1965 = vpop.f32.mrf.mxu0
    %v1966 = vadd.f32 0.0, %v1965
    %1967 = vdwg.mxu0
    %v1968 = vsel %vm397, %v1966, -inf
    %1969 = vmax.xlane.f32.xlu0 %v1968
    %v1970 = vpop.xlane.xlu0 %1969
    %v1971 = vsub.f32 %v1966, %v1970
    %v1972 = vmul.f32 %v1971, 1.442695
    %v1973 = vpow.pop %v1972
    %v1974 = vsel %vm397, %v1973, 0.0
    %1975 = vadd.xlane.f32.xlu0 %v1974
    %v1976 = vpop.xlane.xlu0 %1975
    %v1977 = vrcp.pop %v1976
    %v1978 = vmul.f32 %v1973, %v1977
    %1979 = vrot.lane.b32.xlu0 %v1416, 112
    %v1980 = vpop.permute.xlu0 %1979
    %v1983 = vsel %vm397, %v1978, 0
    %1985 = vmatpush.msra.mxu0 0.0
    %1986 = vmatpush.msra.mxu0 0.0
    %1987 = vmatpush.msra.mxu0 0.0
    %1988 = vmatpush.msra.mxu0 0.0
    %1989 = vmatpush.msra.mxu0 0.0
    %1990 = vmatpush.msra.mxu0 0.0
    %1991 = vmatpush.msra.mxu0 0.0
    %1992 = vmatpush.msra.mxu0 0.0
    %1993 = vmatpush.msra.mxu0 0.0
    %1994 = vmatpush.msra.mxu0 0.0
    %1995 = vmatpush.msra.mxu0 0.0
    %1996 = vmatpush.msra.mxu0 0.0
    %1997 = vmatpush.msra.mxu0 0.0
    %1998 = vmatpush.msra.mxu0 0.0
    %1999 = vmatpush.msra.mxu0 0.0
    %2000 = vmatpush.msra.mxu0 %v1980
    %2001 = vmatmul.f32.gmra.mxu0 %v1983
    %v2002 = vpop.f32.mrf.mxu0
    %v2003 = vadd.f32 0.0, %v2002
    %2004 = vdwg.mxu0
    %v2006 = vsel %vm397, %v2003, 0
    %2008 = vmatpush.msra.mxu0 0.0
    %2009 = vmatpush.msra.mxu0 0.0
    %2010 = vmatpush.msra.mxu0 0.0
    %2011 = vmatpush.msra.mxu0 0.0
    %2012 = vmatpush.msra.mxu0 0.0
    %2013 = vmatpush.msra.mxu0 0.0
    %2014 = vmatpush.msra.mxu0 0.0
    %2015 = vmatpush.msra.mxu0 0.0
    %2016 = vmatpush.msra.mxu0 0.0
    %2017 = vmatpush.msra.mxu0 0.0
    %2018 = vmatpush.msra.mxu0 0.0
    %2019 = vmatpush.msra.mxu0 0.0
    %2020 = vmatpush.msra.mxu0 0.0
    %2021 = vmatpush.msra.mxu0 0.0
    %2022 = vmatpush.msra.mxu0 0.0
    %2023 = vmatpush.msra.mxu0 %v1326
    %2024 = vmatmul.f32.gmra.mxu0 %v2006
    %v2025 = vpop.f32.mrf.mxu0
    %v2026 = vadd.f32 0.0, %v2025
    %2027 = vdwg.mxu0
    %v2028 = vadd.f32 %v1938, %v2026
    %2029 = vrot.lane.b32.xlu0 %v1360, 104
    %v2030 = vpop.permute.xlu0 %2029
    %2031 = vrot.lane.b32.xlu0 %v1388, 104
    %v2032 = vpop.permute.xlu0 %2031
    %v2033 = vsel %vm397, %v2030, 0
    %v2035 = vsel %vm397, %v2032, 0
    %2037 = vmatpush.xpose.msra.mxu0 0.0
    %2038 = vmatpush.xpose.msra.mxu0 0.0
    %2039 = vmatpush.xpose.msra.mxu0 0.0
    %2040 = vmatpush.xpose.msra.mxu0 0.0
    %2041 = vmatpush.xpose.msra.mxu0 0.0
    %2042 = vmatpush.xpose.msra.mxu0 0.0
    %2043 = vmatpush.xpose.msra.mxu0 0.0
    %2044 = vmatpush.xpose.msra.mxu0 0.0
    %2045 = vmatpush.xpose.msra.mxu0 0.0
    %2046 = vmatpush.xpose.msra.mxu0 0.0
    %2047 = vmatpush.xpose.msra.mxu0 0.0
    %2048 = vmatpush.xpose.msra.mxu0 0.0
    %2049 = vmatpush.xpose.msra.mxu0 0.0
    %2050 = vmatpush.xpose.msra.mxu0 0.0
    %2051 = vmatpush.xpose.msra.mxu0 0.0
    %2052 = vmatpush.xpose.msra.mxu0 %v2035
    %2053 = vmatmul.f32.gmra.mxu0 %v2033
    %v2054 = vpop.f32.mrf.mxu0
    %v2055 = vadd.f32 0.0, %v2054
    %2056 = vdwg.mxu0
    %v2057 = vsel %vm397, %v2055, -inf
    %2058 = vmax.xlane.f32.xlu0 %v2057
    %v2059 = vpop.xlane.xlu0 %2058
    %v2060 = vsub.f32 %v2055, %v2059
    %v2061 = vmul.f32 %v2060, 1.442695
    %v2062 = vpow.pop %v2061
    %v2063 = vsel %vm397, %v2062, 0.0
    %2064 = vadd.xlane.f32.xlu0 %v2063
    %v2065 = vpop.xlane.xlu0 %2064
    %v2066 = vrcp.pop %v2065
    %v2067 = vmul.f32 %v2062, %v2066
    %2068 = vrot.lane.b32.xlu0 %v1416, 104
    %v2069 = vpop.permute.xlu0 %2068
    %v2072 = vsel %vm397, %v2067, 0
    %2074 = vmatpush.msra.mxu0 0.0
    %2075 = vmatpush.msra.mxu0 0.0
    %2076 = vmatpush.msra.mxu0 0.0
    %2077 = vmatpush.msra.mxu0 0.0
    %2078 = vmatpush.msra.mxu0 0.0
    %2079 = vmatpush.msra.mxu0 0.0
    %2080 = vmatpush.msra.mxu0 0.0
    %2081 = vmatpush.msra.mxu0 0.0
    %2082 = vmatpush.msra.mxu0 0.0
    %2083 = vmatpush.msra.mxu0 0.0
    %2084 = vmatpush.msra.mxu0 0.0
    %2085 = vmatpush.msra.mxu0 0.0
    %2086 = vmatpush.msra.mxu0 0.0
    %2087 = vmatpush.msra.mxu0 0.0
    %2088 = vmatpush.msra.mxu0 0.0
    %2089 = vmatpush.msra.mxu0 %v2069
    %2090 = vmatmul.f32.gmra.mxu0 %v2072
    %v2091 = vpop.f32.mrf.mxu0
    %v2092 = vadd.f32 0.0, %v2091
    %2093 = vdwg.mxu0
    %v2095 = vsel %vm397, %v2092, 0
    %2097 = vmatpush.msra.mxu0 0.0
    %2098 = vmatpush.msra.mxu0 0.0
    %2099 = vmatpush.msra.mxu0 0.0
    %2100 = vmatpush.msra.mxu0 0.0
    %2101 = vmatpush.msra.mxu0 0.0
    %2102 = vmatpush.msra.mxu0 0.0
    %2103 = vmatpush.msra.mxu0 0.0
    %2104 = vmatpush.msra.mxu0 0.0
    %2105 = vmatpush.msra.mxu0 0.0
    %2106 = vmatpush.msra.mxu0 0.0
    %2107 = vmatpush.msra.mxu0 0.0
    %2108 = vmatpush.msra.mxu0 0.0
    %2109 = vmatpush.msra.mxu0 0.0
    %2110 = vmatpush.msra.mxu0 0.0
    %2111 = vmatpush.msra.mxu0 0.0
    %2112 = vmatpush.msra.mxu0 %v1327
    %2113 = vmatmul.f32.gmra.mxu0 %v2095
    %v2114 = vpop.f32.mrf.mxu0
    %v2115 = vadd.f32 0.0, %v2114
    %2116 = vdwg.mxu0
    %v2117 = vadd.f32 %v2028, %v2115
    %s2118 = scalar_lea.vmem [#allocation11], 1
    %v2119 = vld [vmem:[%s2118] sm:$0x1]
    %v2121 = vperm.slane %v2119, 0
    %v2123 = vadd.f32 %v1767, %v2121
    %v2124 = vadd.f32 %v2117, %v2121
    %v2125 = vadd.f32 %v1306, %v2123
    %v2126 = vadd.f32 %v1307, %v2124
    %v2127 = vsel %vm313, %v2125, 0.0
    %2128 = vadd.xlane.f32.xlu0 %v2127
    %v2129 = vpop.xlane.xlu0 %2128
    %v2130 = vsel %vm313, %v2126, 0.0
    %2131 = vadd.xlane.f32.xlu0 %v2130
    %v2132 = vpop.xlane.xlu0 %2131
    %v2133 = vmul.f32 %v2129, %v1118
    %v2134 = vmul.f32 %v2132, %v1118
    %v2135 = vsub.f32 %v2125, %v2133
    %v2136 = vsub.f32 %v2126, %v2134
    %v2137 = vmul.f32 %v2135, %v2135
    %v2138 = vmul.f32 %v2136, %v2136
    %v2139 = vsel %vm313, %v2137, 0.0
    %2140 = vadd.xlane.f32.xlu0 %v2139
    %v2141 = vpop.xlane.xlu0 %2140
    %v2142 = vsel %vm313, %v2138, 0.0
    %2143 = vadd.xlane.f32.xlu0 %v2142
    %v2144 = vpop.xlane.xlu0 %2143
    %v2145 = vmul.f32 %v2141, %v1118
    %v2146 = vmul.f32 %v2144, %v1118
    %v2147 = vadd.f32 %v2145, 1e-05
    %v2148 = vadd.f32 %v2146, 1e-05
    %v2149 = vrsqrt.pop %v2147
    %v2150 = vmul.f32 %v2149, %v2147
    %v2151 = vmul.f32 %v2150, %v2149
    %v2152 = vmul.f32 0.5, %v2151
    %v2153 = vsub.f32 1.5, %v2152
    %v2154 = vmul.f32 %v2149, %v2153
    %vm2155 = vweird.f32 %v2147
    %vm2156 = vweird.f32 %v2149
    %vm2157 = vmor %vm2155, %vm2156
    %v2158 = vsel %vm2157, %v2149, %v2154
    %v2159 = vrsqrt.pop %v2148
    %v2160 = vmul.f32 %v2159, %v2148
    %v2161 = vmul.f32 %v2160, %v2159
    %v2162 = vmul.f32 0.5, %v2161
    %v2163 = vsub.f32 1.5, %v2162
    %v2164 = vmul.f32 %v2159, %v2163
    %vm2165 = vweird.f32 %v2148
    %vm2166 = vweird.f32 %v2159
    %vm2167 = vmor %vm2165, %vm2166
    %v2168 = vsel %vm2167, %v2159, %v2164
    %v2169 = vmul.f32 %v2135, %v2158
    %v2170 = vmul.f32 %v2136, %v2168
    %s2171 = scalar_lea.vmem [#allocation13], 1
    %v2172 = vld [vmem:[%s2171] sm:$0x1]
    %v2174 = vperm.slane %v2172, 0
    %v2176 = vmul.f32 %v2169, %v2174
    %v2177 = vmul.f32 %v2170, %v2174
    %s2178 = scalar_lea.vmem [#allocation14], 1
    %v2179 = vld [vmem:[%s2178] sm:$0x1]
    %v2181 = vperm.slane %v2179, 0
    %v2183 = vadd.f32 %v2176, %v2181
    %v2184 = vadd.f32 %v2177, %v2181
    %s2185 = scalar_lea.vmem [#allocation16], 32
    %v2186 = vld [vmem:[%s2185] sm:$0xff]
    %v2187 = vld [vmem:[%s2185 + $0x8] sm:$0xff]
    %v2188 = vld [vmem:[%s2185 + $0x10] sm:$0xff]
    %v2189 = vld [vmem:[%s2185 + $0x18] sm:$0xff]
    %s2190 = scalar_lea.vmem [#allocation17], 1
    %v2191 = vld [vmem:[%s2190] sm:$0x1]
    %v2193 = vperm.slane %v2191, 0
    %v2196 = vsel %vm313, %v2183, 0
    %v2199 = vsel %vm313, %v2184, 0
    %2201 = vmatpush.msra.mxu0 0.0
    %2202 = vmatpush.msra.mxu0 0.0
    %2203 = vmatpush.msra.mxu0 0.0
    %2204 = vmatpush.msra.mxu0 0.0
    %2205 = vmatpush.msra.mxu0 0.0
    %2206 = vmatpush.msra.mxu0 0.0
    %2207 = vmatpush.msra.mxu0 0.0
    %2208 = vmatpush.msra.mxu0 0.0
    %2209 = vmatpush.msra.mxu0 0.0
    %2210 = vmatpush.msra.mxu0 0.0
    %2211 = vmatpush.msra.mxu0 0.0
    %2212 = vmatpush.msra.mxu0 0.0
    %2213 = vmatpush.msra.mxu0 %v2189
    %2214 = vmatpush.msra.mxu0 %v2188
    %2215 = vmatpush.msra.mxu0 %v2187
    %2216 = vmatpush.msra.mxu0 %v2186
    %2217 = vmatmul.f32.gmra.mxu0 %v2196
    %v2218 = vpop.f32.mrf.mxu0
    %v2219 = vadd.f32 %v2193, %v2218
    %2220 = vmatmul.f32.gmra.mxu0 %v2199
    %v2221 = vpop.f32.mrf.mxu0
    %v2222 = vadd.f32 %v2193, %v2221
    %2223 = vdwg.mxu0
    %v2224 = vmax.f32 %v2219, 0.0
    %v2225 = vmax.f32 %v2222, 0.0
    %s2226 = scalar_lea.vmem %s15, 64
    %v2227 = vld [vmem:[%s2226] sm:$0xff]
    %v2228 = vld [vmem:[%s2226 + $0x8] sm:$0xff]
    %v2229 = vld [vmem:[%s2226 + $0x10] sm:$0xff]
    %v2230 = vld [vmem:[%s2226 + $0x18] sm:$0xff]
    %v2231 = vld [vmem:[%s2226 + $0x20] sm:$0xff]
    %v2232 = vld [vmem:[%s2226 + $0x28] sm:$0xff]
    %v2233 = vld [vmem:[%s2226 + $0x30] sm:$0xff]
    %v2234 = vld [vmem:[%s2226 + $0x38] sm:$0xff]
    %s2235 = scalar_lea.vmem [#allocation19], 1
    %v2236 = vld [vmem:[%s2235] sm:$0x1]
    %v2238 = vperm.slane %v2236, 0
    %v2241 = vsel %vm1220, %v2224, 0
    %v2244 = vsel %vm1220, %v2225, 0
    %2246 = vmatpush.msra.mxu0 0.0
    %2247 = vmatpush.msra.mxu0 0.0
    %2248 = vmatpush.msra.mxu0 0.0
    %2249 = vmatpush.msra.mxu0 0.0
    %2250 = vmatpush.msra.mxu0 0.0
    %2251 = vmatpush.msra.mxu0 0.0
    %2252 = vmatpush.msra.mxu0 0.0
    %2253 = vmatpush.msra.mxu0 0.0
    %2254 = vmatpush.msra.mxu0 %v2234
    %2255 = vmatpush.msra.mxu0 %v2233
    %2256 = vmatpush.msra.mxu0 %v2232
    %2257 = vmatpush.msra.mxu0 %v2231
    %2258 = vmatpush.msra.mxu0 %v2230
    %2259 = vmatpush.msra.mxu0 %v2229
    %2260 = vmatpush.msra.mxu0 %v2228
    %2261 = vmatpush.msra.mxu0 %v2227
    %2262 = vmatmul.f32.gmra.mxu0 %v2241
    %v2263 = vpop.f32.mrf.mxu0
    %v2264 = vadd.f32 %v2238, %v2263
    %2265 = vmatmul.f32.gmra.mxu0 %v2244
    %v2266 = vpop.f32.mrf.mxu0
    %v2267 = vadd.f32 %v2238, %v2266
    %2268 = vdwg.mxu0
    %v2269 = vadd.f32 %v2183, %v2264
    %v2270 = vadd.f32 %v2184, %v2267
    %v2271 = vsel %vm313, %v2269, 0.0
    %2272 = vadd.xlane.f32.xlu0 %v2271
    %v2273 = vpop.xlane.xlu0 %2272
    %v2274 = vsel %vm313, %v2270, 0.0
    %2275 = vadd.xlane.f32.xlu0 %v2274
    %v2276 = vpop.xlane.xlu0 %2275
    %v2277 = vmul.f32 %v2273, %v1118
    %v2278 = vmul.f32 %v2276, %v1118
    %v2279 = vsub.f32 %v2269, %v2277
    %v2280 = vsub.f32 %v2270, %v2278
    %v2281 = vmul.f32 %v2279, %v2279
    %v2282 = vmul.f32 %v2280, %v2280
    %v2283 = vsel %vm313, %v2281, 0.0
    %2284 = vadd.xlane.f32.xlu0 %v2283
    %v2285 = vpop.xlane.xlu0 %2284
    %v2286 = vsel %vm313, %v2282, 0.0
    %2287 = vadd.xlane.f32.xlu0 %v2286
    %v2288 = vpop.xlane.xlu0 %2287
    %v2289 = vmul.f32 %v2285, %v1118
    %v2290 = vmul.f32 %v2288, %v1118
    %v2291 = vadd.f32 %v2289, 1e-05
    %v2292 = vadd.f32 %v2290, 1e-05
    %v2293 = vrsqrt.pop %v2291
    %v2294 = vmul.f32 %v2293, %v2291
    %v2295 = vmul.f32 %v2294, %v2293
    %v2296 = vmul.f32 0.5, %v2295
    %v2297 = vsub.f32 1.5, %v2296
    %v2298 = vmul.f32 %v2293, %v2297
    %vm2299 = vweird.f32 %v2291
    %vm2300 = vweird.f32 %v2293
    %vm2301 = vmor %vm2299, %vm2300
    %v2302 = vsel %vm2301, %v2293, %v2298
    %v2303 = vrsqrt.pop %v2292
    %v2304 = vmul.f32 %v2303, %v2292
    %v2305 = vmul.f32 %v2304, %v2303
    %v2306 = vmul.f32 0.5, %v2305
    %v2307 = vsub.f32 1.5, %v2306
    %v2308 = vmul.f32 %v2303, %v2307
    %vm2309 = vweird.f32 %v2292
    %vm2310 = vweird.f32 %v2303
    %vm2311 = vmor %vm2309, %vm2310
    %v2312 = vsel %vm2311, %v2303, %v2308
    %v2313 = vmul.f32 %v2279, %v2302
    %v2314 = vmul.f32 %v2280, %v2312
    %s2315 = scalar_lea.vmem [#allocation20], 1
    %v2316 = vld [vmem:[%s2315] sm:$0x1]
    %v2318 = vperm.slane %v2316, 0
    %v2320 = vmul.f32 %v2313, %v2318
    %v2321 = vmul.f32 %v2314, %v2318
    %s2322 = scalar_lea.vmem %s18, 1
    %v2323 = vld [vmem:[%s2322] sm:$0x1]
    %v2325 = vperm.slane %v2323, 0
    %v2327 = vadd.f32 %v2320, %v2325
    %v2328 = vadd.f32 %v2321, %v2325
    %v2330 = vrot.slane %v2327, 7
    %v2333 = vrot.slane %v2328, 6
    %vm2335 = vcmask 1040384
    %v2336 = vsel %vm2335, %v2330, %v2333
    %v2337 = vld [vmem:[%s19] sm:$0xff]
    %v2338 = vld [vmem:[%s19 + $0x8] sm:$0xff]
    %v2339 = vld [vmem:[%s19 + $0x10] sm:$0xff]
    %v2340 = vld [vmem:[%s19 + $0x18] sm:$0xff]
    %v2341 = vld [vmem:[%s20] sm:$0x1]
    %v2343 = vperm.slane %v2341, 0
    %v2346 = vsel %vm313, %v2336, 0
    %2348 = vmatpush.msra.mxu0 0.0
    %2349 = vmatpush.msra.mxu0 0.0
    %2350 = vmatpush.msra.mxu0 0.0
    %2351 = vmatpush.msra.mxu0 0.0
    %2352 = vmatpush.msra.mxu0 0.0
    %2353 = vmatpush.msra.mxu0 0.0
    %2354 = vmatpush.msra.mxu0 0.0
    %2355 = vmatpush.msra.mxu0 0.0
    %2356 = vmatpush.msra.mxu0 0.0
    %2357 = vmatpush.msra.mxu0 0.0
    %2358 = vmatpush.msra.mxu0 0.0
    %2359 = vmatpush.msra.mxu0 0.0
    %2360 = vmatpush.msra.mxu0 %v2340
    %2361 = vmatpush.msra.mxu0 %v2339
    %2362 = vmatpush.msra.mxu0 %v2338
    %2363 = vmatpush.msra.mxu0 %v2337
    %2364 = vmatmul.f32.gmra.mxu0 %v2346
    %v2365 = vpop.f32.mrf.mxu0
    %v2366 = vadd.f32 %v2343, %v2365
    %2367 = vdwg.mxu0
    %vm2368 = vcmask 58368
    %v2369 = vsel %vm2368, %v2366, -inf
    %2370 = vmax.xlane.f32.xlu0 %v2369
    %v2371 = vpop.xlane.xlu0 %2370
    %v2372 = vsub.f32 %v2366, %v2371
    %v2373 = vmul.f32 %v2372, 1.442695
    %v2374 = vpow.pop %v2373
    %v2375 = vsel %vm2368, %v2374, 0.0
    %2376 = vadd.xlane.f32.xlu0 %v2375
    %v2377 = vpop.xlane.xlu0 %2376
    %v2378 = vrcp.pop %v2377
    %v2379 = vmul.f32 %v2377, %v2378
    %v2380 = vsub.f32 1.0, %v2379
    %v2381 = vmul.f32 %v2378, %v2380
    %v2382 = vadd.f32 %v2378, %v2381
    %vm2383 = vweird.f32 %v2377
    %vm2384 = vweird.f32 %v2378
    %vm2385 = vmor %vm2383, %vm2384
    %v2386 = vsel %vm2385, %v2378, %v2382
    %v2387 = vand.u32 2147483647, %v2377
    %vm2388 = vcmp.eq.f32.partialorder %v2387, 8.507059e+37
    %v2389 = vand.u32 %v2377, 2147483648
    %v2390 = vor.u32 1.1754944e-38, %v2389
    %v2391 = vsel %vm2388, %v2390, %v2386
    %v2392 = vmul.f32 %v2374, %v2391
    %2393 = vst.msk [vmem:[#allocation22] sm:$0x3] %vm2368, %v2392
    // Predicated region
    $region134: #{tpu_custom_call.1} parent=1 // pred_check
      _
    $region135: #{tpu_custom_call.1} parent=1 // pred_check_branch
      %2395 = sbr.rel (0) target = $region137
    $region136: #{tpu_custom_call.1} parent=1 // pred_region
      %2397 = vsyncadd [#allocation4], 0
      %s2399 = sshll.u32 [#allocation22], 4
      %s2400 = int_to_ptr.vmem [resolvable:$true] %s2399
      %s2401 = sshll.u32 %s21, 4
      %s2402 = int_to_ptr.hbm [resolvable:$true] %s2401
      %2404 = dma.vmem_to_hbm [thread:$0]  %s2400, 32, %s2402, [#allocation4]
    $region137: #{tpu_custom_call.1} parent=1 // pred_fallthru
      _
    // Predicated region
    $region138: #{tpu_custom_call.1} parent=1 // pred_check
      _
    $region139: #{tpu_custom_call.1} parent=1 // pred_check_branch
      %2406 = sbr.rel (0) target = $region141
    $region140: #{tpu_custom_call.1} parent=1 // pred_region
      %2408 = dma.done [#allocation4], 32
    $region141: #{tpu_custom_call.1} parent=1 // pred_fallthru
      _
    %2409 = vsyncpa [#allocation3], 1
    %2410 = vsyncpa [#allocation6], 1
    %2411 = vsyncpa [#allocation9], 1
    %2412 = vsyncpa [#allocation12], 1
    %2413 = vsyncpa [#allocation15], 1
    %2414 = vsyncpa [#allocation18], 1
    %2415 = vsyncpa [#allocation21], 1
    %2416 = vsyncpa [#allocation4], 1

</llo_original>
